<compile_context>
chip_gen: v7x
topology: tpu7x:2x2x1
jax: 0.10.0
libtpu: 0.0.40
codegen_flags: <defaults>
</compile_context>

<pallas_src>
import functools

import jax
import jax.numpy as jnp
from jax import lax
from jax.experimental import pallas as pl
from jax.experimental.pallas import tpu as pltpu


def _round_up(x, m):
    return -(-x // m) * m


def _lstm2_kernel(xp_ref, whh0_ref, wih1_ref, whh1_ref, b1_ref,
                  out_ref, hn_ref, cn_ref,
                  h0_ref, c0_ref, h1_ref, c1_ref,
                  *, seq_len, unroll):
    """One seq-chunk of the 2-layer LSTM recurrence.

    xp_ref   : (Ts, Bp, 4Hp)  precomputed x @ W_ih0^T + b0 for this chunk
    whh0_ref : (Hp, 4Hp)      layer-0 recurrent weight (transposed, padded)
    wih1_ref : (Hp, 4Hp)      layer-1 input weight     (transposed, padded)
    whh1_ref : (Hp, 4Hp)      layer-1 recurrent weight (transposed, padded)
    b1_ref   : (1, 4Hp)       layer-1 combined bias (f32)
    out_ref  : (Ts, Bp, Hp)   per-timestep output of last layer (this chunk)
    hn_ref   : (2, Bp, Hp)    final hidden states (written on last chunk)
    cn_ref   : (2, Bp, Hp)    final cell states   (written on last chunk)
    h*/c*_ref: (Bp, Hp)       f32 state scratch carried across chunks
    """
    ts, _, gp = xp_ref.shape
    hp = gp // 4
    chunk = pl.program_id(0)
    last_chunk = pl.num_programs(0) - 1
    w_dtype = whh0_ref.dtype
    needs_mask = (seq_len % ts) != 0   # only the last chunk can be ragged

    # initHidden(): zero hidden/cell state before the first chunk.
    @pl.when(chunk == 0)
    def _init():
        h0_ref[...] = jnp.zeros_like(h0_ref)
        c0_ref[...] = jnp.zeros_like(c0_ref)
        h1_ref[...] = jnp.zeros_like(h1_ref)
        c1_ref[...] = jnp.zeros_like(c1_ref)

    def cell_tail(a_i, a_f, a_g, a_o, c_prev):
        c_new = a_f * c_prev + a_i * a_g
        h_new = a_o * jnp.tanh(c_new)
        return h_new, c_new

    def step(t, carry):
        h0, c0, h1, c1 = carry

        # ---- layer 0: input projection hoisted; only the recurrent matmul
        # stays on the serial path.  Gate slices are 128-lane aligned.
        g0 = xp_ref[t].astype(jnp.float32) + jnp.dot(
            h0.astype(w_dtype), whh0_ref[...],
            preferred_element_type=jnp.float32)
        h0n, c0n = cell_tail(
            jax.nn.sigmoid(g0[:, 0:hp]),
            jax.nn.sigmoid(g0[:, hp:2 * hp]),
            jnp.tanh(g0[:, 2 * hp:3 * hp]),
            jax.nn.sigmoid(g0[:, 3 * hp:]),
            c0)

        # ---- layer 1: two MXU dots accumulating into one f32 result
        # (no per-timestep concat / relayout).
        g1 = (jnp.dot(h0n.astype(w_dtype), wih1_ref[...],
                      preferred_element_type=jnp.float32)
              + jnp.dot(h1.astype(w_dtype), whh1_ref[...],
                        preferred_element_type=jnp.float32)
              + b1_ref[...])
        h1n, c1n = cell_tail(
            jax.nn.sigmoid(g1[:, 0:hp]),
            jax.nn.sigmoid(g1[:, hp:2 * hp]),
            jnp.tanh(g1[:, 2 * hp:3 * hp]),
            jax.nn.sigmoid(g1[:, 3 * hp:]),
            c1)

        if needs_mask:  # python-level branch: no cost when seq divides evenly
            valid = (chunk * ts + t) < seq_len
            h0n = jnp.where(valid, h0n, h0)
            c0n = jnp.where(valid, c0n, c0)
            h1n = jnp.where(valid, h1n, h1)
            c1n = jnp.where(valid, c1n, c1)

        out_ref[t] = h1n          # lane-dense (Bp, Hp) store
        return (h0n, c0n, h1n, c1n)

    # State is carried in vregs within the chunk; one VMEM round trip/chunk.
    carry0 = (h0_ref[...], c0_ref[...], h1_ref[...], c1_ref[...])
    h0, c0, h1, c1 = lax.fori_loop(0, ts, step, carry0, unroll=unroll)

    h0_ref[...] = h0
    c0_ref[...] = c0
    h1_ref[...] = h1
    c1_ref[...] = c1

    @pl.when(chunk == last_chunk)
    def _finalize():
        hn_ref[0] = h0
        hn_ref[1] = h1
        cn_ref[0] = c0
        cn_ref[1] = c1


def _pad_gate_blocks(w, H, Hp):
    """Pad each of the 4 stacked gate blocks along axis 0 from H to Hp rows."""
    if Hp == H:
        return w
    pad = ((0, Hp - H),) + ((0, 0),) * (w.ndim - 1)
    return jnp.concatenate(
        [jnp.pad(blk, pad) for blk in jnp.split(w, 4, axis=0)], axis=0)


@functools.partial(jax.jit, static_argnames=("block_seq", "weight_dtype"))
def encoder_forward(x, params, *, block_seq=16, weight_dtype=jnp.bfloat16):
    """x: (seq, batch, input_size) f32. Returns (output, (hn, cn))."""
    S, B, _ = x.shape
    wih0, whh0, b0, wih1, whh1, b1 = params
    H = whh0.shape[1]

    # Lane-aligned padded hidden width (gate slices + output stores become
    # lane-dense); padded columns stay exactly zero through the recurrence.
    Hp = _round_up(H, 128)
    Gp = 4 * Hp
    # Full sublane tile for the batch; padded rows compute junk and are
    # sliced off below (they never mix with real rows).
    Bp = max(8, _round_up(B, 8))
    # Sequence chunking: bounds VMEM independent of S, lets the pipeliner
    # overlap xp prefetch / out writeback with the recurrence.
    ts = max(1, min(block_seq, S))
    n_chunks = -(-S // ts)
    Sp = n_chunks * ts

    # ---- weight prep (glue, not hot path) -------------------------------
    wih0p = _pad_gate_blocks(wih0, H, Hp)                              # (Gp, I)
    b0p = _pad_gate_blocks(b0, H, Hp)                                  # (Gp,)
    whh0p = jnp.pad(_pad_gate_blocks(whh0, H, Hp), ((0, 0), (0, Hp - H)))
    wih1p = jnp.pad(_pad_gate_blocks(wih1, H, Hp), ((0, 0), (0, Hp - H)))
    whh1p = jnp.pad(_pad_gate_blocks(whh1, H, Hp), ((0, 0), (0, Hp - H)))

    whh0_t = whh0p.T.astype(weight_dtype)    # (Hp, Gp)
    wih1_t = wih1p.T.astype(weight_dtype)    # (Hp, Gp)
    whh1_t = whh1p.T.astype(weight_dtype)    # (Hp, Gp)
    b1p = _pad_gate_blocks(b1, H, Hp).reshape(1, Gp).astype(jnp.float32)

    # Hoisted, non-recurrent layer-0 input projection + bias (one big matmul
    # in plain XLA); stored in weight_dtype to halve the per-chunk xp DMA.
    xb = jnp.pad(x, ((0, 0), (0, Bp - B), (0, 0)))
    xp = jnp.einsum('sbi,gi->sbg', xb, wih0p) + b0p[None, None, :]
    xp = jnp.pad(xp, ((0, Sp - S), (0, 0), (0, 0))).astype(weight_dtype)

    kernel = functools.partial(_lstm2_kernel, seq_len=S, unroll=min(ts, 4))

    out_p, hn_p, cn_p = pl.pallas_call(
        kernel,
        out_shape=(
            jax.ShapeDtypeStruct((Sp, Bp, Hp), jnp.float32),
            jax.ShapeDtypeStruct((2, Bp, Hp), jnp.float32),
            jax.ShapeDtypeStruct((2, Bp, Hp), jnp.float32),
        ),
        grid_spec=pltpu.PrefetchScalarGridSpec(
            num_scalar_prefetch=0,
            grid=(n_chunks,),
            in_specs=[
                pl.BlockSpec((ts, Bp, Gp), lambda i: (i, 0, 0)),   # xp chunk
                pl.BlockSpec((Hp, Gp), lambda i: (0, 0)),          # W_hh layer0
                pl.BlockSpec((Hp, Gp), lambda i: (0, 0)),          # W_ih layer1
                pl.BlockSpec((Hp, Gp), lambda i: (0, 0)),          # W_hh layer1
                pl.BlockSpec((1, Gp), lambda i: (0, 0)),           # b layer1
            ],
            out_specs=[
                pl.BlockSpec((ts, Bp, Hp), lambda i: (i, 0, 0)),   # output chunk
                pl.BlockSpec((2, Bp, Hp), lambda i: (0, 0, 0)),    # hn (resident)
                pl.BlockSpec((2, Bp, Hp), lambda i: (0, 0, 0)),    # cn (resident)
            ],
            scratch_shapes=[
                pltpu.VMEM((Bp, Hp), jnp.float32),  # h0 (carried across chunks)
                pltpu.VMEM((Bp, Hp), jnp.float32),  # c0
                pltpu.VMEM((Bp, Hp), jnp.float32),  # h1
                pltpu.VMEM((Bp, Hp), jnp.float32),  # c1
            ],
        ),
        compiler_params=pltpu.CompilerParams(
            # Sequential recurrence over seq chunks.  VMEM is bounded by the
            # chunked BlockSpecs, so the default scoped VMEM limit suffices.
            dimension_semantics=("arbitrary",),
        ),
    )(xp, whh0_t, wih1_t, whh1_t, b1p)

    out = out_p[:S, :B, :H]
    hn = hn_p[:, :B, :H]
    cn = cn_p[:, :B, :H]
    return out, (hn, cn)


def _reference_forward(x, params):
    """Pure-JAX reference (matches torch.nn.LSTM math, 2 layers, zero init)."""
    wih0, whh0, b0, wih1, whh1, b1 = params
    S, B, _ = x.shape
    H = whh0.shape[1]

    def cell(x_t, h, c, wih, whh, b):
        g = x_t @ wih.T + h @ whh.T + b
        i = jax.nn.sigmoid(g[:, 0 * H:1 * H])
        f = jax.nn.sigmoid(g[:, 1 * H:2 * H])
        gg = jnp.tanh(g[:, 2 * H:3 * H])
        o = jax.nn.sigmoid(g[:, 3 * H:4 * H])
        c = f * c + i * gg
        h = o * jnp.tanh(c)
        return h, c

    def step(carry, x_t):
        h0, c0, h1, c1 = carry
        h0, c0 = cell(x_t, h0, c0, wih0, whh0, b0)
        h1, c1 = cell(h0, h1, c1, wih1, whh1, b1)
        return (h0, c0, h1, c1), h1

    z = jnp.zeros((B, H), jnp.float32)
    (h0, c0, h1, c1), ys = jax.lax.scan(step, (z, z, z, z), x)
    return ys, (jnp.stack([h0, h1]), jnp.stack([c0, c1]))


def _init_params(key, input_size, hidden_size):
    """Deterministic param init (PyTorch-style U(-1/sqrt(H), 1/sqrt(H))).
    Biases are the combined b_ih + b_hh per layer."""
    H = hidden_size
    k = 1.0 / jnp.sqrt(jnp.float32(H))
    ks = jax.random.split(key, 6)
    u = lambda kk, shp: jax.random.uniform(kk, shp, jnp.float32, -k, k)
    wih0 = u(ks[0], (4 * H, input_size))
    whh0 = u(ks[1], (4 * H, H))
    b0 = u(ks[2], (4 * H,))
    wih1 = u(ks[3], (4 * H, H))
    whh1 = u(ks[4], (4 * H, H))
    b1 = u(ks[5], (4 * H,))
    return (wih0, whh0, b0, wih1, whh1, b1)


if __name__ == "__main__":
    SEQ, BATCH, INPUT, HIDDEN = 8, 2, 16, 32

    key = jax.random.PRNGKey(0)
    kx, kp = jax.random.split(key)
    x = jax.random.normal(kx, (SEQ, BATCH, INPUT), jnp.float32)
    params = _init_params(kp, INPUT, HIDDEN)

    ref_out, (ref_hn, ref_cn) = _reference_forward(x, params)

    def check(out, hn, cn, atol, rtol):
        assert out.shape == (SEQ, BATCH, HIDDEN)
        assert hn.shape == (2, BATCH, HIDDEN) and cn.shape == (2, BATCH, HIDDEN)
        assert jnp.allclose(out, ref_out, atol=atol, rtol=rtol)
        assert jnp.allclose(hn, ref_hn, atol=atol, rtol=rtol)
        assert jnp.allclose(cn, ref_cn, atol=atol, rtol=rtol)

    # f32-weight path, multi-chunk grid (2 chunks of 4): tight tolerance.
    out, (hn, cn) = encoder_forward(x, params, block_seq=4,
                                    weight_dtype=jnp.float32)
    jax.block_until_ready((out, hn, cn))
    check(out, hn, cn, atol=1e-4, rtol=1e-4)

    # bf16-weight path, ragged chunking (3,3,2 -> masked tail): loose tol.
    out, (hn, cn) = encoder_forward(x, params, block_seq=3,
                                    weight_dtype=jnp.bfloat16)
    jax.block_until_ready((out, hn, cn))
    check(out, hn, cn, atol=5e-2, rtol=5e-2)

    # Default path (bf16 weights, single chunk for this small S).
    out, (hn, cn) = encoder_forward(x, params)
    jax.block_until_ready((out, hn, cn))
    check(out, hn, cn, atol=5e-2, rtol=5e-2)

    print("KERNEL_OK")
</pallas_src>

<mosaic_0001>
module attributes {stable_mosaic.version = 11 : i64} {
  func.func @_lstm2_kernel(%arg0: i32, %arg1: memref<4x8x512xf32, #tpu.memory_space<vmem>>, %arg2: memref<128x512xf32, #tpu.memory_space<vmem>>, %arg3: memref<128x512xf32, #tpu.memory_space<vmem>>, %arg4: memref<128x512xf32, #tpu.memory_space<vmem>>, %arg5: memref<1x512xf32, #tpu.memory_space<vmem>>, %arg6: memref<4x8x128xf32, #tpu.memory_space<vmem>>, %arg7: memref<2x8x128xf32, #tpu.memory_space<vmem>>, %arg8: memref<2x8x128xf32, #tpu.memory_space<vmem>>, %arg9: memref<8x128xf32, #tpu.memory_space<vmem>>, %arg10: memref<8x128xf32, #tpu.memory_space<vmem>>, %arg11: memref<8x128xf32, #tpu.memory_space<vmem>>, %arg12: memref<8x128xf32, #tpu.memory_space<vmem>>) attributes {dimension_semantics = [#tpu.dimension_semantics<arbitrary>], iteration_bounds = array<i64: 2>, scalar_prefetch = 0 : i64, scratch_operands = 4 : i64, tpu.core_type = #tpu.core_type<tc>, window_params = [{transform_indices = @transform_0, window_bounds = array<i64: 4, 8, 512>}, {pipeline_mode = #tpu.pipeline_mode<synchronous>, transform_indices = @transform_1, window_bounds = array<i64: 128, 512>}, {pipeline_mode = #tpu.pipeline_mode<synchronous>, transform_indices = @transform_2, window_bounds = array<i64: 128, 512>}, {pipeline_mode = #tpu.pipeline_mode<synchronous>, transform_indices = @transform_3, window_bounds = array<i64: 128, 512>}, {pipeline_mode = #tpu.pipeline_mode<synchronous>, transform_indices = @transform_4, window_bounds = array<i64: 1, 512>}, {transform_indices = @transform_5, window_bounds = array<i64: 4, 8, 128>}, {pipeline_mode = #tpu.pipeline_mode<synchronous>, transform_indices = @transform_6, window_bounds = array<i64: 2, 8, 128>}, {pipeline_mode = #tpu.pipeline_mode<synchronous>, transform_indices = @transform_7, window_bounds = array<i64: 2, 8, 128>}]} {
    %c0_i32 = arith.constant 0 : i32
    %0 = arith.cmpi eq, %arg0, %c0_i32 : i32
    %1 = arith.extui %0 : i1 to i32
    %c0_i32_0 = arith.constant 0 : i32
    %2 = arith.cmpi ne, %1, %c0_i32_0 : i32
    scf.if %2 {
      %cst_102 = arith.constant 0.000000e+00 : f32
      %286 = vector.broadcast %cst_102 : f32 to vector<8x128xf32>
      %c0_103 = arith.constant 0 : index
      %c0_104 = arith.constant 0 : index
      %287 = vector.load %arg9[%c0_103, %c0_104] : memref<8x128xf32, #tpu.memory_space<vmem>>, vector<8x128xf32>
      tpu.vector_store %arg9[%c0_103, %c0_104], %286 {strides = array<i32>} : memref<8x128xf32, #tpu.memory_space<vmem>>, vector<8x128xf32>,
      %cst_105 = arith.constant 0.000000e+00 : f32
      %288 = vector.broadcast %cst_105 : f32 to vector<8x128xf32>
      %c0_106 = arith.constant 0 : index
      %c0_107 = arith.constant 0 : index
      %289 = vector.load %arg10[%c0_106, %c0_107] : memref<8x128xf32, #tpu.memory_space<vmem>>, vector<8x128xf32>
      tpu.vector_store %arg10[%c0_106, %c0_107], %288 {strides = array<i32>} : memref<8x128xf32, #tpu.memory_space<vmem>>, vector<8x128xf32>,
      %cst_108 = arith.constant 0.000000e+00 : f32
      %290 = vector.broadcast %cst_108 : f32 to vector<8x128xf32>
      %c0_109 = arith.constant 0 : index
      %c0_110 = arith.constant 0 : index
      %291 = vector.load %arg11[%c0_109, %c0_110] : memref<8x128xf32, #tpu.memory_space<vmem>>, vector<8x128xf32>
      tpu.vector_store %arg11[%c0_109, %c0_110], %290 {strides = array<i32>} : memref<8x128xf32, #tpu.memory_space<vmem>>, vector<8x128xf32>,
      %cst_111 = arith.constant 0.000000e+00 : f32
      %292 = vector.broadcast %cst_111 : f32 to vector<8x128xf32>
      %c0_112 = arith.constant 0 : index
      %c0_113 = arith.constant 0 : index
      %293 = vector.load %arg12[%c0_112, %c0_113] : memref<8x128xf32, #tpu.memory_space<vmem>>, vector<8x128xf32>
      tpu.vector_store %arg12[%c0_112, %c0_113], %292 {strides = array<i32>} : memref<8x128xf32, #tpu.memory_space<vmem>>, vector<8x128xf32>,
    } else {
    }
    %c0 = arith.constant 0 : index
    %c0_1 = arith.constant 0 : index
    %3 = vector.load %arg9[%c0, %c0_1] : memref<8x128xf32, #tpu.memory_space<vmem>>, vector<8x128xf32>
    %c0_2 = arith.constant 0 : index
    %c0_3 = arith.constant 0 : index
    %4 = vector.load %arg10[%c0_2, %c0_3] : memref<8x128xf32, #tpu.memory_space<vmem>>, vector<8x128xf32>
    %c0_4 = arith.constant 0 : index
    %c0_5 = arith.constant 0 : index
    %5 = vector.load %arg11[%c0_4, %c0_5] : memref<8x128xf32, #tpu.memory_space<vmem>>, vector<8x128xf32>
    %c0_6 = arith.constant 0 : index
    %c0_7 = arith.constant 0 : index
    %6 = vector.load %arg12[%c0_6, %c0_7] : memref<8x128xf32, #tpu.memory_space<vmem>>, vector<8x128xf32>
    %c0_i32_8 = arith.constant 0 : i32
    %7 = arith.index_cast %c0_i32_8 : i32 to index
    %c0_9 = arith.constant 0 : index
    %c0_10 = arith.constant 0 : index
    %8 = vector.load %arg1[%7, %c0_9, %c0_10] : memref<4x8x512xf32, #tpu.memory_space<vmem>>, vector<1x8x512xf32>
    %9 = vector.shape_cast %8 : vector<1x8x512xf32> to vector<8x512xf32>
    %c0_11 = arith.constant 0 : index
    %c0_12 = arith.constant 0 : index
    %10 = vector.load %arg2[%c0_11, %c0_12] : memref<128x512xf32, #tpu.memory_space<vmem>>, vector<128x512xf32>
    %cst = arith.constant dense<0.000000e+00> : vector<8x512xf32>
    %11 = tpu.matmul %3, %10, %cst {dimension_numbers = #tpu.dot_dimension_numbers<[1], [0], [0], [1], [0, 0, 1, 1], [], []>} : vector<8x128xf32>, vector<128x512xf32>, vector<8x512xf32> -> vector<8x512xf32>
    %12 = arith.addf %9, %11 : vector<8x512xf32>
    %13 = vector.extract_strided_slice %12 {offsets = [0, 0], sizes = [8, 128], strides = [1, 1]} : vector<8x512xf32> to vector<8x128xf32>
    %14 = arith.negf %13 : vector<8x128xf32>
    %15 = math.exp %14 : vector<8x128xf32>
    %cst_13 = arith.constant 1.000000e+00 : f32
    %16 = vector.broadcast %cst_13 : f32 to vector<8x128xf32>
    %17 = arith.addf %16, %15 : vector<8x128xf32>
    %18 = arith.divf %16, %17 : vector<8x128xf32>
    %19 = vector.extract_strided_slice %12 {offsets = [0, 128], sizes = [8, 128], strides = [1, 1]} : vector<8x512xf32> to vector<8x128xf32>
    %20 = arith.negf %19 : vector<8x128xf32>
    %21 = math.exp %20 : vector<8x128xf32>
    %cst_14 = arith.constant 1.000000e+00 : f32
    %22 = vector.broadcast %cst_14 : f32 to vector<8x128xf32>
    %23 = arith.addf %22, %21 : vector<8x128xf32>
    %24 = arith.divf %22, %23 : vector<8x128xf32>
    %25 = vector.extract_strided_slice %12 {offsets = [0, 256], sizes = [8, 128], strides = [1, 1]} : vector<8x512xf32> to vector<8x128xf32>
    %26 = math.tanh %25 : vector<8x128xf32>
    %27 = vector.extract_strided_slice %12 {offsets = [0, 384], sizes = [8, 128], strides = [1, 1]} : vector<8x512xf32> to vector<8x128xf32>
    %28 = arith.negf %27 : vector<8x128xf32>
    %29 = math.exp %28 : vector<8x128xf32>
    %cst_15 = arith.constant 1.000000e+00 : f32
    %30 = vector.broadcast %cst_15 : f32 to vector<8x128xf32>
    %31 = arith.addf %30, %29 : vector<8x128xf32>
    %32 = arith.divf %30, %31 : vector<8x128xf32>
    %33 = arith.mulf %24, %4 : vector<8x128xf32>
    %34 = arith.mulf %18, %26 : vector<8x128xf32>
    %35 = arith.addf %33, %34 : vector<8x128xf32>
    %36 = math.tanh %35 : vector<8x128xf32>
    %37 = arith.mulf %32, %36 : vector<8x128xf32>
    %c0_16 = arith.constant 0 : index
    %c0_17 = arith.constant 0 : index
    %38 = vector.load %arg3[%c0_16, %c0_17] : memref<128x512xf32, #tpu.memory_space<vmem>>, vector<128x512xf32>
    %cst_18 = arith.constant dense<0.000000e+00> : vector<8x512xf32>
    %39 = tpu.matmul %37, %38, %cst_18 {dimension_numbers = #tpu.dot_dimension_numbers<[1], [0], [0], [1], [0, 0, 1, 1], [], []>} : vector<8x128xf32>, vector<128x512xf32>, vector<8x512xf32> -> vector<8x512xf32>
    %c0_19 = arith.constant 0 : index
    %c0_20 = arith.constant 0 : index
    %40 = vector.load %arg4[%c0_19, %c0_20] : memref<128x512xf32, #tpu.memory_space<vmem>>, vector<128x512xf32>
    %cst_21 = arith.constant dense<0.000000e+00> : vector<8x512xf32>
    %41 = tpu.matmul %5, %40, %cst_21 {dimension_numbers = #tpu.dot_dimension_numbers<[1], [0], [0], [1], [0, 0, 1, 1], [], []>} : vector<8x128xf32>, vector<128x512xf32>, vector<8x512xf32> -> vector<8x512xf32>
    %42 = arith.addf %39, %41 : vector<8x512xf32>
    %c0_22 = arith.constant 0 : index
    %c0_23 = arith.constant 0 : index
    %43 = vector.load %arg5[%c0_22, %c0_23] : memref<1x512xf32, #tpu.memory_space<vmem>>, vector<1x512xf32>
    %44 = vector.broadcast %43 : vector<1x512xf32> to vector<8x512xf32>
    %45 = arith.addf %42, %44 : vector<8x512xf32>
    %46 = vector.extract_strided_slice %45 {offsets = [0, 0], sizes = [8, 128], strides = [1, 1]} : vector<8x512xf32> to vector<8x128xf32>
    %47 = arith.negf %46 : vector<8x128xf32>
    %48 = math.exp %47 : vector<8x128xf32>
    %cst_24 = arith.constant 1.000000e+00 : f32
    %49 = vector.broadcast %cst_24 : f32 to vector<8x128xf32>
    %50 = arith.addf %49, %48 : vector<8x128xf32>
    %51 = arith.divf %49, %50 : vector<8x128xf32>
    %52 = vector.extract_strided_slice %45 {offsets = [0, 128], sizes = [8, 128], strides = [1, 1]} : vector<8x512xf32> to vector<8x128xf32>
    %53 = arith.negf %52 : vector<8x128xf32>
    %54 = math.exp %53 : vector<8x128xf32>
    %cst_25 = arith.constant 1.000000e+00 : f32
    %55 = vector.broadcast %cst_25 : f32 to vector<8x128xf32>
    %56 = arith.addf %55, %54 : vector<8x128xf32>
    %57 = arith.divf %55, %56 : vector<8x128xf32>
    %58 = vector.extract_strided_slice %45 {offsets = [0, 256], sizes = [8, 128], strides = [1, 1]} : vector<8x512xf32> to vector<8x128xf32>
    %59 = math.tanh %58 : vector<8x128xf32>
    %60 = vector.extract_strided_slice %45 {offsets = [0, 384], sizes = [8, 128], strides = [1, 1]} : vector<8x512xf32> to vector<8x128xf32>
    %61 = arith.negf %60 : vector<8x128xf32>
    %62 = math.exp %61 : vector<8x128xf32>
    %cst_26 = arith.constant 1.000000e+00 : f32
    %63 = vector.broadcast %cst_26 : f32 to vector<8x128xf32>
    %64 = arith.addf %63, %62 : vector<8x128xf32>
    %65 = arith.divf %63, %64 : vector<8x128xf32>
    %66 = arith.mulf %57, %6 : vector<8x128xf32>
    %67 = arith.mulf %51, %59 : vector<8x128xf32>
    %68 = arith.addf %66, %67 : vector<8x128xf32>
    %69 = math.tanh %68 : vector<8x128xf32>
    %70 = arith.mulf %65, %69 : vector<8x128xf32>
    %71 = arith.index_cast %c0_i32_8 : i32 to index
    %c0_27 = arith.constant 0 : index
    %c0_28 = arith.constant 0 : index
    %72 = vector.load %arg6[%71, %c0_27, %c0_28] : memref<4x8x128xf32, #tpu.memory_space<vmem>>, vector<1x8x128xf32>
    %73 = vector.shape_cast %72 : vector<1x8x128xf32> to vector<8x128xf32>
    %74 = vector.shape_cast %70 : vector<8x128xf32> to vector<1x8x128xf32>
    tpu.vector_store %arg6[%71, %c0_27, %c0_28], %74 {strides = array<i32>} : memref<4x8x128xf32, #tpu.memory_space<vmem>>, vector<1x8x128xf32>,
    %c1_i32 = arith.constant 1 : i32
    %75 = arith.index_cast %c1_i32 : i32 to index
    %c0_29 = arith.constant 0 : index
    %c0_30 = arith.constant 0 : index
    %76 = vector.load %arg1[%75, %c0_29, %c0_30] : memref<4x8x512xf32, #tpu.memory_space<vmem>>, vector<1x8x512xf32>
    %77 = vector.shape_cast %76 : vector<1x8x512xf32> to vector<8x512xf32>
    %c0_31 = arith.constant 0 : index
    %c0_32 = arith.constant 0 : index
    %78 = vector.load %arg2[%c0_31, %c0_32] : memref<128x512xf32, #tpu.memory_space<vmem>>, vector<128x512xf32>
    %cst_33 = arith.constant dense<0.000000e+00> : vector<8x512xf32>
    %79 = tpu.matmul %37, %78, %cst_33 {dimension_numbers = #tpu.dot_dimension_numbers<[1], [0], [0], [1], [0, 0, 1, 1], [], []>} : vector<8x128xf32>, vector<128x512xf32>, vector<8x512xf32> -> vector<8x512xf32>
    %80 = arith.addf %77, %79 : vector<8x512xf32>
    %81 = vector.extract_strided_slice %80 {offsets = [0, 0], sizes = [8, 128], strides = [1, 1]} : vector<8x512xf32> to vector<8x128xf32>
    %82 = arith.negf %81 : vector<8x128xf32>
    %83 = math.exp %82 : vector<8x128xf32>
    %cst_34 = arith.constant 1.000000e+00 : f32
    %84 = vector.broadcast %cst_34 : f32 to vector<8x128xf32>
    %85 = arith.addf %84, %83 : vector<8x128xf32>
    %86 = arith.divf %84, %85 : vector<8x128xf32>
    %87 = vector.extract_strided_slice %80 {offsets = [0, 128], sizes = [8, 128], strides = [1, 1]} : vector<8x512xf32> to vector<8x128xf32>
    %88 = arith.negf %87 : vector<8x128xf32>
    %89 = math.exp %88 : vector<8x128xf32>
    %cst_35 = arith.constant 1.000000e+00 : f32
    %90 = vector.broadcast %cst_35 : f32 to vector<8x128xf32>
    %91 = arith.addf %90, %89 : vector<8x128xf32>
    %92 = arith.divf %90, %91 : vector<8x128xf32>
    %93 = vector.extract_strided_slice %80 {offsets = [0, 256], sizes = [8, 128], strides = [1, 1]} : vector<8x512xf32> to vector<8x128xf32>
    %94 = math.tanh %93 : vector<8x128xf32>
    %95 = vector.extract_strided_slice %80 {offsets = [0, 384], sizes = [8, 128], strides = [1, 1]} : vector<8x512xf32> to vector<8x128xf32>
    %96 = arith.negf %95 : vector<8x128xf32>
    %97 = math.exp %96 : vector<8x128xf32>
    %cst_36 = arith.constant 1.000000e+00 : f32
    %98 = vector.broadcast %cst_36 : f32 to vector<8x128xf32>
    %99 = arith.addf %98, %97 : vector<8x128xf32>
    %100 = arith.divf %98, %99 : vector<8x128xf32>
    %101 = arith.mulf %92, %35 : vector<8x128xf32>
    %102 = arith.mulf %86, %94 : vector<8x128xf32>
    %103 = arith.addf %101, %102 : vector<8x128xf32>
    %104 = math.tanh %103 : vector<8x128xf32>
    %105 = arith.mulf %100, %104 : vector<8x128xf32>
    %c0_37 = arith.constant 0 : index
    %c0_38 = arith.constant 0 : index
    %106 = vector.load %arg3[%c0_37, %c0_38] : memref<128x512xf32, #tpu.memory_space<vmem>>, vector<128x512xf32>
    %cst_39 = arith.constant dense<0.000000e+00> : vector<8x512xf32>
    %107 = tpu.matmul %105, %106, %cst_39 {dimension_numbers = #tpu.dot_dimension_numbers<[1], [0], [0], [1], [0, 0, 1, 1], [], []>} : vector<8x128xf32>, vector<128x512xf32>, vector<8x512xf32> -> vector<8x512xf32>
    %c0_40 = arith.constant 0 : index
    %c0_41 = arith.constant 0 : index
    %108 = vector.load %arg4[%c0_40, %c0_41] : memref<128x512xf32, #tpu.memory_space<vmem>>, vector<128x512xf32>
    %cst_42 = arith.constant dense<0.000000e+00> : vector<8x512xf32>
    %109 = tpu.matmul %70, %108, %cst_42 {dimension_numbers = #tpu.dot_dimension_numbers<[1], [0], [0], [1], [0, 0, 1, 1], [], []>} : vector<8x128xf32>, vector<128x512xf32>, vector<8x512xf32> -> vector<8x512xf32>
    %110 = arith.addf %107, %109 : vector<8x512xf32>
    %c0_43 = arith.constant 0 : index
    %c0_44 = arith.constant 0 : index
    %111 = vector.load %arg5[%c0_43, %c0_44] : memref<1x512xf32, #tpu.memory_space<vmem>>, vector<1x512xf32>
    %112 = vector.broadcast %111 : vector<1x512xf32> to vector<8x512xf32>
    %113 = arith.addf %110, %112 : vector<8x512xf32>
    %114 = vector.extract_strided_slice %113 {offsets = [0, 0], sizes = [8, 128], strides = [1, 1]} : vector<8x512xf32> to vector<8x128xf32>
    %115 = arith.negf %114 : vector<8x128xf32>
    %116 = math.exp %115 : vector<8x128xf32>
    %cst_45 = arith.constant 1.000000e+00 : f32
    %117 = vector.broadcast %cst_45 : f32 to vector<8x128xf32>
    %118 = arith.addf %117, %116 : vector<8x128xf32>
    %119 = arith.divf %117, %118 : vector<8x128xf32>
    %120 = vector.extract_strided_slice %113 {offsets = [0, 128], sizes = [8, 128], strides = [1, 1]} : vector<8x512xf32> to vector<8x128xf32>
    %121 = arith.negf %120 : vector<8x128xf32>
    %122 = math.exp %121 : vector<8x128xf32>
    %cst_46 = arith.constant 1.000000e+00 : f32
    %123 = vector.broadcast %cst_46 : f32 to vector<8x128xf32>
    %124 = arith.addf %123, %122 : vector<8x128xf32>
    %125 = arith.divf %123, %124 : vector<8x128xf32>
    %126 = vector.extract_strided_slice %113 {offsets = [0, 256], sizes = [8, 128], strides = [1, 1]} : vector<8x512xf32> to vector<8x128xf32>
    %127 = math.tanh %126 : vector<8x128xf32>
    %128 = vector.extract_strided_slice %113 {offsets = [0, 384], sizes = [8, 128], strides = [1, 1]} : vector<8x512xf32> to vector<8x128xf32>
    %129 = arith.negf %128 : vector<8x128xf32>
    %130 = math.exp %129 : vector<8x128xf32>
    %cst_47 = arith.constant 1.000000e+00 : f32
    %131 = vector.broadcast %cst_47 : f32 to vector<8x128xf32>
    %132 = arith.addf %131, %130 : vector<8x128xf32>
    %133 = arith.divf %131, %132 : vector<8x128xf32>
    %134 = arith.mulf %125, %68 : vector<8x128xf32>
    %135 = arith.mulf %119, %127 : vector<8x128xf32>
    %136 = arith.addf %134, %135 : vector<8x128xf32>
    %137 = math.tanh %136 : vector<8x128xf32>
    %138 = arith.mulf %133, %137 : vector<8x128xf32>
    %139 = arith.index_cast %c1_i32 : i32 to index
    %c0_48 = arith.constant 0 : index
    %c0_49 = arith.constant 0 : index
    %140 = vector.load %arg6[%139, %c0_48, %c0_49] : memref<4x8x128xf32, #tpu.memory_space<vmem>>, vector<1x8x128xf32>
    %141 = vector.shape_cast %140 : vector<1x8x128xf32> to vector<8x128xf32>
    %142 = vector.shape_cast %138 : vector<8x128xf32> to vector<1x8x128xf32>
    tpu.vector_store %arg6[%139, %c0_48, %c0_49], %142 {strides = array<i32>} : memref<4x8x128xf32, #tpu.memory_space<vmem>>, vector<1x8x128xf32>,
    %c2_i32 = arith.constant 2 : i32
    %143 = arith.index_cast %c2_i32 : i32 to index
    %c0_50 = arith.constant 0 : index
    %c0_51 = arith.constant 0 : index
    %144 = vector.load %arg1[%143, %c0_50, %c0_51] : memref<4x8x512xf32, #tpu.memory_space<vmem>>, vector<1x8x512xf32>
    %145 = vector.shape_cast %144 : vector<1x8x512xf32> to vector<8x512xf32>
    %c0_52 = arith.constant 0 : index
    %c0_53 = arith.constant 0 : index
    %146 = vector.load %arg2[%c0_52, %c0_53] : memref<128x512xf32, #tpu.memory_space<vmem>>, vector<128x512xf32>
    %cst_54 = arith.constant dense<0.000000e+00> : vector<8x512xf32>
    %147 = tpu.matmul %105, %146, %cst_54 {dimension_numbers = #tpu.dot_dimension_numbers<[1], [0], [0], [1], [0, 0, 1, 1], [], []>} : vector<8x128xf32>, vector<128x512xf32>, vector<8x512xf32> -> vector<8x512xf32>
    %148 = arith.addf %145, %147 : vector<8x512xf32>
    %149 = vector.extract_strided_slice %148 {offsets = [0, 0], sizes = [8, 128], strides = [1, 1]} : vector<8x512xf32> to vector<8x128xf32>
    %150 = arith.negf %149 : vector<8x128xf32>
    %151 = math.exp %150 : vector<8x128xf32>
    %cst_55 = arith.constant 1.000000e+00 : f32
    %152 = vector.broadcast %cst_55 : f32 to vector<8x128xf32>
    %153 = arith.addf %152, %151 : vector<8x128xf32>
    %154 = arith.divf %152, %153 : vector<8x128xf32>
    %155 = vector.extract_strided_slice %148 {offsets = [0, 128], sizes = [8, 128], strides = [1, 1]} : vector<8x512xf32> to vector<8x128xf32>
    %156 = arith.negf %155 : vector<8x128xf32>
    %157 = math.exp %156 : vector<8x128xf32>
    %cst_56 = arith.constant 1.000000e+00 : f32
    %158 = vector.broadcast %cst_56 : f32 to vector<8x128xf32>
    %159 = arith.addf %158, %157 : vector<8x128xf32>
    %160 = arith.divf %158, %159 : vector<8x128xf32>
    %161 = vector.extract_strided_slice %148 {offsets = [0, 256], sizes = [8, 128], strides = [1, 1]} : vector<8x512xf32> to vector<8x128xf32>
    %162 = math.tanh %161 : vector<8x128xf32>
    %163 = vector.extract_strided_slice %148 {offsets = [0, 384], sizes = [8, 128], strides = [1, 1]} : vector<8x512xf32> to vector<8x128xf32>
    %164 = arith.negf %163 : vector<8x128xf32>
    %165 = math.exp %164 : vector<8x128xf32>
    %cst_57 = arith.constant 1.000000e+00 : f32
    %166 = vector.broadcast %cst_57 : f32 to vector<8x128xf32>
    %167 = arith.addf %166, %165 : vector<8x128xf32>
    %168 = arith.divf %166, %167 : vector<8x128xf32>
    %169 = arith.mulf %160, %103 : vector<8x128xf32>
    %170 = arith.mulf %154, %162 : vector<8x128xf32>
    %171 = arith.addf %169, %170 : vector<8x128xf32>
    %172 = math.tanh %171 : vector<8x128xf32>
    %173 = arith.mulf %168, %172 : vector<8x128xf32>
    %c0_58 = arith.constant 0 : index
    %c0_59 = arith.constant 0 : index
    %174 = vector.load %arg3[%c0_58, %c0_59] : memref<128x512xf32, #tpu.memory_space<vmem>>, vector<128x512xf32>
    %cst_60 = arith.constant dense<0.000000e+00> : vector<8x512xf32>
    %175 = tpu.matmul %173, %174, %cst_60 {dimension_numbers = #tpu.dot_dimension_numbers<[1], [0], [0], [1], [0, 0, 1, 1], [], []>} : vector<8x128xf32>, vector<128x512xf32>, vector<8x512xf32> -> vector<8x512xf32>
    %c0_61 = arith.constant 0 : index
    %c0_62 = arith.constant 0 : index
    %176 = vector.load %arg4[%c0_61, %c0_62] : memref<128x512xf32, #tpu.memory_space<vmem>>, vector<128x512xf32>
    %cst_63 = arith.constant dense<0.000000e+00> : vector<8x512xf32>
    %177 = tpu.matmul %138, %176, %cst_63 {dimension_numbers = #tpu.dot_dimension_numbers<[1], [0], [0], [1], [0, 0, 1, 1], [], []>} : vector<8x128xf32>, vector<128x512xf32>, vector<8x512xf32> -> vector<8x512xf32>
    %178 = arith.addf %175, %177 : vector<8x512xf32>
    %c0_64 = arith.constant 0 : index
    %c0_65 = arith.constant 0 : index
    %179 = vector.load %arg5[%c0_64, %c0_65] : memref<1x512xf32, #tpu.memory_space<vmem>>, vector<1x512xf32>
    %180 = vector.broadcast %179 : vector<1x512xf32> to vector<8x512xf32>
    %181 = arith.addf %178, %180 : vector<8x512xf32>
    %182 = vector.extract_strided_slice %181 {offsets = [0, 0], sizes = [8, 128], strides = [1, 1]} : vector<8x512xf32> to vector<8x128xf32>
    %183 = arith.negf %182 : vector<8x128xf32>
    %184 = math.exp %183 : vector<8x128xf32>
    %cst_66 = arith.constant 1.000000e+00 : f32
    %185 = vector.broadcast %cst_66 : f32 to vector<8x128xf32>
    %186 = arith.addf %185, %184 : vector<8x128xf32>
    %187 = arith.divf %185, %186 : vector<8x128xf32>
    %188 = vector.extract_strided_slice %181 {offsets = [0, 128], sizes = [8, 128], strides = [1, 1]} : vector<8x512xf32> to vector<8x128xf32>
    %189 = arith.negf %188 : vector<8x128xf32>
    %190 = math.exp %189 : vector<8x128xf32>
    %cst_67 = arith.constant 1.000000e+00 : f32
    %191 = vector.broadcast %cst_67 : f32 to vector<8x128xf32>
    %192 = arith.addf %191, %190 : vector<8x128xf32>
    %193 = arith.divf %191, %192 : vector<8x128xf32>
    %194 = vector.extract_strided_slice %181 {offsets = [0, 256], sizes = [8, 128], strides = [1, 1]} : vector<8x512xf32> to vector<8x128xf32>
    %195 = math.tanh %194 : vector<8x128xf32>
    %196 = vector.extract_strided_slice %181 {offsets = [0, 384], sizes = [8, 128], strides = [1, 1]} : vector<8x512xf32> to vector<8x128xf32>
    %197 = arith.negf %196 : vector<8x128xf32>
    %198 = math.exp %197 : vector<8x128xf32>
    %cst_68 = arith.constant 1.000000e+00 : f32
    %199 = vector.broadcast %cst_68 : f32 to vector<8x128xf32>
    %200 = arith.addf %199, %198 : vector<8x128xf32>
    %201 = arith.divf %199, %200 : vector<8x128xf32>
    %202 = arith.mulf %193, %136 : vector<8x128xf32>
    %203 = arith.mulf %187, %195 : vector<8x128xf32>
    %204 = arith.addf %202, %203 : vector<8x128xf32>
    %205 = math.tanh %204 : vector<8x128xf32>
    %206 = arith.mulf %201, %205 : vector<8x128xf32>
    %207 = arith.index_cast %c2_i32 : i32 to index
    %c0_69 = arith.constant 0 : index
    %c0_70 = arith.constant 0 : index
    %208 = vector.load %arg6[%207, %c0_69, %c0_70] : memref<4x8x128xf32, #tpu.memory_space<vmem>>, vector<1x8x128xf32>
    %209 = vector.shape_cast %208 : vector<1x8x128xf32> to vector<8x128xf32>
    %210 = vector.shape_cast %206 : vector<8x128xf32> to vector<1x8x128xf32>
    tpu.vector_store %arg6[%207, %c0_69, %c0_70], %210 {strides = array<i32>} : memref<4x8x128xf32, #tpu.memory_space<vmem>>, vector<1x8x128xf32>,
    %c3_i32 = arith.constant 3 : i32
    %211 = arith.index_cast %c3_i32 : i32 to index
    %c0_71 = arith.constant 0 : index
    %c0_72 = arith.constant 0 : index
    %212 = vector.load %arg1[%211, %c0_71, %c0_72] : memref<4x8x512xf32, #tpu.memory_space<vmem>>, vector<1x8x512xf32>
    %213 = vector.shape_cast %212 : vector<1x8x512xf32> to vector<8x512xf32>
    %c0_73 = arith.constant 0 : index
    %c0_74 = arith.constant 0 : index
    %214 = vector.load %arg2[%c0_73, %c0_74] : memref<128x512xf32, #tpu.memory_space<vmem>>, vector<128x512xf32>
    %cst_75 = arith.constant dense<0.000000e+00> : vector<8x512xf32>
    %215 = tpu.matmul %173, %214, %cst_75 {dimension_numbers = #tpu.dot_dimension_numbers<[1], [0], [0], [1], [0, 0, 1, 1], [], []>} : vector<8x128xf32>, vector<128x512xf32>, vector<8x512xf32> -> vector<8x512xf32>
    %216 = arith.addf %213, %215 : vector<8x512xf32>
    %217 = vector.extract_strided_slice %216 {offsets = [0, 0], sizes = [8, 128], strides = [1, 1]} : vector<8x512xf32> to vector<8x128xf32>
    %218 = arith.negf %217 : vector<8x128xf32>
    %219 = math.exp %218 : vector<8x128xf32>
    %cst_76 = arith.constant 1.000000e+00 : f32
    %220 = vector.broadcast %cst_76 : f32 to vector<8x128xf32>
    %221 = arith.addf %220, %219 : vector<8x128xf32>
    %222 = arith.divf %220, %221 : vector<8x128xf32>
    %223 = vector.extract_strided_slice %216 {offsets = [0, 128], sizes = [8, 128], strides = [1, 1]} : vector<8x512xf32> to vector<8x128xf32>
    %224 = arith.negf %223 : vector<8x128xf32>
    %225 = math.exp %224 : vector<8x128xf32>
    %cst_77 = arith.constant 1.000000e+00 : f32
    %226 = vector.broadcast %cst_77 : f32 to vector<8x128xf32>
    %227 = arith.addf %226, %225 : vector<8x128xf32>
    %228 = arith.divf %226, %227 : vector<8x128xf32>
    %229 = vector.extract_strided_slice %216 {offsets = [0, 256], sizes = [8, 128], strides = [1, 1]} : vector<8x512xf32> to vector<8x128xf32>
    %230 = math.tanh %229 : vector<8x128xf32>
    %231 = vector.extract_strided_slice %216 {offsets = [0, 384], sizes = [8, 128], strides = [1, 1]} : vector<8x512xf32> to vector<8x128xf32>
    %232 = arith.negf %231 : vector<8x128xf32>
    %233 = math.exp %232 : vector<8x128xf32>
    %cst_78 = arith.constant 1.000000e+00 : f32
    %234 = vector.broadcast %cst_78 : f32 to vector<8x128xf32>
    %235 = arith.addf %234, %233 : vector<8x128xf32>
    %236 = arith.divf %234, %235 : vector<8x128xf32>
    %237 = arith.mulf %228, %171 : vector<8x128xf32>
    %238 = arith.mulf %222, %230 : vector<8x128xf32>
    %239 = arith.addf %237, %238 : vector<8x128xf32>
    %240 = math.tanh %239 : vector<8x128xf32>
    %241 = arith.mulf %236, %240 : vector<8x128xf32>
    %c0_79 = arith.constant 0 : index
    %c0_80 = arith.constant 0 : index
    %242 = vector.load %arg3[%c0_79, %c0_80] : memref<128x512xf32, #tpu.memory_space<vmem>>, vector<128x512xf32>
    %cst_81 = arith.constant dense<0.000000e+00> : vector<8x512xf32>
    %243 = tpu.matmul %241, %242, %cst_81 {dimension_numbers = #tpu.dot_dimension_numbers<[1], [0], [0], [1], [0, 0, 1, 1], [], []>} : vector<8x128xf32>, vector<128x512xf32>, vector<8x512xf32> -> vector<8x512xf32>
    %c0_82 = arith.constant 0 : index
    %c0_83 = arith.constant 0 : index
    %244 = vector.load %arg4[%c0_82, %c0_83] : memref<128x512xf32, #tpu.memory_space<vmem>>, vector<128x512xf32>
    %cst_84 = arith.constant dense<0.000000e+00> : vector<8x512xf32>
    %245 = tpu.matmul %206, %244, %cst_84 {dimension_numbers = #tpu.dot_dimension_numbers<[1], [0], [0], [1], [0, 0, 1, 1], [], []>} : vector<8x128xf32>, vector<128x512xf32>, vector<8x512xf32> -> vector<8x512xf32>
    %246 = arith.addf %243, %245 : vector<8x512xf32>
    %c0_85 = arith.constant 0 : index
    %c0_86 = arith.constant 0 : index
    %247 = vector.load %arg5[%c0_85, %c0_86] : memref<1x512xf32, #tpu.memory_space<vmem>>, vector<1x512xf32>
    %248 = vector.broadcast %247 : vector<1x512xf32> to vector<8x512xf32>
    %249 = arith.addf %246, %248 : vector<8x512xf32>
    %250 = vector.extract_strided_slice %249 {offsets = [0, 0], sizes = [8, 128], strides = [1, 1]} : vector<8x512xf32> to vector<8x128xf32>
    %251 = arith.negf %250 : vector<8x128xf32>
    %252 = math.exp %251 : vector<8x128xf32>
    %cst_87 = arith.constant 1.000000e+00 : f32
    %253 = vector.broadcast %cst_87 : f32 to vector<8x128xf32>
    %254 = arith.addf %253, %252 : vector<8x128xf32>
    %255 = arith.divf %253, %254 : vector<8x128xf32>
    %256 = vector.extract_strided_slice %249 {offsets = [0, 128], sizes = [8, 128], strides = [1, 1]} : vector<8x512xf32> to vector<8x128xf32>
    %257 = arith.negf %256 : vector<8x128xf32>
    %258 = math.exp %257 : vector<8x128xf32>
    %cst_88 = arith.constant 1.000000e+00 : f32
    %259 = vector.broadcast %cst_88 : f32 to vector<8x128xf32>
    %260 = arith.addf %259, %258 : vector<8x128xf32>
    %261 = arith.divf %259, %260 : vector<8x128xf32>
    %262 = vector.extract_strided_slice %249 {offsets = [0, 256], sizes = [8, 128], strides = [1, 1]} : vector<8x512xf32> to vector<8x128xf32>
    %263 = math.tanh %262 : vector<8x128xf32>
    %264 = vector.extract_strided_slice %249 {offsets = [0, 384], sizes = [8, 128], strides = [1, 1]} : vector<8x512xf32> to vector<8x128xf32>
    %265 = arith.negf %264 : vector<8x128xf32>
    %266 = math.exp %265 : vector<8x128xf32>
    %cst_89 = arith.constant 1.000000e+00 : f32
    %267 = vector.broadcast %cst_89 : f32 to vector<8x128xf32>
    %268 = arith.addf %267, %266 : vector<8x128xf32>
    %269 = arith.divf %267, %268 : vector<8x128xf32>
    %270 = arith.mulf %261, %204 : vector<8x128xf32>
    %271 = arith.mulf %255, %263 : vector<8x128xf32>
    %272 = arith.addf %270, %271 : vector<8x128xf32>
    %273 = math.tanh %272 : vector<8x128xf32>
    %274 = arith.mulf %269, %273 : vector<8x128xf32>
    %275 = arith.index_cast %c3_i32 : i32 to index
    %c0_90 = arith.constant 0 : index
    %c0_91 = arith.constant 0 : index
    %276 = vector.load %arg6[%275, %c0_90, %c0_91] : memref<4x8x128xf32, #tpu.memory_space<vmem>>, vector<1x8x128xf32>
    %277 = vector.shape_cast %276 : vector<1x8x128xf32> to vector<8x128xf32>
    %278 = vector.shape_cast %274 : vector<8x128xf32> to vector<1x8x128xf32>
    tpu.vector_store %arg6[%275, %c0_90, %c0_91], %278 {strides = array<i32>} : memref<4x8x128xf32, #tpu.memory_space<vmem>>, vector<1x8x128xf32>,
    %c4_i32 = arith.constant 4 : i32
    %c0_92 = arith.constant 0 : index
    %c0_93 = arith.constant 0 : index
    %279 = vector.load %arg9[%c0_92, %c0_93] : memref<8x128xf32, #tpu.memory_space<vmem>>, vector<8x128xf32>
    tpu.vector_store %arg9[%c0_92, %c0_93], %241 {strides = array<i32>} : memref<8x128xf32, #tpu.memory_space<vmem>>, vector<8x128xf32>,
    %c0_94 = arith.constant 0 : index
    %c0_95 = arith.constant 0 : index
    %280 = vector.load %arg10[%c0_94, %c0_95] : memref<8x128xf32, #tpu.memory_space<vmem>>, vector<8x128xf32>
    tpu.vector_store %arg10[%c0_94, %c0_95], %239 {strides = array<i32>} : memref<8x128xf32, #tpu.memory_space<vmem>>, vector<8x128xf32>,
    %c0_96 = arith.constant 0 : index
    %c0_97 = arith.constant 0 : index
    %281 = vector.load %arg11[%c0_96, %c0_97] : memref<8x128xf32, #tpu.memory_space<vmem>>, vector<8x128xf32>
    tpu.vector_store %arg11[%c0_96, %c0_97], %274 {strides = array<i32>} : memref<8x128xf32, #tpu.memory_space<vmem>>, vector<8x128xf32>,
    %c0_98 = arith.constant 0 : index
    %c0_99 = arith.constant 0 : index
    %282 = vector.load %arg12[%c0_98, %c0_99] : memref<8x128xf32, #tpu.memory_space<vmem>>, vector<8x128xf32>
    tpu.vector_store %arg12[%c0_98, %c0_99], %272 {strides = array<i32>} : memref<8x128xf32, #tpu.memory_space<vmem>>, vector<8x128xf32>,
    %c1_i32_100 = arith.constant 1 : i32
    %283 = arith.cmpi eq, %arg0, %c1_i32_100 : i32
    %284 = arith.extui %283 : i1 to i32
    %c0_i32_101 = arith.constant 0 : i32
    %285 = arith.cmpi ne, %284, %c0_i32_101 : i32
    scf.if %285 {
      %c0_102 = arith.constant 0 : index
      %c0_103 = arith.constant 0 : index
      %c0_104 = arith.constant 0 : index
      %286 = vector.load %arg7[%c0_102, %c0_103, %c0_104] : memref<2x8x128xf32, #tpu.memory_space<vmem>>, vector<1x8x128xf32>
      %287 = vector.shape_cast %286 : vector<1x8x128xf32> to vector<8x128xf32>
      %288 = vector.shape_cast %241 : vector<8x128xf32> to vector<1x8x128xf32>
      tpu.vector_store %arg7[%c0_102, %c0_103, %c0_104], %288 {strides = array<i32>} : memref<2x8x128xf32, #tpu.memory_space<vmem>>, vector<1x8x128xf32>,
      %c1 = arith.constant 1 : index
      %c0_105 = arith.constant 0 : index
      %c0_106 = arith.constant 0 : index
      %289 = vector.load %arg7[%c1, %c0_105, %c0_106] : memref<2x8x128xf32, #tpu.memory_space<vmem>>, vector<1x8x128xf32>
      %290 = vector.shape_cast %289 : vector<1x8x128xf32> to vector<8x128xf32>
      %291 = vector.shape_cast %274 : vector<8x128xf32> to vector<1x8x128xf32>
      tpu.vector_store %arg7[%c1, %c0_105, %c0_106], %291 {strides = array<i32>} : memref<2x8x128xf32, #tpu.memory_space<vmem>>, vector<1x8x128xf32>,
      %c0_107 = arith.constant 0 : index
      %c0_108 = arith.constant 0 : index
      %c0_109 = arith.constant 0 : index
      %292 = vector.load %arg8[%c0_107, %c0_108, %c0_109] : memref<2x8x128xf32, #tpu.memory_space<vmem>>, vector<1x8x128xf32>
      %293 = vector.shape_cast %292 : vector<1x8x128xf32> to vector<8x128xf32>
      %294 = vector.shape_cast %239 : vector<8x128xf32> to vector<1x8x128xf32>
      tpu.vector_store %arg8[%c0_107, %c0_108, %c0_109], %294 {strides = array<i32>} : memref<2x8x128xf32, #tpu.memory_space<vmem>>, vector<1x8x128xf32>,
      %c1_110 = arith.constant 1 : index
      %c0_111 = arith.constant 0 : index
      %c0_112 = arith.constant 0 : index
      %295 = vector.load %arg8[%c1_110, %c0_111, %c0_112] : memref<2x8x128xf32, #tpu.memory_space<vmem>>, vector<1x8x128xf32>
      %296 = vector.shape_cast %295 : vector<1x8x128xf32> to vector<8x128xf32>
      %297 = vector.shape_cast %272 : vector<8x128xf32> to vector<1x8x128xf32>
      tpu.vector_store %arg8[%c1_110, %c0_111, %c0_112], %297 {strides = array<i32>} : memref<2x8x128xf32, #tpu.memory_space<vmem>>, vector<1x8x128xf32>,
    } else {
    }
    return
  }
  func.func @transform_0(%arg0: i32) -> (i32, i32, i32) {
    %c0_i32 = arith.constant 0 : i32
    %c0_i32_0 = arith.constant 0 : i32
    %c0_i32_1 = arith.constant 0 : i32
    return %arg0, %c0_i32, %c0_i32_0 : i32, i32, i32
  }
  func.func @transform_1(%arg0: i32) -> (i32, i32) {
    %c0_i32 = arith.constant 0 : i32
    %c0_i32_0 = arith.constant 0 : i32
    %c0_i32_1 = arith.constant 0 : i32
    return %c0_i32, %c0_i32_0 : i32, i32
  }
  func.func @transform_2(%arg0: i32) -> (i32, i32) {
    %c0_i32 = arith.constant 0 : i32
    %c0_i32_0 = arith.constant 0 : i32
    %c0_i32_1 = arith.constant 0 : i32
    return %c0_i32, %c0_i32_0 : i32, i32
  }
  func.func @transform_3(%arg0: i32) -> (i32, i32) {
    %c0_i32 = arith.constant 0 : i32
    %c0_i32_0 = arith.constant 0 : i32
    %c0_i32_1 = arith.constant 0 : i32
    return %c0_i32, %c0_i32_0 : i32, i32
  }
  func.func @transform_4(%arg0: i32) -> (i32, i32) {
    %c0_i32 = arith.constant 0 : i32
    %c0_i32_0 = arith.constant 0 : i32
    %c0_i32_1 = arith.constant 0 : i32
    return %c0_i32, %c0_i32_0 : i32, i32
  }
  func.func @transform_5(%arg0: i32) -> (i32, i32, i32) {
    %c0_i32 = arith.constant 0 : i32
    %c0_i32_0 = arith.constant 0 : i32
    %c0_i32_1 = arith.constant 0 : i32
    return %arg0, %c0_i32, %c0_i32_0 : i32, i32, i32
  }
  func.func @transform_6(%arg0: i32) -> (i32, i32, i32) {
    %c0_i32 = arith.constant 0 : i32
    %c0_i32_0 = arith.constant 0 : i32
    %c0_i32_1 = arith.constant 0 : i32
    %c0_i32_2 = arith.constant 0 : i32
    return %c0_i32, %c0_i32_0, %c0_i32_1 : i32, i32, i32
  }
  func.func @transform_7(%arg0: i32) -> (i32, i32, i32) {
    %c0_i32 = arith.constant 0 : i32
    %c0_i32_0 = arith.constant 0 : i32
    %c0_i32_1 = arith.constant 0 : i32
    %c0_i32_2 = arith.constant 0 : i32
    return %c0_i32, %c0_i32_0, %c0_i32_1 : i32, i32, i32
  }
}

</mosaic_0001>

<llo_original>
// kernel: encoder_forward.1
$region0: #{encoder_forward.1}
  #allocation0 [shape = 'u32[]', space=smem, size = 0x4, offset = 0x4, fixed_abs, tag = 'smem constant byte address 0x4 - core index']
  #allocation1 [shape = 'u32[144,128]{1,0:T(1,128)}', space=vmem, size = 0x12000, scoped, tag = 'internal scratch']
  #allocation2 [shape = 'f32[8,128]{1,0:T(8,128)}', space=vmem, size = 0x1000, scoped, tag = 'scratch operand']
  #allocation3 [shape = 'f32[8,128]{1,0:T(8,128)}', space=vmem, size = 0x1000, scoped, tag = 'scratch operand']
  #allocation4 [shape = 'f32[8,128]{1,0:T(8,128)}', space=vmem, size = 0x1000, scoped, tag = 'scratch operand']
  #allocation5 [shape = 'f32[8,128]{1,0:T(8,128)}', space=vmem, size = 0x1000, scoped, tag = 'scratch operand']
  %s0 = inlined_call_operand.vmem [shape: f32[8,8,512], index: 0, kind: input, shape index: {}]
  %s1 = inlined_call_operand.vmem [shape: f32[128,512], index: 1, kind: input, shape index: {}]
  %s2 = inlined_call_operand.vmem [shape: f32[128,512], index: 2, kind: input, shape index: {}]
  %s3 = inlined_call_operand.vmem [shape: f32[128,512], index: 3, kind: input, shape index: {}]
  %s4 = inlined_call_operand.vmem [shape: f32[1,512], index: 4, kind: input, shape index: {}]
  %s5 = inlined_call_operand.vmem [shape: f32[8,8,128], index: 5, kind: output, shape index: {0}]
  %s6 = inlined_call_operand.vmem [shape: f32[2,8,128], index: 6, kind: output, shape index: {1}]
  %s7 = inlined_call_operand.vmem [shape: f32[2,8,128], index: 7, kind: output, shape index: {2}]
  %8 = xla_tuple %s5, %s6, %s7
  %s9 = sld [smem:[#allocation0]]
  $region77: #{encoder_forward.1} parent=0
    _
  %s11 = ssub.s32 1, %s9
  %s12 = scalar_select 0, %s11, %s9
  loop: start=0, step=1, limit=4
  $region2: #{encoder_forward.1} parent=0 // loop_pre_header
    _
  $region3: #{encoder_forward.1} parent=0 // loop_header
    %s14 = sphi 0, %s18
    %p15 = scmp.ge.s32.totalorder %s14, 4
    %s24 = sphi 0, %s26
    %s27 = sphi 0, %s24
    %s28 = sphi 0, %s27
    %s44 = sphi 0, %s28
    %s48 = sphi 0, %s48
    %s50 = sphi 0, %s48
    %s51 = sphi 0, %s50
    %s65 = sphi 0, %s51
    %s69 = sphi 0, %s69
    %s71 = sphi 0, %s69
    %s72 = sphi 0, %s71
    %s86 = sphi 0, %s72
    %s90 = sphi 0, %s90
    %s92 = sphi 0, %s90
    %s93 = sphi 0, %s92
    %s107 = sphi 0, %s93
    %s111 = sphi 0, %s111
    %s113 = sphi 0, %s111
    %s114 = sphi 0, %s113
    %s128 = sphi 0, %s114
    %s134 = sphi 0, %s136
    %s137 = sphi 0, %s134
    %s138 = sphi 0, %s137
    %s154 = sphi 0, %s138
    %s158 = sphi 0, %s158
    %s160 = sphi 0, %s158
    %s161 = sphi 0, %s160
    %s175 = sphi 0, %s161
    %s179 = sphi 0, %s179
    %s181 = sphi 0, %s179
    %s182 = sphi 0, %s181
    %s196 = sphi 0, %s182
  $region4: #{encoder_forward.1} parent=0 // loop_header_branch
    %17 = sbr.rel (%p15) target = $region8
  $region5: #{encoder_forward.1} parent=0 // loop_body
    %s19 = ssub.s32 %s14, 1
    %s20 = ssub.s32 %s14, 2
    %s21 = sadd.s32 %s14, 1
    %s22 = ssub.s32 %s14, %s21
    %p23 = scmp.eq.s32.totalorder %s22, 0
    %s25 = sadd.s32 %s24, 1
    %s26 = scalar_select %p23, %s24, %s25
    %p29 = pneg %p23
    %p30 = scmp.eq.s32.totalorder %s14, 1
    %p31 = por %p29, %p30
    %p32 = scmp.ne.s32.totalorder %s24, %s27
    %p33 = scmp.eq.s32.totalorder %s14, 0
    %p34 = por %p32, %p33
    %p35 = scmp.ne.s32.totalorder %s24, %s27
    %p36 = scmp.eq.s32.totalorder %s19, 1
    %p37 = por %p35, %p36
    %p38 = scmp.ne.s32.totalorder %s27, %s28
    %p39 = scmp.eq.s32.totalorder %s19, 0
    %p40 = por %p38, %p39
    %p41 = scmp.ne.s32.totalorder %s27, %s28
    %p42 = scmp.eq.s32.totalorder %s20, 1
    %p43 = por %p41, %p42
    %p45 = scmp.ne.s32.totalorder %s28, %s44
    %p46 = scmp.eq.s32.totalorder %s20, 0
    %p47 = por %p45, %p46
    %s49 = sadd.s32 %s48, 1
    %p52 = scmp.eq.s32.totalorder %s14, 1
    %p53 = scmp.ne.s32.totalorder %s48, %s50
    %p54 = scmp.eq.s32.totalorder %s14, 0
    %p55 = por %p53, %p54
    %p56 = scmp.ne.s32.totalorder %s48, %s50
    %p57 = scmp.eq.s32.totalorder %s19, 1
    %p58 = por %p56, %p57
    %p59 = scmp.ne.s32.totalorder %s50, %s51
    %p60 = scmp.eq.s32.totalorder %s19, 0
    %p61 = por %p59, %p60
    %p62 = scmp.ne.s32.totalorder %s50, %s51
    %p63 = scmp.eq.s32.totalorder %s20, 1
    %p64 = por %p62, %p63
    %p66 = scmp.ne.s32.totalorder %s51, %s65
    %p67 = scmp.eq.s32.totalorder %s20, 0
    %p68 = por %p66, %p67
    %s70 = sadd.s32 %s69, 1
    %p73 = scmp.eq.s32.totalorder %s14, 1
    %p74 = scmp.ne.s32.totalorder %s69, %s71
    %p75 = scmp.eq.s32.totalorder %s14, 0
    %p76 = por %p74, %p75
    %p77 = scmp.ne.s32.totalorder %s69, %s71
    %p78 = scmp.eq.s32.totalorder %s19, 1
    %p79 = por %p77, %p78
    %p80 = scmp.ne.s32.totalorder %s71, %s72
    %p81 = scmp.eq.s32.totalorder %s19, 0
    %p82 = por %p80, %p81
    %p83 = scmp.ne.s32.totalorder %s71, %s72
    %p84 = scmp.eq.s32.totalorder %s20, 1
    %p85 = por %p83, %p84
    %p87 = scmp.ne.s32.totalorder %s72, %s86
    %p88 = scmp.eq.s32.totalorder %s20, 0
    %p89 = por %p87, %p88
    %s91 = sadd.s32 %s90, 1
    %p94 = scmp.eq.s32.totalorder %s14, 1
    %p95 = scmp.ne.s32.totalorder %s90, %s92
    %p96 = scmp.eq.s32.totalorder %s14, 0
    %p97 = por %p95, %p96
    %p98 = scmp.ne.s32.totalorder %s90, %s92
    %p99 = scmp.eq.s32.totalorder %s19, 1
    %p100 = por %p98, %p99
    %p101 = scmp.ne.s32.totalorder %s92, %s93
    %p102 = scmp.eq.s32.totalorder %s19, 0
    %p103 = por %p101, %p102
    %p104 = scmp.ne.s32.totalorder %s92, %s93
    %p105 = scmp.eq.s32.totalorder %s20, 1
    %p106 = por %p104, %p105
    %p108 = scmp.ne.s32.totalorder %s93, %s107
    %p109 = scmp.eq.s32.totalorder %s20, 0
    %p110 = por %p108, %p109
    %s112 = sadd.s32 %s111, 1
    %p115 = scmp.eq.s32.totalorder %s14, 1
    %p116 = scmp.ne.s32.totalorder %s111, %s113
    %p117 = scmp.eq.s32.totalorder %s14, 0
    %p118 = por %p116, %p117
    %p119 = scmp.ne.s32.totalorder %s111, %s113
    %p120 = scmp.eq.s32.totalorder %s19, 1
    %p121 = por %p119, %p120
    %p122 = scmp.ne.s32.totalorder %s113, %s114
    %p123 = scmp.eq.s32.totalorder %s19, 0
    %p124 = por %p122, %p123
    %p125 = scmp.ne.s32.totalorder %s113, %s114
    %p126 = scmp.eq.s32.totalorder %s20, 1
    %p127 = por %p125, %p126
    %p129 = scmp.ne.s32.totalorder %s114, %s128
    %p130 = scmp.eq.s32.totalorder %s20, 0
    %p131 = por %p129, %p130
    %s132 = ssub.s32 %s14, %s21
    %p133 = scmp.eq.s32.totalorder %s132, 0
    %s135 = sadd.s32 %s134, 1
    %s136 = scalar_select %p133, %s134, %s135
    %p139 = pneg %p133
    %p140 = scmp.eq.s32.totalorder %s14, 1
    %p141 = por %p139, %p140
    %p142 = scmp.ne.s32.totalorder %s134, %s137
    %p143 = scmp.eq.s32.totalorder %s14, 0
    %p144 = por %p142, %p143
    %p145 = scmp.ne.s32.totalorder %s134, %s137
    %p146 = scmp.eq.s32.totalorder %s19, 1
    %p147 = por %p145, %p146
    %p148 = scmp.ne.s32.totalorder %s137, %s138
    %p149 = scmp.eq.s32.totalorder %s19, 0
    %p150 = por %p148, %p149
    %p151 = scmp.ne.s32.totalorder %s137, %s138
    %p152 = scmp.eq.s32.totalorder %s20, 1
    %p153 = por %p151, %p152
    %p155 = scmp.ne.s32.totalorder %s138, %s154
    %p156 = scmp.eq.s32.totalorder %s20, 0
    %p157 = por %p155, %p156
    %s159 = sadd.s32 %s158, 1
    %p162 = scmp.eq.s32.totalorder %s14, 1
    %p163 = scmp.ne.s32.totalorder %s158, %s160
    %p164 = scmp.eq.s32.totalorder %s14, 0
    %p165 = por %p163, %p164
    %p166 = scmp.ne.s32.totalorder %s158, %s160
    %p167 = scmp.eq.s32.totalorder %s19, 1
    %p168 = por %p166, %p167
    %p169 = scmp.ne.s32.totalorder %s160, %s161
    %p170 = scmp.eq.s32.totalorder %s19, 0
    %p171 = por %p169, %p170
    %p172 = scmp.ne.s32.totalorder %s160, %s161
    %p173 = scmp.eq.s32.totalorder %s20, 1
    %p174 = por %p172, %p173
    %p176 = scmp.ne.s32.totalorder %s161, %s175
    %p177 = scmp.eq.s32.totalorder %s20, 0
    %p178 = por %p176, %p177
    %s180 = sadd.s32 %s179, 1
    %p183 = scmp.eq.s32.totalorder %s14, 1
    %p184 = scmp.ne.s32.totalorder %s179, %s181
    %p185 = scmp.eq.s32.totalorder %s14, 0
    %p186 = por %p184, %p185
    %p187 = scmp.ne.s32.totalorder %s179, %s181
    %p188 = scmp.eq.s32.totalorder %s19, 1
    %p189 = por %p187, %p188
    %p190 = scmp.ne.s32.totalorder %s181, %s182
    %p191 = scmp.eq.s32.totalorder %s19, 0
    %p192 = por %p190, %p191
    %p193 = scmp.ne.s32.totalorder %s181, %s182
    %p194 = scmp.eq.s32.totalorder %s20, 1
    %p195 = por %p193, %p194
    %p197 = scmp.ne.s32.totalorder %s182, %s196
    %p198 = scmp.eq.s32.totalorder %s20, 0
    %p199 = por %p197, %p198
    %p200 = scmp.le.s32.totalorder 1, %s14
    %p201 = scmp.lt.s32.totalorder %s14, 3
    %p202 = pnand %p200, %p201
    %p203 = pneg %p202
    // Predicated region
    $region9: #{encoder_forward.1} parent=5 // pred_check
      _
    $region10: #{encoder_forward.1} parent=5 // pred_check_branch
      %205 = sbr.rel (%p202) target = $region12
    $region11: #{encoder_forward.1} parent=5 // pred_region
      %s206 = ssub.s32 %s14, 1
      // Predicated region
      $region13: #{encoder_forward.1} parent=11 // pred_check
        %p207 = pneg %p61
      $region14: #{encoder_forward.1} parent=11 // pred_check_branch
        %209 = sbr.rel (%p207) target = $region16
      $region15: #{encoder_forward.1} parent=11 // pred_region
        _
      $region16: #{encoder_forward.1} parent=11 // pred_fallthru
        _
      // Predicated region
      $region17: #{encoder_forward.1} parent=11 // pred_check
        %p210 = pneg %p82
      $region18: #{encoder_forward.1} parent=11 // pred_check_branch
        %212 = sbr.rel (%p210) target = $region20
      $region19: #{encoder_forward.1} parent=11 // pred_region
        _
      $region20: #{encoder_forward.1} parent=11 // pred_fallthru
        _
      // Predicated region
      $region21: #{encoder_forward.1} parent=11 // pred_check
        %p213 = pneg %p103
      $region22: #{encoder_forward.1} parent=11 // pred_check_branch
        %215 = sbr.rel (%p213) target = $region24
      $region23: #{encoder_forward.1} parent=11 // pred_region
        _
      $region24: #{encoder_forward.1} parent=11 // pred_fallthru
        _
      // Predicated region
      $region25: #{encoder_forward.1} parent=11 // pred_check
        %p216 = pneg %p124
      $region26: #{encoder_forward.1} parent=11 // pred_check_branch
        %218 = sbr.rel (%p216) target = $region28
      $region27: #{encoder_forward.1} parent=11 // pred_region
        _
      $region28: #{encoder_forward.1} parent=11 // pred_fallthru
        _
    $region12: #{encoder_forward.1} parent=5 // pred_fallthru
      _
    %p219 = scmp.lt.s32.totalorder %s14, 2
    // Predicated region
    $region29: #{encoder_forward.1} parent=5 // pred_check
      %p220 = pneg %p219
    $region30: #{encoder_forward.1} parent=5 // pred_check_branch
      %222 = sbr.rel (%p220) target = $region32
    $region31: #{encoder_forward.1} parent=5 // pred_region
      // Predicated region
      $region33: #{encoder_forward.1} parent=31 // pred_check
        %p223 = pneg %p34
      $region34: #{encoder_forward.1} parent=31 // pred_check_branch
        %225 = sbr.rel (%p223) target = $region36
      $region35: #{encoder_forward.1} parent=31 // pred_region
        %s226 = smul.u32 4, %s14
        %p227 = scmp.lt.s32.totalorder %s226, 7
        %s228 = scalar_select %p227, %s226, 7
        %s229 = smul.addr %s228, 4
        %s230 = smul.addr %s229, 8
        %s231 = scalar_lea.vmem %s0, %s230
        %s232 = smul.u32 4, %s14
      $region36: #{encoder_forward.1} parent=31 // pred_fallthru
        _
    $region32: #{encoder_forward.1} parent=5 // pred_fallthru
      _
    %p233 = scmp.le.s32.totalorder 1, %s14
    %p234 = scmp.lt.s32.totalorder %s14, 3
    %p235 = pnand %p233, %p234
    %p236 = pneg %p235
    // Predicated region
    $region37: #{encoder_forward.1} parent=5 // pred_check
      _
    $region38: #{encoder_forward.1} parent=5 // pred_check_branch
      %238 = sbr.rel (%p235) target = $region40
    $region39: #{encoder_forward.1} parent=5 // pred_region
      %s239 = ssub.s32 %s14, 1
      %s240 = smul.u32 4, %s19
      %p241 = scmp.lt.s32.totalorder %s240, 7
      %s242 = scalar_select %p241, %s240, 7
      %s243 = smul.addr %s242, 4
      %s244 = smul.addr %s243, 8
      %s245 = scalar_lea.vmem %s0, %s244
      %p246 = pneg %p40
      %p247 = pneg %p37
      %p248 = pneg %p61
      %p249 = pneg %p58
      %p250 = pneg %p82
      %p251 = pneg %p79
      %p252 = pneg %p103
      %p253 = pneg %p100
      %p254 = pneg %p124
      %p255 = pneg %p121
      %p256 = pneg %p150
      %p257 = pneg %p147
      %s258 = smul.u32 4, %s19
      %p259 = scmp.lt.s32.totalorder %s258, 7
      %s260 = scalar_select %p259, %s258, 7
      %s261 = smul.addr %s260, 8
      %s262 = scalar_lea.vmem %s5, %s261
      %p263 = pneg %p171
      %p264 = pneg %p168
      %p265 = pneg %p192
      %p266 = pneg %p189
      %s267 = smul.u32 4, %s19
      %p268 = scmp.lt.s32.totalorder %s267, 7
      %s269 = scalar_select %p268, %s267, 7
      %s270 = smul.addr %s269, 4
      %s271 = smul.addr %s270, 8
      %s272 = scalar_lea.vmem %s0, %s271
      %s273 = smul.u32 4, %s19
      %s274 = smul.u32 4, %s19
      %p275 = scmp.lt.s32.totalorder %s274, 7
      %s276 = scalar_select %p275, %s274, 7
      %s277 = smul.addr %s276, 8
      %s278 = scalar_lea.vmem %s5, %s277
      %s279 = smul.u32 4, %s19
      %p280 = scmp.eq.s32.totalorder %s19, 0
      // Predicated region
      $region41: #{encoder_forward.1} parent=39 // pred_check
        %p281 = pneg %p280
      $region42: #{encoder_forward.1} parent=39 // pred_check_branch
        %283 = sbr.rel (%p281) target = $region44
      $region43: #{encoder_forward.1} parent=39 // pred_region
        %284 = vst [vmem:[#allocation2] sm:$0xff] 0.0
        %285 = vst [vmem:[#allocation3] sm:$0xff] 0.0
        %286 = vst [vmem:[#allocation4] sm:$0xff] 0.0
        %287 = vst [vmem:[#allocation5] sm:$0xff] 0.0
      $region44: #{encoder_forward.1} parent=39 // pred_fallthru
        _
      %v288 = vld [vmem:[#allocation2] sm:$0xff]
      %v289 = vld [vmem:[#allocation3] sm:$0xff]
      %v290 = vld [vmem:[#allocation4] sm:$0xff]
      %v291 = vld [vmem:[#allocation5] sm:$0xff]
      %v292 = vld [vmem:[%s272] sm:$0xff]
      %v293 = vld [vmem:[%s272 + $0x8] sm:$0xff]
      %v294 = vld [vmem:[%s272 + $0x10] sm:$0xff]
      %v295 = vld [vmem:[%s272 + $0x18] sm:$0xff]
      %v296 = vld [vmem:[%s1] sm:$0xff]
      %v297 = vld [vmem:[%s1 + $0x8] sm:$0xff]
      %v298 = vld [vmem:[%s1 + $0x10] sm:$0xff]
      %v299 = vld [vmem:[%s1 + $0x18] sm:$0xff]
      %v300 = vld [vmem:[%s1 + $0x20] sm:$0xff]
      %v301 = vld [vmem:[%s1 + $0x28] sm:$0xff]
      %v302 = vld [vmem:[%s1 + $0x30] sm:$0xff]
      %v303 = vld [vmem:[%s1 + $0x38] sm:$0xff]
      %v304 = vld [vmem:[%s1 + $0x40] sm:$0xff]
      %v305 = vld [vmem:[%s1 + $0x48] sm:$0xff]
      %v306 = vld [vmem:[%s1 + $0x50] sm:$0xff]
      %v307 = vld [vmem:[%s1 + $0x58] sm:$0xff]
      %v308 = vld [vmem:[%s1 + $0x60] sm:$0xff]
      %v309 = vld [vmem:[%s1 + $0x68] sm:$0xff]
      %v310 = vld [vmem:[%s1 + $0x70] sm:$0xff]
      %v311 = vld [vmem:[%s1 + $0x78] sm:$0xff]
      %v312 = vld [vmem:[%s1 + $0x80] sm:$0xff]
      %v313 = vld [vmem:[%s1 + $0x88] sm:$0xff]
      %v314 = vld [vmem:[%s1 + $0x90] sm:$0xff]
      %v315 = vld [vmem:[%s1 + $0x98] sm:$0xff]
      %v316 = vld [vmem:[%s1 + $0xa0] sm:$0xff]
      %v317 = vld [vmem:[%s1 + $0xa8] sm:$0xff]
      %v318 = vld [vmem:[%s1 + $0xb0] sm:$0xff]
      %v319 = vld [vmem:[%s1 + $0xb8] sm:$0xff]
      %v320 = vld [vmem:[%s1 + $0xc0] sm:$0xff]
      %v321 = vld [vmem:[%s1 + $0xc8] sm:$0xff]
      %v322 = vld [vmem:[%s1 + $0xd0] sm:$0xff]
      %v323 = vld [vmem:[%s1 + $0xd8] sm:$0xff]
      %v324 = vld [vmem:[%s1 + $0xe0] sm:$0xff]
      %v325 = vld [vmem:[%s1 + $0xe8] sm:$0xff]
      %v326 = vld [vmem:[%s1 + $0xf0] sm:$0xff]
      %v327 = vld [vmem:[%s1 + $0xf8] sm:$0xff]
      %v328 = vld [vmem:[%s1 + $0x100] sm:$0xff]
      %v329 = vld [vmem:[%s1 + $0x108] sm:$0xff]
      %v330 = vld [vmem:[%s1 + $0x110] sm:$0xff]
      %v331 = vld [vmem:[%s1 + $0x118] sm:$0xff]
      %v332 = vld [vmem:[%s1 + $0x120] sm:$0xff]
      %v333 = vld [vmem:[%s1 + $0x128] sm:$0xff]
      %v334 = vld [vmem:[%s1 + $0x130] sm:$0xff]
      %v335 = vld [vmem:[%s1 + $0x138] sm:$0xff]
      %v336 = vld [vmem:[%s1 + $0x140] sm:$0xff]
      %v337 = vld [vmem:[%s1 + $0x148] sm:$0xff]
      %v338 = vld [vmem:[%s1 + $0x150] sm:$0xff]
      %v339 = vld [vmem:[%s1 + $0x158] sm:$0xff]
      %v340 = vld [vmem:[%s1 + $0x160] sm:$0xff]
      %v341 = vld [vmem:[%s1 + $0x168] sm:$0xff]
      %v342 = vld [vmem:[%s1 + $0x170] sm:$0xff]
      %v343 = vld [vmem:[%s1 + $0x178] sm:$0xff]
      %v344 = vld [vmem:[%s1 + $0x180] sm:$0xff]
      %v345 = vld [vmem:[%s1 + $0x188] sm:$0xff]
      %v346 = vld [vmem:[%s1 + $0x190] sm:$0xff]
      %v347 = vld [vmem:[%s1 + $0x198] sm:$0xff]
      %v348 = vld [vmem:[%s1 + $0x1a0] sm:$0xff]
      %v349 = vld [vmem:[%s1 + $0x1a8] sm:$0xff]
      %v350 = vld [vmem:[%s1 + $0x1b0] sm:$0xff]
      %v351 = vld [vmem:[%s1 + $0x1b8] sm:$0xff]
      %v352 = vld [vmem:[%s1 + $0x1c0] sm:$0xff]
      %v353 = vld [vmem:[%s1 + $0x1c8] sm:$0xff]
      %v354 = vld [vmem:[%s1 + $0x1d0] sm:$0xff]
      %v355 = vld [vmem:[%s1 + $0x1d8] sm:$0xff]
      %v356 = vld [vmem:[%s1 + $0x1e0] sm:$0xff]
      %v357 = vld [vmem:[%s1 + $0x1e8] sm:$0xff]
      %v358 = vld [vmem:[%s1 + $0x1f0] sm:$0xff]
      %v359 = vld [vmem:[%s1 + $0x1f8] sm:$0xff]
      %360 = vmatprep.subr.mxu0 %v297
      %361 = vmatpush1.msra.mxu0 %v296
      %362 = vmatprep.subr.mxu0 %v301
      %363 = vmatpush1.msra.mxu0 %v300
      %364 = vmatprep.subr.mxu0 %v305
      %365 = vmatpush1.msra.mxu0 %v304
      %366 = vmatprep.subr.mxu0 %v309
      %367 = vmatpush1.msra.mxu0 %v308
      %368 = vmatprep.subr.mxu0 %v313
      %369 = vmatpush1.msra.mxu0 %v312
      %370 = vmatprep.subr.mxu0 %v317
      %371 = vmatpush1.msra.mxu0 %v316
      %372 = vmatprep.subr.mxu0 %v321
      %373 = vmatpush1.msra.mxu0 %v320
      %374 = vmatprep.subr.mxu0 %v325
      %375 = vmatpush1.msra.mxu0 %v324
      %376 = vmatprep.subr.mxu0 %v329
      %377 = vmatpush1.msra.mxu0 %v328
      %378 = vmatprep.subr.mxu0 %v333
      %379 = vmatpush1.msra.mxu0 %v332
      %380 = vmatprep.subr.mxu0 %v337
      %381 = vmatpush1.msra.mxu0 %v336
      %382 = vmatprep.subr.mxu0 %v341
      %383 = vmatpush1.msra.mxu0 %v340
      %384 = vmatprep.subr.mxu0 %v345
      %385 = vmatpush1.msra.mxu0 %v344
      %386 = vmatprep.subr.mxu0 %v349
      %387 = vmatpush1.msra.mxu0 %v348
      %388 = vmatprep.subr.mxu0 %v353
      %389 = vmatpush1.msra.mxu0 %v352
      %390 = vmatprep.subr.mxu0 %v357
      %391 = vmatpush1.msra.mxu0 %v356
      %392 = vmatprep.subr.mxu0 0.0
      %393 = vmatpush1.msra.mxu0 0.0
      %394 = vmatprep.subr.mxu0 0.0
      %395 = vmatpush1.msra.mxu0 0.0
      %396 = vmatprep.subr.mxu0 0.0
      %397 = vmatpush1.msra.mxu0 0.0
      %398 = vmatprep.subr.mxu0 0.0
      %399 = vmatpush1.msra.mxu0 0.0
      %400 = vmatprep.subr.mxu0 0.0
      %401 = vmatpush1.msra.mxu0 0.0
      %402 = vmatprep.subr.mxu0 0.0
      %403 = vmatpush1.msra.mxu0 0.0
      %404 = vmatprep.subr.mxu0 0.0
      %405 = vmatpush1.msra.mxu0 0.0
      %406 = vmatprep.subr.mxu0 0.0
      %407 = vmatpush1.msra.mxu0 0.0
      %408 = vmatprep.subr.mxu0 0.0
      %409 = vmatpush1.msra.mxu0 0.0
      %410 = vmatprep.subr.mxu0 0.0
      %411 = vmatpush1.msra.mxu0 0.0
      %412 = vmatprep.subr.mxu0 0.0
      %413 = vmatpush1.msra.mxu0 0.0
      %414 = vmatprep.subr.mxu0 0.0
      %415 = vmatpush1.msra.mxu0 0.0
      %416 = vmatprep.subr.mxu0 0.0
      %417 = vmatpush1.msra.mxu0 0.0
      %418 = vmatprep.subr.mxu0 0.0
      %419 = vmatpush1.msra.mxu0 0.0
      %420 = vmatprep.subr.mxu0 0.0
      %421 = vmatpush1.msra.mxu0 0.0
      %422 = vmatprep.subr.mxu0 0.0
      %423 = vmatpush1.msra.mxu0 0.0
      %424 = vmatprep.mubr.f32.mxu0 0.0
      %425 = vmatmul.mubr.f32.gmra.mrb[0].mxu0 %v288
      %v426 = vpop.f32.mrb[0].mxu0
      %v427 = vadd.f32 0.0, %v426
      %v428 = vpop.f32.mrb[0].mxu0
      %v429 = vadd.f32 0.0, %v428
      %430 = vdwg.mxu0
      %431 = vmatprep.subr.mxu0 %v299
      %432 = vmatpush1.msra.mxu0 %v298
      %433 = vmatprep.subr.mxu0 %v303
      %434 = vmatpush1.msra.mxu0 %v302
      %435 = vmatprep.subr.mxu0 %v307
      %436 = vmatpush1.msra.mxu0 %v306
      %437 = vmatprep.subr.mxu0 %v311
      %438 = vmatpush1.msra.mxu0 %v310
      %439 = vmatprep.subr.mxu0 %v315
      %440 = vmatpush1.msra.mxu0 %v314
      %441 = vmatprep.subr.mxu0 %v319
      %442 = vmatpush1.msra.mxu0 %v318
      %443 = vmatprep.subr.mxu0 %v323
      %444 = vmatpush1.msra.mxu0 %v322
      %445 = vmatprep.subr.mxu0 %v327
      %446 = vmatpush1.msra.mxu0 %v326
      %447 = vmatprep.subr.mxu0 %v331
      %448 = vmatpush1.msra.mxu0 %v330
      %449 = vmatprep.subr.mxu0 %v335
      %450 = vmatpush1.msra.mxu0 %v334
      %451 = vmatprep.subr.mxu0 %v339
      %452 = vmatpush1.msra.mxu0 %v338
      %453 = vmatprep.subr.mxu0 %v343
      %454 = vmatpush1.msra.mxu0 %v342
      %455 = vmatprep.subr.mxu0 %v347
      %456 = vmatpush1.msra.mxu0 %v346
      %457 = vmatprep.subr.mxu0 %v351
      %458 = vmatpush1.msra.mxu0 %v350
      %459 = vmatprep.subr.mxu0 %v355
      %460 = vmatpush1.msra.mxu0 %v354
      %461 = vmatprep.subr.mxu0 %v359
      %462 = vmatpush1.msra.mxu0 %v358
      %463 = vmatprep.subr.mxu0 0.0
      %464 = vmatpush1.msra.mxu0 0.0
      %465 = vmatprep.subr.mxu0 0.0
      %466 = vmatpush1.msra.mxu0 0.0
      %467 = vmatprep.subr.mxu0 0.0
      %468 = vmatpush1.msra.mxu0 0.0
      %469 = vmatprep.subr.mxu0 0.0
      %470 = vmatpush1.msra.mxu0 0.0
      %471 = vmatprep.subr.mxu0 0.0
      %472 = vmatpush1.msra.mxu0 0.0
      %473 = vmatprep.subr.mxu0 0.0
      %474 = vmatpush1.msra.mxu0 0.0
      %475 = vmatprep.subr.mxu0 0.0
      %476 = vmatpush1.msra.mxu0 0.0
      %477 = vmatprep.subr.mxu0 0.0
      %478 = vmatpush1.msra.mxu0 0.0
      %479 = vmatprep.subr.mxu0 0.0
      %480 = vmatpush1.msra.mxu0 0.0
      %481 = vmatprep.subr.mxu0 0.0
      %482 = vmatpush1.msra.mxu0 0.0
      %483 = vmatprep.subr.mxu0 0.0
      %484 = vmatpush1.msra.mxu0 0.0
      %485 = vmatprep.subr.mxu0 0.0
      %486 = vmatpush1.msra.mxu0 0.0
      %487 = vmatprep.subr.mxu0 0.0
      %488 = vmatpush1.msra.mxu0 0.0
      %489 = vmatprep.subr.mxu0 0.0
      %490 = vmatpush1.msra.mxu0 0.0
      %491 = vmatprep.subr.mxu0 0.0
      %492 = vmatpush1.msra.mxu0 0.0
      %493 = vmatprep.subr.mxu0 0.0
      %494 = vmatpush1.msra.mxu0 0.0
      %495 = vmatprep.mubr.f32.mxu0 0.0
      %496 = vmatmul.mubr.f32.gmra.mrb[0].mxu0 %v288
      %v497 = vpop.f32.mrb[0].mxu0
      %v498 = vadd.f32 0.0, %v497
      %v499 = vpop.f32.mrb[0].mxu0
      %v500 = vadd.f32 0.0, %v499
      %501 = vdwg.mxu0
      %v502 = vadd.f32 %v292, %v427
      %v503 = vadd.f32 %v293, %v429
      %v504 = vadd.f32 %v294, %v498
      %v505 = vadd.f32 %v295, %v500
      %v506 = vxor.u32 %v502, 2147483648
      %v507 = vmul.f32 %v506, 1.442695
      %v508 = vpow.pop %v507
      %v509 = vadd.f32 %v508, 1.0
      %v510 = vrcp.pop %v509
      %v511 = vmul.f32 1.0, %v510
      %v512 = vxor.u32 %v503, 2147483648
      %v513 = vmul.f32 %v512, 1.442695
      %v514 = vpow.pop %v513
      %v515 = vadd.f32 %v514, 1.0
      %v516 = vrcp.pop %v515
      %v517 = vmul.f32 1.0, %v516
      %v518 = vtanh.pop %v504
      %v519 = vxor.u32 %v505, 2147483648
      %v520 = vmul.f32 %v519, 1.442695
      %v521 = vpow.pop %v520
      %v522 = vadd.f32 %v521, 1.0
      %v523 = vrcp.pop %v522
      %v524 = vmul.f32 1.0, %v523
      %v525 = vmul.f32 %v517, %v289
      %v526 = vmul.f32 %v511, %v518
      %v527 = vadd.f32 %v525, %v526
      %v528 = vtanh.pop %v527
      %v529 = vmul.f32 %v524, %v528
      %v530 = vld [vmem:[%s2] sm:$0xff]
      %v531 = vld [vmem:[%s2 + $0x8] sm:$0xff]
      %v532 = vld [vmem:[%s2 + $0x10] sm:$0xff]
      %v533 = vld [vmem:[%s2 + $0x18] sm:$0xff]
      %v534 = vld [vmem:[%s2 + $0x20] sm:$0xff]
      %v535 = vld [vmem:[%s2 + $0x28] sm:$0xff]
      %v536 = vld [vmem:[%s2 + $0x30] sm:$0xff]
      %v537 = vld [vmem:[%s2 + $0x38] sm:$0xff]
      %v538 = vld [vmem:[%s2 + $0x40] sm:$0xff]
      %v539 = vld [vmem:[%s2 + $0x48] sm:$0xff]
      %v540 = vld [vmem:[%s2 + $0x50] sm:$0xff]
      %v541 = vld [vmem:[%s2 + $0x58] sm:$0xff]
      %v542 = vld [vmem:[%s2 + $0x60] sm:$0xff]
      %v543 = vld [vmem:[%s2 + $0x68] sm:$0xff]
      %v544 = vld [vmem:[%s2 + $0x70] sm:$0xff]
      %v545 = vld [vmem:[%s2 + $0x78] sm:$0xff]
      %v546 = vld [vmem:[%s2 + $0x80] sm:$0xff]
      %v547 = vld [vmem:[%s2 + $0x88] sm:$0xff]
      %v548 = vld [vmem:[%s2 + $0x90] sm:$0xff]
      %v549 = vld [vmem:[%s2 + $0x98] sm:$0xff]
      %v550 = vld [vmem:[%s2 + $0xa0] sm:$0xff]
      %v551 = vld [vmem:[%s2 + $0xa8] sm:$0xff]
      %v552 = vld [vmem:[%s2 + $0xb0] sm:$0xff]
      %v553 = vld [vmem:[%s2 + $0xb8] sm:$0xff]
      %v554 = vld [vmem:[%s2 + $0xc0] sm:$0xff]
      %v555 = vld [vmem:[%s2 + $0xc8] sm:$0xff]
      %v556 = vld [vmem:[%s2 + $0xd0] sm:$0xff]
      %v557 = vld [vmem:[%s2 + $0xd8] sm:$0xff]
      %v558 = vld [vmem:[%s2 + $0xe0] sm:$0xff]
      %v559 = vld [vmem:[%s2 + $0xe8] sm:$0xff]
      %v560 = vld [vmem:[%s2 + $0xf0] sm:$0xff]
      %v561 = vld [vmem:[%s2 + $0xf8] sm:$0xff]
      %v562 = vld [vmem:[%s2 + $0x100] sm:$0xff]
      %v563 = vld [vmem:[%s2 + $0x108] sm:$0xff]
      %v564 = vld [vmem:[%s2 + $0x110] sm:$0xff]
      %v565 = vld [vmem:[%s2 + $0x118] sm:$0xff]
      %v566 = vld [vmem:[%s2 + $0x120] sm:$0xff]
      %v567 = vld [vmem:[%s2 + $0x128] sm:$0xff]
      %v568 = vld [vmem:[%s2 + $0x130] sm:$0xff]
      %v569 = vld [vmem:[%s2 + $0x138] sm:$0xff]
      %v570 = vld [vmem:[%s2 + $0x140] sm:$0xff]
      %v571 = vld [vmem:[%s2 + $0x148] sm:$0xff]
      %v572 = vld [vmem:[%s2 + $0x150] sm:$0xff]
      %v573 = vld [vmem:[%s2 + $0x158] sm:$0xff]
      %v574 = vld [vmem:[%s2 + $0x160] sm:$0xff]
      %v575 = vld [vmem:[%s2 + $0x168] sm:$0xff]
      %v576 = vld [vmem:[%s2 + $0x170] sm:$0xff]
      %v577 = vld [vmem:[%s2 + $0x178] sm:$0xff]
      %v578 = vld [vmem:[%s2 + $0x180] sm:$0xff]
      %v579 = vld [vmem:[%s2 + $0x188] sm:$0xff]
      %v580 = vld [vmem:[%s2 + $0x190] sm:$0xff]
      %v581 = vld [vmem:[%s2 + $0x198] sm:$0xff]
      %v582 = vld [vmem:[%s2 + $0x1a0] sm:$0xff]
      %v583 = vld [vmem:[%s2 + $0x1a8] sm:$0xff]
      %v584 = vld [vmem:[%s2 + $0x1b0] sm:$0xff]
      %v585 = vld [vmem:[%s2 + $0x1b8] sm:$0xff]
      %v586 = vld [vmem:[%s2 + $0x1c0] sm:$0xff]
      %v587 = vld [vmem:[%s2 + $0x1c8] sm:$0xff]
      %v588 = vld [vmem:[%s2 + $0x1d0] sm:$0xff]
      %v589 = vld [vmem:[%s2 + $0x1d8] sm:$0xff]
      %v590 = vld [vmem:[%s2 + $0x1e0] sm:$0xff]
      %v591 = vld [vmem:[%s2 + $0x1e8] sm:$0xff]
      %v592 = vld [vmem:[%s2 + $0x1f0] sm:$0xff]
      %v593 = vld [vmem:[%s2 + $0x1f8] sm:$0xff]
      %v594 = vld [vmem:[%s3] sm:$0xff]
      %v595 = vld [vmem:[%s3 + $0x8] sm:$0xff]
      %v596 = vld [vmem:[%s3 + $0x10] sm:$0xff]
      %v597 = vld [vmem:[%s3 + $0x18] sm:$0xff]
      %v598 = vld [vmem:[%s3 + $0x20] sm:$0xff]
      %v599 = vld [vmem:[%s3 + $0x28] sm:$0xff]
      %v600 = vld [vmem:[%s3 + $0x30] sm:$0xff]
      %v601 = vld [vmem:[%s3 + $0x38] sm:$0xff]
      %v602 = vld [vmem:[%s3 + $0x40] sm:$0xff]
      %v603 = vld [vmem:[%s3 + $0x48] sm:$0xff]
      %v604 = vld [vmem:[%s3 + $0x50] sm:$0xff]
      %v605 = vld [vmem:[%s3 + $0x58] sm:$0xff]
      %v606 = vld [vmem:[%s3 + $0x60] sm:$0xff]
      %v607 = vld [vmem:[%s3 + $0x68] sm:$0xff]
      %v608 = vld [vmem:[%s3 + $0x70] sm:$0xff]
      %v609 = vld [vmem:[%s3 + $0x78] sm:$0xff]
      %v610 = vld [vmem:[%s3 + $0x80] sm:$0xff]
      %v611 = vld [vmem:[%s3 + $0x88] sm:$0xff]
      %v612 = vld [vmem:[%s3 + $0x90] sm:$0xff]
      %v613 = vld [vmem:[%s3 + $0x98] sm:$0xff]
      %v614 = vld [vmem:[%s3 + $0xa0] sm:$0xff]
      %v615 = vld [vmem:[%s3 + $0xa8] sm:$0xff]
      %v616 = vld [vmem:[%s3 + $0xb0] sm:$0xff]
      %v617 = vld [vmem:[%s3 + $0xb8] sm:$0xff]
      %v618 = vld [vmem:[%s3 + $0xc0] sm:$0xff]
      %v619 = vld [vmem:[%s3 + $0xc8] sm:$0xff]
      %v620 = vld [vmem:[%s3 + $0xd0] sm:$0xff]
      %v621 = vld [vmem:[%s3 + $0xd8] sm:$0xff]
      %v622 = vld [vmem:[%s3 + $0xe0] sm:$0xff]
      %v623 = vld [vmem:[%s3 + $0xe8] sm:$0xff]
      %v624 = vld [vmem:[%s3 + $0xf0] sm:$0xff]
      %v625 = vld [vmem:[%s3 + $0xf8] sm:$0xff]
      %v626 = vld [vmem:[%s3 + $0x100] sm:$0xff]
      %v627 = vld [vmem:[%s3 + $0x108] sm:$0xff]
      %v628 = vld [vmem:[%s3 + $0x110] sm:$0xff]
      %v629 = vld [vmem:[%s3 + $0x118] sm:$0xff]
      %v630 = vld [vmem:[%s3 + $0x120] sm:$0xff]
      %v631 = vld [vmem:[%s3 + $0x128] sm:$0xff]
      %v632 = vld [vmem:[%s3 + $0x130] sm:$0xff]
      %v633 = vld [vmem:[%s3 + $0x138] sm:$0xff]
      %v634 = vld [vmem:[%s3 + $0x140] sm:$0xff]
      %v635 = vld [vmem:[%s3 + $0x148] sm:$0xff]
      %v636 = vld [vmem:[%s3 + $0x150] sm:$0xff]
      %v637 = vld [vmem:[%s3 + $0x158] sm:$0xff]
      %v638 = vld [vmem:[%s3 + $0x160] sm:$0xff]
      %v639 = vld [vmem:[%s3 + $0x168] sm:$0xff]
      %v640 = vld [vmem:[%s3 + $0x170] sm:$0xff]
      %v641 = vld [vmem:[%s3 + $0x178] sm:$0xff]
      %v642 = vld [vmem:[%s3 + $0x180] sm:$0xff]
      %v643 = vld [vmem:[%s3 + $0x188] sm:$0xff]
      %v644 = vld [vmem:[%s3 + $0x190] sm:$0xff]
      %v645 = vld [vmem:[%s3 + $0x198] sm:$0xff]
      %v646 = vld [vmem:[%s3 + $0x1a0] sm:$0xff]
      %v647 = vld [vmem:[%s3 + $0x1a8] sm:$0xff]
      %v648 = vld [vmem:[%s3 + $0x1b0] sm:$0xff]
      %v649 = vld [vmem:[%s3 + $0x1b8] sm:$0xff]
      %v650 = vld [vmem:[%s3 + $0x1c0] sm:$0xff]
      %v651 = vld [vmem:[%s3 + $0x1c8] sm:$0xff]
      %v652 = vld [vmem:[%s3 + $0x1d0] sm:$0xff]
      %v653 = vld [vmem:[%s3 + $0x1d8] sm:$0xff]
      %v654 = vld [vmem:[%s3 + $0x1e0] sm:$0xff]
      %v655 = vld [vmem:[%s3 + $0x1e8] sm:$0xff]
      %v656 = vld [vmem:[%s3 + $0x1f0] sm:$0xff]
      %v657 = vld [vmem:[%s3 + $0x1f8] sm:$0xff]
      %658 = vmatprep.subr.mxu0 %v595
      %659 = vmatpush1.msra.mxu0 %v594
      %660 = vmatprep.subr.mxu0 %v599
      %661 = vmatpush1.msra.mxu0 %v598
      %662 = vmatprep.subr.mxu0 %v603
      %663 = vmatpush1.msra.mxu0 %v602
      %664 = vmatprep.subr.mxu0 %v607
      %665 = vmatpush1.msra.mxu0 %v606
      %666 = vmatprep.subr.mxu0 %v611
      %667 = vmatpush1.msra.mxu0 %v610
      %668 = vmatprep.subr.mxu0 %v615
      %669 = vmatpush1.msra.mxu0 %v614
      %670 = vmatprep.subr.mxu0 %v619
      %671 = vmatpush1.msra.mxu0 %v618
      %672 = vmatprep.subr.mxu0 %v623
      %673 = vmatpush1.msra.mxu0 %v622
      %674 = vmatprep.subr.mxu0 %v627
      %675 = vmatpush1.msra.mxu0 %v626
      %676 = vmatprep.subr.mxu0 %v631
      %677 = vmatpush1.msra.mxu0 %v630
      %678 = vmatprep.subr.mxu0 %v635
      %679 = vmatpush1.msra.mxu0 %v634
      %680 = vmatprep.subr.mxu0 %v639
      %681 = vmatpush1.msra.mxu0 %v638
      %682 = vmatprep.subr.mxu0 %v643
      %683 = vmatpush1.msra.mxu0 %v642
      %684 = vmatprep.subr.mxu0 %v647
      %685 = vmatpush1.msra.mxu0 %v646
      %686 = vmatprep.subr.mxu0 %v651
      %687 = vmatpush1.msra.mxu0 %v650
      %688 = vmatprep.subr.mxu0 %v655
      %689 = vmatpush1.msra.mxu0 %v654
      %690 = vmatprep.subr.mxu0 0.0
      %691 = vmatpush1.msra.mxu0 0.0
      %692 = vmatprep.subr.mxu0 0.0
      %693 = vmatpush1.msra.mxu0 0.0
      %694 = vmatprep.subr.mxu0 0.0
      %695 = vmatpush1.msra.mxu0 0.0
      %696 = vmatprep.subr.mxu0 0.0
      %697 = vmatpush1.msra.mxu0 0.0
      %698 = vmatprep.subr.mxu0 0.0
      %699 = vmatpush1.msra.mxu0 0.0
      %700 = vmatprep.subr.mxu0 0.0
      %701 = vmatpush1.msra.mxu0 0.0
      %702 = vmatprep.subr.mxu0 0.0
      %703 = vmatpush1.msra.mxu0 0.0
      %704 = vmatprep.subr.mxu0 0.0
      %705 = vmatpush1.msra.mxu0 0.0
      %706 = vmatprep.subr.mxu0 0.0
      %707 = vmatpush1.msra.mxu0 0.0
      %708 = vmatprep.subr.mxu0 0.0
      %709 = vmatpush1.msra.mxu0 0.0
      %710 = vmatprep.subr.mxu0 0.0
      %711 = vmatpush1.msra.mxu0 0.0
      %712 = vmatprep.subr.mxu0 0.0
      %713 = vmatpush1.msra.mxu0 0.0
      %714 = vmatprep.subr.mxu0 0.0
      %715 = vmatpush1.msra.mxu0 0.0
      %716 = vmatprep.subr.mxu0 0.0
      %717 = vmatpush1.msra.mxu0 0.0
      %718 = vmatprep.subr.mxu0 0.0
      %719 = vmatpush1.msra.mxu0 0.0
      %720 = vmatprep.subr.mxu0 0.0
      %721 = vmatpush1.msra.mxu0 0.0
      %722 = vmatprep.mubr.f32.mxu0 0.0
      %723 = vmatmul.mubr.f32.gmra.mrb[0].mxu0 %v290
      %v724 = vpop.f32.mrb[0].mxu0
      %v725 = vadd.f32 0.0, %v724
      %v726 = vpop.f32.mrb[0].mxu0
      %v727 = vadd.f32 0.0, %v726
      %728 = vdwg.mxu0
      %729 = vmatprep.subr.mxu0 %v597
      %730 = vmatpush1.msra.mxu0 %v596
      %731 = vmatprep.subr.mxu0 %v601
      %732 = vmatpush1.msra.mxu0 %v600
      %733 = vmatprep.subr.mxu0 %v605
      %734 = vmatpush1.msra.mxu0 %v604
      %735 = vmatprep.subr.mxu0 %v609
      %736 = vmatpush1.msra.mxu0 %v608
      %737 = vmatprep.subr.mxu0 %v613
      %738 = vmatpush1.msra.mxu0 %v612
      %739 = vmatprep.subr.mxu0 %v617
      %740 = vmatpush1.msra.mxu0 %v616
      %741 = vmatprep.subr.mxu0 %v621
      %742 = vmatpush1.msra.mxu0 %v620
      %743 = vmatprep.subr.mxu0 %v625
      %744 = vmatpush1.msra.mxu0 %v624
      %745 = vmatprep.subr.mxu0 %v629
      %746 = vmatpush1.msra.mxu0 %v628
      %747 = vmatprep.subr.mxu0 %v633
      %748 = vmatpush1.msra.mxu0 %v632
      %749 = vmatprep.subr.mxu0 %v637
      %750 = vmatpush1.msra.mxu0 %v636
      %751 = vmatprep.subr.mxu0 %v641
      %752 = vmatpush1.msra.mxu0 %v640
      %753 = vmatprep.subr.mxu0 %v645
      %754 = vmatpush1.msra.mxu0 %v644
      %755 = vmatprep.subr.mxu0 %v649
      %756 = vmatpush1.msra.mxu0 %v648
      %757 = vmatprep.subr.mxu0 %v653
      %758 = vmatpush1.msra.mxu0 %v652
      %759 = vmatprep.subr.mxu0 %v657
      %760 = vmatpush1.msra.mxu0 %v656
      %761 = vmatprep.subr.mxu0 0.0
      %762 = vmatpush1.msra.mxu0 0.0
      %763 = vmatprep.subr.mxu0 0.0
      %764 = vmatpush1.msra.mxu0 0.0
      %765 = vmatprep.subr.mxu0 0.0
      %766 = vmatpush1.msra.mxu0 0.0
      %767 = vmatprep.subr.mxu0 0.0
      %768 = vmatpush1.msra.mxu0 0.0
      %769 = vmatprep.subr.mxu0 0.0
      %770 = vmatpush1.msra.mxu0 0.0
      %771 = vmatprep.subr.mxu0 0.0
      %772 = vmatpush1.msra.mxu0 0.0
      %773 = vmatprep.subr.mxu0 0.0
      %774 = vmatpush1.msra.mxu0 0.0
      %775 = vmatprep.subr.mxu0 0.0
      %776 = vmatpush1.msra.mxu0 0.0
      %777 = vmatprep.subr.mxu0 0.0
      %778 = vmatpush1.msra.mxu0 0.0
      %779 = vmatprep.subr.mxu0 0.0
      %780 = vmatpush1.msra.mxu0 0.0
      %781 = vmatprep.subr.mxu0 0.0
      %782 = vmatpush1.msra.mxu0 0.0
      %783 = vmatprep.subr.mxu0 0.0
      %784 = vmatpush1.msra.mxu0 0.0
      %785 = vmatprep.subr.mxu0 0.0
      %786 = vmatpush1.msra.mxu0 0.0
      %787 = vmatprep.subr.mxu0 0.0
      %788 = vmatpush1.msra.mxu0 0.0
      %789 = vmatprep.subr.mxu0 0.0
      %790 = vmatpush1.msra.mxu0 0.0
      %791 = vmatprep.subr.mxu0 0.0
      %792 = vmatpush1.msra.mxu0 0.0
      %793 = vmatprep.mubr.f32.mxu0 0.0
      %794 = vmatmul.mubr.f32.gmra.mrb[0].mxu0 %v290
      %v795 = vpop.f32.mrb[0].mxu0
      %v796 = vadd.f32 0.0, %v795
      %v797 = vpop.f32.mrb[0].mxu0
      %v798 = vadd.f32 0.0, %v797
      %799 = vdwg.mxu0
      %800 = vmatprep.subr.mxu0 %v531
      %801 = vmatpush1.msra.mxu0 %v530
      %802 = vmatprep.subr.mxu0 %v535
      %803 = vmatpush1.msra.mxu0 %v534
      %804 = vmatprep.subr.mxu0 %v539
      %805 = vmatpush1.msra.mxu0 %v538
      %806 = vmatprep.subr.mxu0 %v543
      %807 = vmatpush1.msra.mxu0 %v542
      %808 = vmatprep.subr.mxu0 %v547
      %809 = vmatpush1.msra.mxu0 %v546
      %810 = vmatprep.subr.mxu0 %v551
      %811 = vmatpush1.msra.mxu0 %v550
      %812 = vmatprep.subr.mxu0 %v555
      %813 = vmatpush1.msra.mxu0 %v554
      %814 = vmatprep.subr.mxu0 %v559
      %815 = vmatpush1.msra.mxu0 %v558
      %816 = vmatprep.subr.mxu0 %v563
      %817 = vmatpush1.msra.mxu0 %v562
      %818 = vmatprep.subr.mxu0 %v567
      %819 = vmatpush1.msra.mxu0 %v566
      %820 = vmatprep.subr.mxu0 %v571
      %821 = vmatpush1.msra.mxu0 %v570
      %822 = vmatprep.subr.mxu0 %v575
      %823 = vmatpush1.msra.mxu0 %v574
      %824 = vmatprep.subr.mxu0 %v579
      %825 = vmatpush1.msra.mxu0 %v578
      %826 = vmatprep.subr.mxu0 %v583
      %827 = vmatpush1.msra.mxu0 %v582
      %828 = vmatprep.subr.mxu0 %v587
      %829 = vmatpush1.msra.mxu0 %v586
      %830 = vmatprep.subr.mxu0 %v591
      %831 = vmatpush1.msra.mxu0 %v590
      %832 = vmatprep.subr.mxu0 0.0
      %833 = vmatpush1.msra.mxu0 0.0
      %834 = vmatprep.subr.mxu0 0.0
      %835 = vmatpush1.msra.mxu0 0.0
      %836 = vmatprep.subr.mxu0 0.0
      %837 = vmatpush1.msra.mxu0 0.0
      %838 = vmatprep.subr.mxu0 0.0
      %839 = vmatpush1.msra.mxu0 0.0
      %840 = vmatprep.subr.mxu0 0.0
      %841 = vmatpush1.msra.mxu0 0.0
      %842 = vmatprep.subr.mxu0 0.0
      %843 = vmatpush1.msra.mxu0 0.0
      %844 = vmatprep.subr.mxu0 0.0
      %845 = vmatpush1.msra.mxu0 0.0
      %846 = vmatprep.subr.mxu0 0.0
      %847 = vmatpush1.msra.mxu0 0.0
      %848 = vmatprep.subr.mxu0 0.0
      %849 = vmatpush1.msra.mxu0 0.0
      %850 = vmatprep.subr.mxu0 0.0
      %851 = vmatpush1.msra.mxu0 0.0
      %852 = vmatprep.subr.mxu0 0.0
      %853 = vmatpush1.msra.mxu0 0.0
      %854 = vmatprep.subr.mxu0 0.0
      %855 = vmatpush1.msra.mxu0 0.0
      %856 = vmatprep.subr.mxu0 0.0
      %857 = vmatpush1.msra.mxu0 0.0
      %858 = vmatprep.subr.mxu0 0.0
      %859 = vmatpush1.msra.mxu0 0.0
      %860 = vmatprep.subr.mxu0 0.0
      %861 = vmatpush1.msra.mxu0 0.0
      %862 = vmatprep.subr.mxu0 0.0
      %863 = vmatpush1.msra.mxu0 0.0
      %864 = vmatprep.mubr.f32.mxu0 0.0
      %865 = vmatmul.mubr.f32.gmra.mrb[0].mxu0 %v529
      %v866 = vpop.f32.mrb[0].mxu0
      %v867 = vadd.f32 %v725, %v866
      %v868 = vpop.f32.mrb[0].mxu0
      %v869 = vadd.f32 %v727, %v868
      %870 = vdwg.mxu0
      %871 = vmatprep.subr.mxu0 %v533
      %872 = vmatpush1.msra.mxu0 %v532
      %873 = vmatprep.subr.mxu0 %v537
      %874 = vmatpush1.msra.mxu0 %v536
      %875 = vmatprep.subr.mxu0 %v541
      %876 = vmatpush1.msra.mxu0 %v540
      %877 = vmatprep.subr.mxu0 %v545
      %878 = vmatpush1.msra.mxu0 %v544
      %879 = vmatprep.subr.mxu0 %v549
      %880 = vmatpush1.msra.mxu0 %v548
      %881 = vmatprep.subr.mxu0 %v553
      %882 = vmatpush1.msra.mxu0 %v552
      %883 = vmatprep.subr.mxu0 %v557
      %884 = vmatpush1.msra.mxu0 %v556
      %885 = vmatprep.subr.mxu0 %v561
      %886 = vmatpush1.msra.mxu0 %v560
      %887 = vmatprep.subr.mxu0 %v565
      %888 = vmatpush1.msra.mxu0 %v564
      %889 = vmatprep.subr.mxu0 %v569
      %890 = vmatpush1.msra.mxu0 %v568
      %891 = vmatprep.subr.mxu0 %v573
      %892 = vmatpush1.msra.mxu0 %v572
      %893 = vmatprep.subr.mxu0 %v577
      %894 = vmatpush1.msra.mxu0 %v576
      %895 = vmatprep.subr.mxu0 %v581
      %896 = vmatpush1.msra.mxu0 %v580
      %897 = vmatprep.subr.mxu0 %v585
      %898 = vmatpush1.msra.mxu0 %v584
      %899 = vmatprep.subr.mxu0 %v589
      %900 = vmatpush1.msra.mxu0 %v588
      %901 = vmatprep.subr.mxu0 %v593
      %902 = vmatpush1.msra.mxu0 %v592
      %903 = vmatprep.subr.mxu0 0.0
      %904 = vmatpush1.msra.mxu0 0.0
      %905 = vmatprep.subr.mxu0 0.0
      %906 = vmatpush1.msra.mxu0 0.0
      %907 = vmatprep.subr.mxu0 0.0
      %908 = vmatpush1.msra.mxu0 0.0
      %909 = vmatprep.subr.mxu0 0.0
      %910 = vmatpush1.msra.mxu0 0.0
      %911 = vmatprep.subr.mxu0 0.0
      %912 = vmatpush1.msra.mxu0 0.0
      %913 = vmatprep.subr.mxu0 0.0
      %914 = vmatpush1.msra.mxu0 0.0
      %915 = vmatprep.subr.mxu0 0.0
      %916 = vmatpush1.msra.mxu0 0.0
      %917 = vmatprep.subr.mxu0 0.0
      %918 = vmatpush1.msra.mxu0 0.0
      %919 = vmatprep.subr.mxu0 0.0
      %920 = vmatpush1.msra.mxu0 0.0
      %921 = vmatprep.subr.mxu0 0.0
      %922 = vmatpush1.msra.mxu0 0.0
      %923 = vmatprep.subr.mxu0 0.0
      %924 = vmatpush1.msra.mxu0 0.0
      %925 = vmatprep.subr.mxu0 0.0
      %926 = vmatpush1.msra.mxu0 0.0
      %927 = vmatprep.subr.mxu0 0.0
      %928 = vmatpush1.msra.mxu0 0.0
      %929 = vmatprep.subr.mxu0 0.0
      %930 = vmatpush1.msra.mxu0 0.0
      %931 = vmatprep.subr.mxu0 0.0
      %932 = vmatpush1.msra.mxu0 0.0
      %933 = vmatprep.subr.mxu0 0.0
      %934 = vmatpush1.msra.mxu0 0.0
      %935 = vmatprep.mubr.f32.mxu0 0.0
      %936 = vmatmul.mubr.f32.gmra.mrb[0].mxu0 %v529
      %v937 = vpop.f32.mrb[0].mxu0
      %v938 = vadd.f32 %v796, %v937
      %v939 = vpop.f32.mrb[0].mxu0
      %v940 = vadd.f32 %v798, %v939
      %941 = vdwg.mxu0
      %v942 = vld [vmem:[%s4] sm:$0xf]
      %v944 = vlaneseq
      %v945 = vshrl.u32 %v944, 7
      %v946 = vsub.s32 0, %v945
      %v947 = vrot.slane %v942, %v946
      %v948 = vlaneseq
      %v949 = vshrl.u32 %v948, 7
      %v950 = vsub.s32 1, %v949
      %v951 = vrot.slane %v942, %v950
      %v952 = vlaneseq
      %v953 = vshrl.u32 %v952, 7
      %v954 = vsub.s32 2, %v953
      %v955 = vrot.slane %v942, %v954
      %v956 = vlaneseq
      %v957 = vshrl.u32 %v956, 7
      %v958 = vsub.s32 3, %v957
      %v959 = vrot.slane %v942, %v958
      %v964 = vadd.f32 %v867, %v947
      %v965 = vadd.f32 %v869, %v951
      %v966 = vadd.f32 %v938, %v955
      %v967 = vadd.f32 %v940, %v959
      %v968 = vxor.u32 %v964, 2147483648
      %v969 = vmul.f32 %v968, 1.442695
      %v970 = vpow.pop %v969
      %v971 = vadd.f32 %v970, 1.0
      %v972 = vrcp.pop %v971
      %v973 = vmul.f32 1.0, %v972
      %v974 = vxor.u32 %v965, 2147483648
      %v975 = vmul.f32 %v974, 1.442695
      %v976 = vpow.pop %v975
      %v977 = vadd.f32 %v976, 1.0
      %v978 = vrcp.pop %v977
      %v979 = vmul.f32 1.0, %v978
      %v980 = vtanh.pop %v966
      %v981 = vxor.u32 %v967, 2147483648
      %v982 = vmul.f32 %v981, 1.442695
      %v983 = vpow.pop %v982
      %v984 = vadd.f32 %v983, 1.0
      %v985 = vrcp.pop %v984
      %v986 = vmul.f32 1.0, %v985
      %v987 = vmul.f32 %v979, %v291
      %v988 = vmul.f32 %v973, %v980
      %v989 = vadd.f32 %v987, %v988
      %v990 = vtanh.pop %v989
      %v991 = vmul.f32 %v986, %v990
      %992 = vst [vmem:[%s278] sm:$0xff] %v991
      %s993 = scalar_lea.vmem %s272, 32
      %v994 = vld [vmem:[%s993] sm:$0xff]
      %v995 = vld [vmem:[%s993 + $0x8] sm:$0xff]
      %v996 = vld [vmem:[%s993 + $0x10] sm:$0xff]
      %v997 = vld [vmem:[%s993 + $0x18] sm:$0xff]
      %v998 = vld [vmem:[%s1] sm:$0xff]
      %v999 = vld [vmem:[%s1 + $0x8] sm:$0xff]
      %v1000 = vld [vmem:[%s1 + $0x10] sm:$0xff]
      %v1001 = vld [vmem:[%s1 + $0x18] sm:$0xff]
      %v1002 = vld [vmem:[%s1 + $0x20] sm:$0xff]
      %v1003 = vld [vmem:[%s1 + $0x28] sm:$0xff]
      %v1004 = vld [vmem:[%s1 + $0x30] sm:$0xff]
      %v1005 = vld [vmem:[%s1 + $0x38] sm:$0xff]
      %v1006 = vld [vmem:[%s1 + $0x40] sm:$0xff]
      %v1007 = vld [vmem:[%s1 + $0x48] sm:$0xff]
      %v1008 = vld [vmem:[%s1 + $0x50] sm:$0xff]
      %v1009 = vld [vmem:[%s1 + $0x58] sm:$0xff]
      %v1010 = vld [vmem:[%s1 + $0x60] sm:$0xff]
      %v1011 = vld [vmem:[%s1 + $0x68] sm:$0xff]
      %v1012 = vld [vmem:[%s1 + $0x70] sm:$0xff]
      %v1013 = vld [vmem:[%s1 + $0x78] sm:$0xff]
      %v1014 = vld [vmem:[%s1 + $0x80] sm:$0xff]
      %v1015 = vld [vmem:[%s1 + $0x88] sm:$0xff]
      %v1016 = vld [vmem:[%s1 + $0x90] sm:$0xff]
      %v1017 = vld [vmem:[%s1 + $0x98] sm:$0xff]
      %v1018 = vld [vmem:[%s1 + $0xa0] sm:$0xff]
      %v1019 = vld [vmem:[%s1 + $0xa8] sm:$0xff]
      %v1020 = vld [vmem:[%s1 + $0xb0] sm:$0xff]
      %v1021 = vld [vmem:[%s1 + $0xb8] sm:$0xff]
      %v1022 = vld [vmem:[%s1 + $0xc0] sm:$0xff]
      %v1023 = vld [vmem:[%s1 + $0xc8] sm:$0xff]
      %v1024 = vld [vmem:[%s1 + $0xd0] sm:$0xff]
      %v1025 = vld [vmem:[%s1 + $0xd8] sm:$0xff]
      %v1026 = vld [vmem:[%s1 + $0xe0] sm:$0xff]
      %v1027 = vld [vmem:[%s1 + $0xe8] sm:$0xff]
      %v1028 = vld [vmem:[%s1 + $0xf0] sm:$0xff]
      %v1029 = vld [vmem:[%s1 + $0xf8] sm:$0xff]
      %v1030 = vld [vmem:[%s1 + $0x100] sm:$0xff]
      %v1031 = vld [vmem:[%s1 + $0x108] sm:$0xff]
      %v1032 = vld [vmem:[%s1 + $0x110] sm:$0xff]
      %v1033 = vld [vmem:[%s1 + $0x118] sm:$0xff]
      %v1034 = vld [vmem:[%s1 + $0x120] sm:$0xff]
      %v1035 = vld [vmem:[%s1 + $0x128] sm:$0xff]
      %v1036 = vld [vmem:[%s1 + $0x130] sm:$0xff]
      %v1037 = vld [vmem:[%s1 + $0x138] sm:$0xff]
      %v1038 = vld [vmem:[%s1 + $0x140] sm:$0xff]
      %v1039 = vld [vmem:[%s1 + $0x148] sm:$0xff]
      %v1040 = vld [vmem:[%s1 + $0x150] sm:$0xff]
      %v1041 = vld [vmem:[%s1 + $0x158] sm:$0xff]
      %v1042 = vld [vmem:[%s1 + $0x160] sm:$0xff]
      %v1043 = vld [vmem:[%s1 + $0x168] sm:$0xff]
      %v1044 = vld [vmem:[%s1 + $0x170] sm:$0xff]
      %v1045 = vld [vmem:[%s1 + $0x178] sm:$0xff]
      %v1046 = vld [vmem:[%s1 + $0x180] sm:$0xff]
      %v1047 = vld [vmem:[%s1 + $0x188] sm:$0xff]
      %v1048 = vld [vmem:[%s1 + $0x190] sm:$0xff]
      %v1049 = vld [vmem:[%s1 + $0x198] sm:$0xff]
      %v1050 = vld [vmem:[%s1 + $0x1a0] sm:$0xff]
      %v1051 = vld [vmem:[%s1 + $0x1a8] sm:$0xff]
      %v1052 = vld [vmem:[%s1 + $0x1b0] sm:$0xff]
      %v1053 = vld [vmem:[%s1 + $0x1b8] sm:$0xff]
      %v1054 = vld [vmem:[%s1 + $0x1c0] sm:$0xff]
      %v1055 = vld [vmem:[%s1 + $0x1c8] sm:$0xff]
      %v1056 = vld [vmem:[%s1 + $0x1d0] sm:$0xff]
      %v1057 = vld [vmem:[%s1 + $0x1d8] sm:$0xff]
      %v1058 = vld [vmem:[%s1 + $0x1e0] sm:$0xff]
      %v1059 = vld [vmem:[%s1 + $0x1e8] sm:$0xff]
      %v1060 = vld [vmem:[%s1 + $0x1f0] sm:$0xff]
      %v1061 = vld [vmem:[%s1 + $0x1f8] sm:$0xff]
      %1062 = vmatprep.subr.mxu0 %v999
      %1063 = vmatpush1.msra.mxu0 %v998
      %1064 = vmatprep.subr.mxu0 %v1003
      %1065 = vmatpush1.msra.mxu0 %v1002
      %1066 = vmatprep.subr.mxu0 %v1007
      %1067 = vmatpush1.msra.mxu0 %v1006
      %1068 = vmatprep.subr.mxu0 %v1011
      %1069 = vmatpush1.msra.mxu0 %v1010
      %1070 = vmatprep.subr.mxu0 %v1015
      %1071 = vmatpush1.msra.mxu0 %v1014
      %1072 = vmatprep.subr.mxu0 %v1019
      %1073 = vmatpush1.msra.mxu0 %v1018
      %1074 = vmatprep.subr.mxu0 %v1023
      %1075 = vmatpush1.msra.mxu0 %v1022
      %1076 = vmatprep.subr.mxu0 %v1027
      %1077 = vmatpush1.msra.mxu0 %v1026
      %1078 = vmatprep.subr.mxu0 %v1031
      %1079 = vmatpush1.msra.mxu0 %v1030
      %1080 = vmatprep.subr.mxu0 %v1035
      %1081 = vmatpush1.msra.mxu0 %v1034
      %1082 = vmatprep.subr.mxu0 %v1039
      %1083 = vmatpush1.msra.mxu0 %v1038
      %1084 = vmatprep.subr.mxu0 %v1043
      %1085 = vmatpush1.msra.mxu0 %v1042
      %1086 = vmatprep.subr.mxu0 %v1047
      %1087 = vmatpush1.msra.mxu0 %v1046
      %1088 = vmatprep.subr.mxu0 %v1051
      %1089 = vmatpush1.msra.mxu0 %v1050
      %1090 = vmatprep.subr.mxu0 %v1055
      %1091 = vmatpush1.msra.mxu0 %v1054
      %1092 = vmatprep.subr.mxu0 %v1059
      %1093 = vmatpush1.msra.mxu0 %v1058
      %1094 = vmatprep.subr.mxu0 0.0
      %1095 = vmatpush1.msra.mxu0 0.0
      %1096 = vmatprep.subr.mxu0 0.0
      %1097 = vmatpush1.msra.mxu0 0.0
      %1098 = vmatprep.subr.mxu0 0.0
      %1099 = vmatpush1.msra.mxu0 0.0
      %1100 = vmatprep.subr.mxu0 0.0
      %1101 = vmatpush1.msra.mxu0 0.0
      %1102 = vmatprep.subr.mxu0 0.0
      %1103 = vmatpush1.msra.mxu0 0.0
      %1104 = vmatprep.subr.mxu0 0.0
      %1105 = vmatpush1.msra.mxu0 0.0
      %1106 = vmatprep.subr.mxu0 0.0
      %1107 = vmatpush1.msra.mxu0 0.0
      %1108 = vmatprep.subr.mxu0 0.0
      %1109 = vmatpush1.msra.mxu0 0.0
      %1110 = vmatprep.subr.mxu0 0.0
      %1111 = vmatpush1.msra.mxu0 0.0
      %1112 = vmatprep.subr.mxu0 0.0
      %1113 = vmatpush1.msra.mxu0 0.0
      %1114 = vmatprep.subr.mxu0 0.0
      %1115 = vmatpush1.msra.mxu0 0.0
      %1116 = vmatprep.subr.mxu0 0.0
      %1117 = vmatpush1.msra.mxu0 0.0
      %1118 = vmatprep.subr.mxu0 0.0
      %1119 = vmatpush1.msra.mxu0 0.0
      %1120 = vmatprep.subr.mxu0 0.0
      %1121 = vmatpush1.msra.mxu0 0.0
      %1122 = vmatprep.subr.mxu0 0.0
      %1123 = vmatpush1.msra.mxu0 0.0
      %1124 = vmatprep.subr.mxu0 0.0
      %1125 = vmatpush1.msra.mxu0 0.0
      %1126 = vmatprep.mubr.f32.mxu0 0.0
      %1127 = vmatmul.mubr.f32.gmra.mrb[0].mxu0 %v529
      %v1128 = vpop.f32.mrb[0].mxu0
      %v1129 = vadd.f32 0.0, %v1128
      %v1130 = vpop.f32.mrb[0].mxu0
      %v1131 = vadd.f32 0.0, %v1130
      %1132 = vdwg.mxu0
      %1133 = vmatprep.subr.mxu0 %v1001
      %1134 = vmatpush1.msra.mxu0 %v1000
      %1135 = vmatprep.subr.mxu0 %v1005
      %1136 = vmatpush1.msra.mxu0 %v1004
      %1137 = vmatprep.subr.mxu0 %v1009
      %1138 = vmatpush1.msra.mxu0 %v1008
      %1139 = vmatprep.subr.mxu0 %v1013
      %1140 = vmatpush1.msra.mxu0 %v1012
      %1141 = vmatprep.subr.mxu0 %v1017
      %1142 = vmatpush1.msra.mxu0 %v1016
      %1143 = vmatprep.subr.mxu0 %v1021
      %1144 = vmatpush1.msra.mxu0 %v1020
      %1145 = vmatprep.subr.mxu0 %v1025
      %1146 = vmatpush1.msra.mxu0 %v1024
      %1147 = vmatprep.subr.mxu0 %v1029
      %1148 = vmatpush1.msra.mxu0 %v1028
      %1149 = vmatprep.subr.mxu0 %v1033
      %1150 = vmatpush1.msra.mxu0 %v1032
      %1151 = vmatprep.subr.mxu0 %v1037
      %1152 = vmatpush1.msra.mxu0 %v1036
      %1153 = vmatprep.subr.mxu0 %v1041
      %1154 = vmatpush1.msra.mxu0 %v1040
      %1155 = vmatprep.subr.mxu0 %v1045
      %1156 = vmatpush1.msra.mxu0 %v1044
      %1157 = vmatprep.subr.mxu0 %v1049
      %1158 = vmatpush1.msra.mxu0 %v1048
      %1159 = vmatprep.subr.mxu0 %v1053
      %1160 = vmatpush1.msra.mxu0 %v1052
      %1161 = vmatprep.subr.mxu0 %v1057
      %1162 = vmatpush1.msra.mxu0 %v1056
      %1163 = vmatprep.subr.mxu0 %v1061
      %1164 = vmatpush1.msra.mxu0 %v1060
      %1165 = vmatprep.subr.mxu0 0.0
      %1166 = vmatpush1.msra.mxu0 0.0
      %1167 = vmatprep.subr.mxu0 0.0
      %1168 = vmatpush1.msra.mxu0 0.0
      %1169 = vmatprep.subr.mxu0 0.0
      %1170 = vmatpush1.msra.mxu0 0.0
      %1171 = vmatprep.subr.mxu0 0.0
      %1172 = vmatpush1.msra.mxu0 0.0
      %1173 = vmatprep.subr.mxu0 0.0
      %1174 = vmatpush1.msra.mxu0 0.0
      %1175 = vmatprep.subr.mxu0 0.0
      %1176 = vmatpush1.msra.mxu0 0.0
      %1177 = vmatprep.subr.mxu0 0.0
      %1178 = vmatpush1.msra.mxu0 0.0
      %1179 = vmatprep.subr.mxu0 0.0
      %1180 = vmatpush1.msra.mxu0 0.0
      %1181 = vmatprep.subr.mxu0 0.0
      %1182 = vmatpush1.msra.mxu0 0.0
      %1183 = vmatprep.subr.mxu0 0.0
      %1184 = vmatpush1.msra.mxu0 0.0
      %1185 = vmatprep.subr.mxu0 0.0
      %1186 = vmatpush1.msra.mxu0 0.0
      %1187 = vmatprep.subr.mxu0 0.0
      %1188 = vmatpush1.msra.mxu0 0.0
      %1189 = vmatprep.subr.mxu0 0.0
      %1190 = vmatpush1.msra.mxu0 0.0
      %1191 = vmatprep.subr.mxu0 0.0
      %1192 = vmatpush1.msra.mxu0 0.0
      %1193 = vmatprep.subr.mxu0 0.0
      %1194 = vmatpush1.msra.mxu0 0.0
      %1195 = vmatprep.subr.mxu0 0.0
      %1196 = vmatpush1.msra.mxu0 0.0
      %1197 = vmatprep.mubr.f32.mxu0 0.0
      %1198 = vmatmul.mubr.f32.gmra.mrb[0].mxu0 %v529
      %v1199 = vpop.f32.mrb[0].mxu0
      %v1200 = vadd.f32 0.0, %v1199
      %v1201 = vpop.f32.mrb[0].mxu0
      %v1202 = vadd.f32 0.0, %v1201
      %1203 = vdwg.mxu0
      %v1204 = vadd.f32 %v994, %v1129
      %v1205 = vadd.f32 %v995, %v1131
      %v1206 = vadd.f32 %v996, %v1200
      %v1207 = vadd.f32 %v997, %v1202
      %v1208 = vxor.u32 %v1204, 2147483648
      %v1209 = vmul.f32 %v1208, 1.442695
      %v1210 = vpow.pop %v1209
      %v1211 = vadd.f32 %v1210, 1.0
      %v1212 = vrcp.pop %v1211
      %v1213 = vmul.f32 1.0, %v1212
      %v1214 = vxor.u32 %v1205, 2147483648
      %v1215 = vmul.f32 %v1214, 1.442695
      %v1216 = vpow.pop %v1215
      %v1217 = vadd.f32 %v1216, 1.0
      %v1218 = vrcp.pop %v1217
      %v1219 = vmul.f32 1.0, %v1218
      %v1220 = vtanh.pop %v1206
      %v1221 = vxor.u32 %v1207, 2147483648
      %v1222 = vmul.f32 %v1221, 1.442695
      %v1223 = vpow.pop %v1222
      %v1224 = vadd.f32 %v1223, 1.0
      %v1225 = vrcp.pop %v1224
      %v1226 = vmul.f32 1.0, %v1225
      %v1227 = vmul.f32 %v1219, %v527
      %v1228 = vmul.f32 %v1213, %v1220
      %v1229 = vadd.f32 %v1227, %v1228
      %v1230 = vtanh.pop %v1229
      %v1231 = vmul.f32 %v1226, %v1230
      %v1232 = vld [vmem:[%s2] sm:$0xff]
      %v1233 = vld [vmem:[%s2 + $0x8] sm:$0xff]
      %v1234 = vld [vmem:[%s2 + $0x10] sm:$0xff]
      %v1235 = vld [vmem:[%s2 + $0x18] sm:$0xff]
      %v1236 = vld [vmem:[%s2 + $0x20] sm:$0xff]
      %v1237 = vld [vmem:[%s2 + $0x28] sm:$0xff]
      %v1238 = vld [vmem:[%s2 + $0x30] sm:$0xff]
      %v1239 = vld [vmem:[%s2 + $0x38] sm:$0xff]
      %v1240 = vld [vmem:[%s2 + $0x40] sm:$0xff]
      %v1241 = vld [vmem:[%s2 + $0x48] sm:$0xff]
      %v1242 = vld [vmem:[%s2 + $0x50] sm:$0xff]
      %v1243 = vld [vmem:[%s2 + $0x58] sm:$0xff]
      %v1244 = vld [vmem:[%s2 + $0x60] sm:$0xff]
      %v1245 = vld [vmem:[%s2 + $0x68] sm:$0xff]
      %v1246 = vld [vmem:[%s2 + $0x70] sm:$0xff]
      %v1247 = vld [vmem:[%s2 + $0x78] sm:$0xff]
      %v1248 = vld [vmem:[%s2 + $0x80] sm:$0xff]
      %v1249 = vld [vmem:[%s2 + $0x88] sm:$0xff]
      %v1250 = vld [vmem:[%s2 + $0x90] sm:$0xff]
      %v1251 = vld [vmem:[%s2 + $0x98] sm:$0xff]
      %v1252 = vld [vmem:[%s2 + $0xa0] sm:$0xff]
      %v1253 = vld [vmem:[%s2 + $0xa8] sm:$0xff]
      %v1254 = vld [vmem:[%s2 + $0xb0] sm:$0xff]
      %v1255 = vld [vmem:[%s2 + $0xb8] sm:$0xff]
      %v1256 = vld [vmem:[%s2 + $0xc0] sm:$0xff]
      %v1257 = vld [vmem:[%s2 + $0xc8] sm:$0xff]
      %v1258 = vld [vmem:[%s2 + $0xd0] sm:$0xff]
      %v1259 = vld [vmem:[%s2 + $0xd8] sm:$0xff]
      %v1260 = vld [vmem:[%s2 + $0xe0] sm:$0xff]
      %v1261 = vld [vmem:[%s2 + $0xe8] sm:$0xff]
      %v1262 = vld [vmem:[%s2 + $0xf0] sm:$0xff]
      %v1263 = vld [vmem:[%s2 + $0xf8] sm:$0xff]
      %v1264 = vld [vmem:[%s2 + $0x100] sm:$0xff]
      %v1265 = vld [vmem:[%s2 + $0x108] sm:$0xff]
      %v1266 = vld [vmem:[%s2 + $0x110] sm:$0xff]
      %v1267 = vld [vmem:[%s2 + $0x118] sm:$0xff]
      %v1268 = vld [vmem:[%s2 + $0x120] sm:$0xff]
      %v1269 = vld [vmem:[%s2 + $0x128] sm:$0xff]
      %v1270 = vld [vmem:[%s2 + $0x130] sm:$0xff]
      %v1271 = vld [vmem:[%s2 + $0x138] sm:$0xff]
      %v1272 = vld [vmem:[%s2 + $0x140] sm:$0xff]
      %v1273 = vld [vmem:[%s2 + $0x148] sm:$0xff]
      %v1274 = vld [vmem:[%s2 + $0x150] sm:$0xff]
      %v1275 = vld [vmem:[%s2 + $0x158] sm:$0xff]
      %v1276 = vld [vmem:[%s2 + $0x160] sm:$0xff]
      %v1277 = vld [vmem:[%s2 + $0x168] sm:$0xff]
      %v1278 = vld [vmem:[%s2 + $0x170] sm:$0xff]
      %v1279 = vld [vmem:[%s2 + $0x178] sm:$0xff]
      %v1280 = vld [vmem:[%s2 + $0x180] sm:$0xff]
      %v1281 = vld [vmem:[%s2 + $0x188] sm:$0xff]
      %v1282 = vld [vmem:[%s2 + $0x190] sm:$0xff]
      %v1283 = vld [vmem:[%s2 + $0x198] sm:$0xff]
      %v1284 = vld [vmem:[%s2 + $0x1a0] sm:$0xff]
      %v1285 = vld [vmem:[%s2 + $0x1a8] sm:$0xff]
      %v1286 = vld [vmem:[%s2 + $0x1b0] sm:$0xff]
      %v1287 = vld [vmem:[%s2 + $0x1b8] sm:$0xff]
      %v1288 = vld [vmem:[%s2 + $0x1c0] sm:$0xff]
      %v1289 = vld [vmem:[%s2 + $0x1c8] sm:$0xff]
      %v1290 = vld [vmem:[%s2 + $0x1d0] sm:$0xff]
      %v1291 = vld [vmem:[%s2 + $0x1d8] sm:$0xff]
      %v1292 = vld [vmem:[%s2 + $0x1e0] sm:$0xff]
      %v1293 = vld [vmem:[%s2 + $0x1e8] sm:$0xff]
      %v1294 = vld [vmem:[%s2 + $0x1f0] sm:$0xff]
      %v1295 = vld [vmem:[%s2 + $0x1f8] sm:$0xff]
      %v1296 = vld [vmem:[%s3] sm:$0xff]
      %v1297 = vld [vmem:[%s3 + $0x8] sm:$0xff]
      %v1298 = vld [vmem:[%s3 + $0x10] sm:$0xff]
      %v1299 = vld [vmem:[%s3 + $0x18] sm:$0xff]
      %v1300 = vld [vmem:[%s3 + $0x20] sm:$0xff]
      %v1301 = vld [vmem:[%s3 + $0x28] sm:$0xff]
      %v1302 = vld [vmem:[%s3 + $0x30] sm:$0xff]
      %v1303 = vld [vmem:[%s3 + $0x38] sm:$0xff]
      %v1304 = vld [vmem:[%s3 + $0x40] sm:$0xff]
      %v1305 = vld [vmem:[%s3 + $0x48] sm:$0xff]
      %v1306 = vld [vmem:[%s3 + $0x50] sm:$0xff]
      %v1307 = vld [vmem:[%s3 + $0x58] sm:$0xff]
      %v1308 = vld [vmem:[%s3 + $0x60] sm:$0xff]
      %v1309 = vld [vmem:[%s3 + $0x68] sm:$0xff]
      %v1310 = vld [vmem:[%s3 + $0x70] sm:$0xff]
      %v1311 = vld [vmem:[%s3 + $0x78] sm:$0xff]
      %v1312 = vld [vmem:[%s3 + $0x80] sm:$0xff]
      %v1313 = vld [vmem:[%s3 + $0x88] sm:$0xff]
      %v1314 = vld [vmem:[%s3 + $0x90] sm:$0xff]
      %v1315 = vld [vmem:[%s3 + $0x98] sm:$0xff]
      %v1316 = vld [vmem:[%s3 + $0xa0] sm:$0xff]
      %v1317 = vld [vmem:[%s3 + $0xa8] sm:$0xff]
      %v1318 = vld [vmem:[%s3 + $0xb0] sm:$0xff]
      %v1319 = vld [vmem:[%s3 + $0xb8] sm:$0xff]
      %v1320 = vld [vmem:[%s3 + $0xc0] sm:$0xff]
      %v1321 = vld [vmem:[%s3 + $0xc8] sm:$0xff]
      %v1322 = vld [vmem:[%s3 + $0xd0] sm:$0xff]
      %v1323 = vld [vmem:[%s3 + $0xd8] sm:$0xff]
      %v1324 = vld [vmem:[%s3 + $0xe0] sm:$0xff]
      %v1325 = vld [vmem:[%s3 + $0xe8] sm:$0xff]
      %v1326 = vld [vmem:[%s3 + $0xf0] sm:$0xff]
      %v1327 = vld [vmem:[%s3 + $0xf8] sm:$0xff]
      %v1328 = vld [vmem:[%s3 + $0x100] sm:$0xff]
      %v1329 = vld [vmem:[%s3 + $0x108] sm:$0xff]
      %v1330 = vld [vmem:[%s3 + $0x110] sm:$0xff]
      %v1331 = vld [vmem:[%s3 + $0x118] sm:$0xff]
      %v1332 = vld [vmem:[%s3 + $0x120] sm:$0xff]
      %v1333 = vld [vmem:[%s3 + $0x128] sm:$0xff]
      %v1334 = vld [vmem:[%s3 + $0x130] sm:$0xff]
      %v1335 = vld [vmem:[%s3 + $0x138] sm:$0xff]
      %v1336 = vld [vmem:[%s3 + $0x140] sm:$0xff]
      %v1337 = vld [vmem:[%s3 + $0x148] sm:$0xff]
      %v1338 = vld [vmem:[%s3 + $0x150] sm:$0xff]
      %v1339 = vld [vmem:[%s3 + $0x158] sm:$0xff]
      %v1340 = vld [vmem:[%s3 + $0x160] sm:$0xff]
      %v1341 = vld [vmem:[%s3 + $0x168] sm:$0xff]
      %v1342 = vld [vmem:[%s3 + $0x170] sm:$0xff]
      %v1343 = vld [vmem:[%s3 + $0x178] sm:$0xff]
      %v1344 = vld [vmem:[%s3 + $0x180] sm:$0xff]
      %v1345 = vld [vmem:[%s3 + $0x188] sm:$0xff]
      %v1346 = vld [vmem:[%s3 + $0x190] sm:$0xff]
      %v1347 = vld [vmem:[%s3 + $0x198] sm:$0xff]
      %v1348 = vld [vmem:[%s3 + $0x1a0] sm:$0xff]
      %v1349 = vld [vmem:[%s3 + $0x1a8] sm:$0xff]
      %v1350 = vld [vmem:[%s3 + $0x1b0] sm:$0xff]
      %v1351 = vld [vmem:[%s3 + $0x1b8] sm:$0xff]
      %v1352 = vld [vmem:[%s3 + $0x1c0] sm:$0xff]
      %v1353 = vld [vmem:[%s3 + $0x1c8] sm:$0xff]
      %v1354 = vld [vmem:[%s3 + $0x1d0] sm:$0xff]
      %v1355 = vld [vmem:[%s3 + $0x1d8] sm:$0xff]
      %v1356 = vld [vmem:[%s3 + $0x1e0] sm:$0xff]
      %v1357 = vld [vmem:[%s3 + $0x1e8] sm:$0xff]
      %v1358 = vld [vmem:[%s3 + $0x1f0] sm:$0xff]
      %v1359 = vld [vmem:[%s3 + $0x1f8] sm:$0xff]
      %1360 = vmatprep.subr.mxu0 %v1297
      %1361 = vmatpush1.msra.mxu0 %v1296
      %1362 = vmatprep.subr.mxu0 %v1301
      %1363 = vmatpush1.msra.mxu0 %v1300
      %1364 = vmatprep.subr.mxu0 %v1305
      %1365 = vmatpush1.msra.mxu0 %v1304
      %1366 = vmatprep.subr.mxu0 %v1309
      %1367 = vmatpush1.msra.mxu0 %v1308
      %1368 = vmatprep.subr.mxu0 %v1313
      %1369 = vmatpush1.msra.mxu0 %v1312
      %1370 = vmatprep.subr.mxu0 %v1317
      %1371 = vmatpush1.msra.mxu0 %v1316
      %1372 = vmatprep.subr.mxu0 %v1321
      %1373 = vmatpush1.msra.mxu0 %v1320
      %1374 = vmatprep.subr.mxu0 %v1325
      %1375 = vmatpush1.msra.mxu0 %v1324
      %1376 = vmatprep.subr.mxu0 %v1329
      %1377 = vmatpush1.msra.mxu0 %v1328
      %1378 = vmatprep.subr.mxu0 %v1333
      %1379 = vmatpush1.msra.mxu0 %v1332
      %1380 = vmatprep.subr.mxu0 %v1337
      %1381 = vmatpush1.msra.mxu0 %v1336
      %1382 = vmatprep.subr.mxu0 %v1341
      %1383 = vmatpush1.msra.mxu0 %v1340
      %1384 = vmatprep.subr.mxu0 %v1345
      %1385 = vmatpush1.msra.mxu0 %v1344
      %1386 = vmatprep.subr.mxu0 %v1349
      %1387 = vmatpush1.msra.mxu0 %v1348
      %1388 = vmatprep.subr.mxu0 %v1353
      %1389 = vmatpush1.msra.mxu0 %v1352
      %1390 = vmatprep.subr.mxu0 %v1357
      %1391 = vmatpush1.msra.mxu0 %v1356
      %1392 = vmatprep.subr.mxu0 0.0
      %1393 = vmatpush1.msra.mxu0 0.0
      %1394 = vmatprep.subr.mxu0 0.0
      %1395 = vmatpush1.msra.mxu0 0.0
      %1396 = vmatprep.subr.mxu0 0.0
      %1397 = vmatpush1.msra.mxu0 0.0
      %1398 = vmatprep.subr.mxu0 0.0
      %1399 = vmatpush1.msra.mxu0 0.0
      %1400 = vmatprep.subr.mxu0 0.0
      %1401 = vmatpush1.msra.mxu0 0.0
      %1402 = vmatprep.subr.mxu0 0.0
      %1403 = vmatpush1.msra.mxu0 0.0
      %1404 = vmatprep.subr.mxu0 0.0
      %1405 = vmatpush1.msra.mxu0 0.0
      %1406 = vmatprep.subr.mxu0 0.0
      %1407 = vmatpush1.msra.mxu0 0.0
      %1408 = vmatprep.subr.mxu0 0.0
      %1409 = vmatpush1.msra.mxu0 0.0
      %1410 = vmatprep.subr.mxu0 0.0
      %1411 = vmatpush1.msra.mxu0 0.0
      %1412 = vmatprep.subr.mxu0 0.0
      %1413 = vmatpush1.msra.mxu0 0.0
      %1414 = vmatprep.subr.mxu0 0.0
      %1415 = vmatpush1.msra.mxu0 0.0
      %1416 = vmatprep.subr.mxu0 0.0
      %1417 = vmatpush1.msra.mxu0 0.0
      %1418 = vmatprep.subr.mxu0 0.0
      %1419 = vmatpush1.msra.mxu0 0.0
      %1420 = vmatprep.subr.mxu0 0.0
      %1421 = vmatpush1.msra.mxu0 0.0
      %1422 = vmatprep.subr.mxu0 0.0
      %1423 = vmatpush1.msra.mxu0 0.0
      %1424 = vmatprep.mubr.f32.mxu0 0.0
      %1425 = vmatmul.mubr.f32.gmra.mrb[0].mxu0 %v991
      %v1426 = vpop.f32.mrb[0].mxu0
      %v1427 = vadd.f32 0.0, %v1426
      %v1428 = vpop.f32.mrb[0].mxu0
      %v1429 = vadd.f32 0.0, %v1428
      %1430 = vdwg.mxu0
      %1431 = vmatprep.subr.mxu0 %v1299
      %1432 = vmatpush1.msra.mxu0 %v1298
      %1433 = vmatprep.subr.mxu0 %v1303
      %1434 = vmatpush1.msra.mxu0 %v1302
      %1435 = vmatprep.subr.mxu0 %v1307
      %1436 = vmatpush1.msra.mxu0 %v1306
      %1437 = vmatprep.subr.mxu0 %v1311
      %1438 = vmatpush1.msra.mxu0 %v1310
      %1439 = vmatprep.subr.mxu0 %v1315
      %1440 = vmatpush1.msra.mxu0 %v1314
      %1441 = vmatprep.subr.mxu0 %v1319
      %1442 = vmatpush1.msra.mxu0 %v1318
      %1443 = vmatprep.subr.mxu0 %v1323
      %1444 = vmatpush1.msra.mxu0 %v1322
      %1445 = vmatprep.subr.mxu0 %v1327
      %1446 = vmatpush1.msra.mxu0 %v1326
      %1447 = vmatprep.subr.mxu0 %v1331
      %1448 = vmatpush1.msra.mxu0 %v1330
      %1449 = vmatprep.subr.mxu0 %v1335
      %1450 = vmatpush1.msra.mxu0 %v1334
      %1451 = vmatprep.subr.mxu0 %v1339
      %1452 = vmatpush1.msra.mxu0 %v1338
      %1453 = vmatprep.subr.mxu0 %v1343
      %1454 = vmatpush1.msra.mxu0 %v1342
      %1455 = vmatprep.subr.mxu0 %v1347
      %1456 = vmatpush1.msra.mxu0 %v1346
      %1457 = vmatprep.subr.mxu0 %v1351
      %1458 = vmatpush1.msra.mxu0 %v1350
      %1459 = vmatprep.subr.mxu0 %v1355
      %1460 = vmatpush1.msra.mxu0 %v1354
      %1461 = vmatprep.subr.mxu0 %v1359
      %1462 = vmatpush1.msra.mxu0 %v1358
      %1463 = vmatprep.subr.mxu0 0.0
      %1464 = vmatpush1.msra.mxu0 0.0
      %1465 = vmatprep.subr.mxu0 0.0
      %1466 = vmatpush1.msra.mxu0 0.0
      %1467 = vmatprep.subr.mxu0 0.0
      %1468 = vmatpush1.msra.mxu0 0.0
      %1469 = vmatprep.subr.mxu0 0.0
      %1470 = vmatpush1.msra.mxu0 0.0
      %1471 = vmatprep.subr.mxu0 0.0
      %1472 = vmatpush1.msra.mxu0 0.0
      %1473 = vmatprep.subr.mxu0 0.0
      %1474 = vmatpush1.msra.mxu0 0.0
      %1475 = vmatprep.subr.mxu0 0.0
      %1476 = vmatpush1.msra.mxu0 0.0
      %1477 = vmatprep.subr.mxu0 0.0
      %1478 = vmatpush1.msra.mxu0 0.0
      %1479 = vmatprep.subr.mxu0 0.0
      %1480 = vmatpush1.msra.mxu0 0.0
      %1481 = vmatprep.subr.mxu0 0.0
      %1482 = vmatpush1.msra.mxu0 0.0
      %1483 = vmatprep.subr.mxu0 0.0
      %1484 = vmatpush1.msra.mxu0 0.0
      %1485 = vmatprep.subr.mxu0 0.0
      %1486 = vmatpush1.msra.mxu0 0.0
      %1487 = vmatprep.subr.mxu0 0.0
      %1488 = vmatpush1.msra.mxu0 0.0
      %1489 = vmatprep.subr.mxu0 0.0
      %1490 = vmatpush1.msra.mxu0 0.0
      %1491 = vmatprep.subr.mxu0 0.0
      %1492 = vmatpush1.msra.mxu0 0.0
      %1493 = vmatprep.subr.mxu0 0.0
      %1494 = vmatpush1.msra.mxu0 0.0
      %1495 = vmatprep.mubr.f32.mxu0 0.0
      %1496 = vmatmul.mubr.f32.gmra.mrb[0].mxu0 %v991
      %v1497 = vpop.f32.mrb[0].mxu0
      %v1498 = vadd.f32 0.0, %v1497
      %v1499 = vpop.f32.mrb[0].mxu0
      %v1500 = vadd.f32 0.0, %v1499
      %1501 = vdwg.mxu0
      %1502 = vmatprep.subr.mxu0 %v1233
      %1503 = vmatpush1.msra.mxu0 %v1232
      %1504 = vmatprep.subr.mxu0 %v1237
      %1505 = vmatpush1.msra.mxu0 %v1236
      %1506 = vmatprep.subr.mxu0 %v1241
      %1507 = vmatpush1.msra.mxu0 %v1240
      %1508 = vmatprep.subr.mxu0 %v1245
      %1509 = vmatpush1.msra.mxu0 %v1244
      %1510 = vmatprep.subr.mxu0 %v1249
      %1511 = vmatpush1.msra.mxu0 %v1248
      %1512 = vmatprep.subr.mxu0 %v1253
      %1513 = vmatpush1.msra.mxu0 %v1252
      %1514 = vmatprep.subr.mxu0 %v1257
      %1515 = vmatpush1.msra.mxu0 %v1256
      %1516 = vmatprep.subr.mxu0 %v1261
      %1517 = vmatpush1.msra.mxu0 %v1260
      %1518 = vmatprep.subr.mxu0 %v1265
      %1519 = vmatpush1.msra.mxu0 %v1264
      %1520 = vmatprep.subr.mxu0 %v1269
      %1521 = vmatpush1.msra.mxu0 %v1268
      %1522 = vmatprep.subr.mxu0 %v1273
      %1523 = vmatpush1.msra.mxu0 %v1272
      %1524 = vmatprep.subr.mxu0 %v1277
      %1525 = vmatpush1.msra.mxu0 %v1276
      %1526 = vmatprep.subr.mxu0 %v1281
      %1527 = vmatpush1.msra.mxu0 %v1280
      %1528 = vmatprep.subr.mxu0 %v1285
      %1529 = vmatpush1.msra.mxu0 %v1284
      %1530 = vmatprep.subr.mxu0 %v1289
      %1531 = vmatpush1.msra.mxu0 %v1288
      %1532 = vmatprep.subr.mxu0 %v1293
      %1533 = vmatpush1.msra.mxu0 %v1292
      %1534 = vmatprep.subr.mxu0 0.0
      %1535 = vmatpush1.msra.mxu0 0.0
      %1536 = vmatprep.subr.mxu0 0.0
      %1537 = vmatpush1.msra.mxu0 0.0
      %1538 = vmatprep.subr.mxu0 0.0
      %1539 = vmatpush1.msra.mxu0 0.0
      %1540 = vmatprep.subr.mxu0 0.0
      %1541 = vmatpush1.msra.mxu0 0.0
      %1542 = vmatprep.subr.mxu0 0.0
      %1543 = vmatpush1.msra.mxu0 0.0
      %1544 = vmatprep.subr.mxu0 0.0
      %1545 = vmatpush1.msra.mxu0 0.0
      %1546 = vmatprep.subr.mxu0 0.0
      %1547 = vmatpush1.msra.mxu0 0.0
      %1548 = vmatprep.subr.mxu0 0.0
      %1549 = vmatpush1.msra.mxu0 0.0
      %1550 = vmatprep.subr.mxu0 0.0
      %1551 = vmatpush1.msra.mxu0 0.0
      %1552 = vmatprep.subr.mxu0 0.0
      %1553 = vmatpush1.msra.mxu0 0.0
      %1554 = vmatprep.subr.mxu0 0.0
      %1555 = vmatpush1.msra.mxu0 0.0
      %1556 = vmatprep.subr.mxu0 0.0
      %1557 = vmatpush1.msra.mxu0 0.0
      %1558 = vmatprep.subr.mxu0 0.0
      %1559 = vmatpush1.msra.mxu0 0.0
      %1560 = vmatprep.subr.mxu0 0.0
      %1561 = vmatpush1.msra.mxu0 0.0
      %1562 = vmatprep.subr.mxu0 0.0
      %1563 = vmatpush1.msra.mxu0 0.0
      %1564 = vmatprep.subr.mxu0 0.0
      %1565 = vmatpush1.msra.mxu0 0.0
      %1566 = vmatprep.mubr.f32.mxu0 0.0
      %1567 = vmatmul.mubr.f32.gmra.mrb[0].mxu0 %v1231
      %v1568 = vpop.f32.mrb[0].mxu0
      %v1569 = vadd.f32 %v1427, %v1568
      %v1570 = vpop.f32.mrb[0].mxu0
      %v1571 = vadd.f32 %v1429, %v1570
      %1572 = vdwg.mxu0
      %1573 = vmatprep.subr.mxu0 %v1235
      %1574 = vmatpush1.msra.mxu0 %v1234
      %1575 = vmatprep.subr.mxu0 %v1239
      %1576 = vmatpush1.msra.mxu0 %v1238
      %1577 = vmatprep.subr.mxu0 %v1243
      %1578 = vmatpush1.msra.mxu0 %v1242
      %1579 = vmatprep.subr.mxu0 %v1247
      %1580 = vmatpush1.msra.mxu0 %v1246
      %1581 = vmatprep.subr.mxu0 %v1251
      %1582 = vmatpush1.msra.mxu0 %v1250
      %1583 = vmatprep.subr.mxu0 %v1255
      %1584 = vmatpush1.msra.mxu0 %v1254
      %1585 = vmatprep.subr.mxu0 %v1259
      %1586 = vmatpush1.msra.mxu0 %v1258
      %1587 = vmatprep.subr.mxu0 %v1263
      %1588 = vmatpush1.msra.mxu0 %v1262
      %1589 = vmatprep.subr.mxu0 %v1267
      %1590 = vmatpush1.msra.mxu0 %v1266
      %1591 = vmatprep.subr.mxu0 %v1271
      %1592 = vmatpush1.msra.mxu0 %v1270
      %1593 = vmatprep.subr.mxu0 %v1275
      %1594 = vmatpush1.msra.mxu0 %v1274
      %1595 = vmatprep.subr.mxu0 %v1279
      %1596 = vmatpush1.msra.mxu0 %v1278
      %1597 = vmatprep.subr.mxu0 %v1283
      %1598 = vmatpush1.msra.mxu0 %v1282
      %1599 = vmatprep.subr.mxu0 %v1287
      %1600 = vmatpush1.msra.mxu0 %v1286
      %1601 = vmatprep.subr.mxu0 %v1291
      %1602 = vmatpush1.msra.mxu0 %v1290
      %1603 = vmatprep.subr.mxu0 %v1295
      %1604 = vmatpush1.msra.mxu0 %v1294
      %1605 = vmatprep.subr.mxu0 0.0
      %1606 = vmatpush1.msra.mxu0 0.0
      %1607 = vmatprep.subr.mxu0 0.0
      %1608 = vmatpush1.msra.mxu0 0.0
      %1609 = vmatprep.subr.mxu0 0.0
      %1610 = vmatpush1.msra.mxu0 0.0
      %1611 = vmatprep.subr.mxu0 0.0
      %1612 = vmatpush1.msra.mxu0 0.0
      %1613 = vmatprep.subr.mxu0 0.0
      %1614 = vmatpush1.msra.mxu0 0.0
      %1615 = vmatprep.subr.mxu0 0.0
      %1616 = vmatpush1.msra.mxu0 0.0
      %1617 = vmatprep.subr.mxu0 0.0
      %1618 = vmatpush1.msra.mxu0 0.0
      %1619 = vmatprep.subr.mxu0 0.0
      %1620 = vmatpush1.msra.mxu0 0.0
      %1621 = vmatprep.subr.mxu0 0.0
      %1622 = vmatpush1.msra.mxu0 0.0
      %1623 = vmatprep.subr.mxu0 0.0
      %1624 = vmatpush1.msra.mxu0 0.0
      %1625 = vmatprep.subr.mxu0 0.0
      %1626 = vmatpush1.msra.mxu0 0.0
      %1627 = vmatprep.subr.mxu0 0.0
      %1628 = vmatpush1.msra.mxu0 0.0
      %1629 = vmatprep.subr.mxu0 0.0
      %1630 = vmatpush1.msra.mxu0 0.0
      %1631 = vmatprep.subr.mxu0 0.0
      %1632 = vmatpush1.msra.mxu0 0.0
      %1633 = vmatprep.subr.mxu0 0.0
      %1634 = vmatpush1.msra.mxu0 0.0
      %1635 = vmatprep.subr.mxu0 0.0
      %1636 = vmatpush1.msra.mxu0 0.0
      %1637 = vmatprep.mubr.f32.mxu0 0.0
      %1638 = vmatmul.mubr.f32.gmra.mrb[0].mxu0 %v1231
      %v1639 = vpop.f32.mrb[0].mxu0
      %v1640 = vadd.f32 %v1498, %v1639
      %v1641 = vpop.f32.mrb[0].mxu0
      %v1642 = vadd.f32 %v1500, %v1641
      %1643 = vdwg.mxu0
      %v1644 = vld [vmem:[%s4] sm:$0xf]
      %v1646 = vlaneseq
      %v1647 = vshrl.u32 %v1646, 7
      %v1648 = vsub.s32 0, %v1647
      %v1649 = vrot.slane %v1644, %v1648
      %v1650 = vlaneseq
      %v1651 = vshrl.u32 %v1650, 7
      %v1652 = vsub.s32 1, %v1651
      %v1653 = vrot.slane %v1644, %v1652
      %v1654 = vlaneseq
      %v1655 = vshrl.u32 %v1654, 7
      %v1656 = vsub.s32 2, %v1655
      %v1657 = vrot.slane %v1644, %v1656
      %v1658 = vlaneseq
      %v1659 = vshrl.u32 %v1658, 7
      %v1660 = vsub.s32 3, %v1659
      %v1661 = vrot.slane %v1644, %v1660
      %v1666 = vadd.f32 %v1569, %v1649
      %v1667 = vadd.f32 %v1571, %v1653
      %v1668 = vadd.f32 %v1640, %v1657
      %v1669 = vadd.f32 %v1642, %v1661
      %v1670 = vxor.u32 %v1666, 2147483648
      %v1671 = vmul.f32 %v1670, 1.442695
      %v1672 = vpow.pop %v1671
      %v1673 = vadd.f32 %v1672, 1.0
      %v1674 = vrcp.pop %v1673
      %v1675 = vmul.f32 1.0, %v1674
      %v1676 = vxor.u32 %v1667, 2147483648
      %v1677 = vmul.f32 %v1676, 1.442695
      %v1678 = vpow.pop %v1677
      %v1679 = vadd.f32 %v1678, 1.0
      %v1680 = vrcp.pop %v1679
      %v1681 = vmul.f32 1.0, %v1680
      %v1682 = vtanh.pop %v1668
      %v1683 = vxor.u32 %v1669, 2147483648
      %v1684 = vmul.f32 %v1683, 1.442695
      %v1685 = vpow.pop %v1684
      %v1686 = vadd.f32 %v1685, 1.0
      %v1687 = vrcp.pop %v1686
      %v1688 = vmul.f32 1.0, %v1687
      %v1689 = vmul.f32 %v1681, %v989
      %v1690 = vmul.f32 %v1675, %v1682
      %v1691 = vadd.f32 %v1689, %v1690
      %v1692 = vtanh.pop %v1691
      %v1693 = vmul.f32 %v1688, %v1692
      %s1694 = scalar_lea.vmem %s278, 8
      %1695 = vst [vmem:[%s1694] sm:$0xff] %v1693
      %s1696 = scalar_lea.vmem %s272, 64
      %v1697 = vld [vmem:[%s1696] sm:$0xff]
      %v1698 = vld [vmem:[%s1696 + $0x8] sm:$0xff]
      %v1699 = vld [vmem:[%s1696 + $0x10] sm:$0xff]
      %v1700 = vld [vmem:[%s1696 + $0x18] sm:$0xff]
      %v1701 = vld [vmem:[%s1] sm:$0xff]
      %v1702 = vld [vmem:[%s1 + $0x8] sm:$0xff]
      %v1703 = vld [vmem:[%s1 + $0x10] sm:$0xff]
      %v1704 = vld [vmem:[%s1 + $0x18] sm:$0xff]
      %v1705 = vld [vmem:[%s1 + $0x20] sm:$0xff]
      %v1706 = vld [vmem:[%s1 + $0x28] sm:$0xff]
      %v1707 = vld [vmem:[%s1 + $0x30] sm:$0xff]
      %v1708 = vld [vmem:[%s1 + $0x38] sm:$0xff]
      %v1709 = vld [vmem:[%s1 + $0x40] sm:$0xff]
      %v1710 = vld [vmem:[%s1 + $0x48] sm:$0xff]
      %v1711 = vld [vmem:[%s1 + $0x50] sm:$0xff]
      %v1712 = vld [vmem:[%s1 + $0x58] sm:$0xff]
      %v1713 = vld [vmem:[%s1 + $0x60] sm:$0xff]
      %v1714 = vld [vmem:[%s1 + $0x68] sm:$0xff]
      %v1715 = vld [vmem:[%s1 + $0x70] sm:$0xff]
      %v1716 = vld [vmem:[%s1 + $0x78] sm:$0xff]
      %v1717 = vld [vmem:[%s1 + $0x80] sm:$0xff]
      %v1718 = vld [vmem:[%s1 + $0x88] sm:$0xff]
      %v1719 = vld [vmem:[%s1 + $0x90] sm:$0xff]
      %v1720 = vld [vmem:[%s1 + $0x98] sm:$0xff]
      %v1721 = vld [vmem:[%s1 + $0xa0] sm:$0xff]
      %v1722 = vld [vmem:[%s1 + $0xa8] sm:$0xff]
      %v1723 = vld [vmem:[%s1 + $0xb0] sm:$0xff]
      %v1724 = vld [vmem:[%s1 + $0xb8] sm:$0xff]
      %v1725 = vld [vmem:[%s1 + $0xc0] sm:$0xff]
      %v1726 = vld [vmem:[%s1 + $0xc8] sm:$0xff]
      %v1727 = vld [vmem:[%s1 + $0xd0] sm:$0xff]
      %v1728 = vld [vmem:[%s1 + $0xd8] sm:$0xff]
      %v1729 = vld [vmem:[%s1 + $0xe0] sm:$0xff]
      %v1730 = vld [vmem:[%s1 + $0xe8] sm:$0xff]
      %v1731 = vld [vmem:[%s1 + $0xf0] sm:$0xff]
      %v1732 = vld [vmem:[%s1 + $0xf8] sm:$0xff]
      %v1733 = vld [vmem:[%s1 + $0x100] sm:$0xff]
      %v1734 = vld [vmem:[%s1 + $0x108] sm:$0xff]
      %v1735 = vld [vmem:[%s1 + $0x110] sm:$0xff]
      %v1736 = vld [vmem:[%s1 + $0x118] sm:$0xff]
      %v1737 = vld [vmem:[%s1 + $0x120] sm:$0xff]
      %v1738 = vld [vmem:[%s1 + $0x128] sm:$0xff]
      %v1739 = vld [vmem:[%s1 + $0x130] sm:$0xff]
      %v1740 = vld [vmem:[%s1 + $0x138] sm:$0xff]
      %v1741 = vld [vmem:[%s1 + $0x140] sm:$0xff]
      %v1742 = vld [vmem:[%s1 + $0x148] sm:$0xff]
      %v1743 = vld [vmem:[%s1 + $0x150] sm:$0xff]
      %v1744 = vld [vmem:[%s1 + $0x158] sm:$0xff]
      %v1745 = vld [vmem:[%s1 + $0x160] sm:$0xff]
      %v1746 = vld [vmem:[%s1 + $0x168] sm:$0xff]
      %v1747 = vld [vmem:[%s1 + $0x170] sm:$0xff]
      %v1748 = vld [vmem:[%s1 + $0x178] sm:$0xff]
      %v1749 = vld [vmem:[%s1 + $0x180] sm:$0xff]
      %v1750 = vld [vmem:[%s1 + $0x188] sm:$0xff]
      %v1751 = vld [vmem:[%s1 + $0x190] sm:$0xff]
      %v1752 = vld [vmem:[%s1 + $0x198] sm:$0xff]
      %v1753 = vld [vmem:[%s1 + $0x1a0] sm:$0xff]
      %v1754 = vld [vmem:[%s1 + $0x1a8] sm:$0xff]
      %v1755 = vld [vmem:[%s1 + $0x1b0] sm:$0xff]
      %v1756 = vld [vmem:[%s1 + $0x1b8] sm:$0xff]
      %v1757 = vld [vmem:[%s1 + $0x1c0] sm:$0xff]
      %v1758 = vld [vmem:[%s1 + $0x1c8] sm:$0xff]
      %v1759 = vld [vmem:[%s1 + $0x1d0] sm:$0xff]
      %v1760 = vld [vmem:[%s1 + $0x1d8] sm:$0xff]
      %v1761 = vld [vmem:[%s1 + $0x1e0] sm:$0xff]
      %v1762 = vld [vmem:[%s1 + $0x1e8] sm:$0xff]
      %v1763 = vld [vmem:[%s1 + $0x1f0] sm:$0xff]
      %v1764 = vld [vmem:[%s1 + $0x1f8] sm:$0xff]
      %1765 = vmatprep.subr.mxu0 %v1702
      %1766 = vmatpush1.msra.mxu0 %v1701
      %1767 = vmatprep.subr.mxu0 %v1706
      %1768 = vmatpush1.msra.mxu0 %v1705
      %1769 = vmatprep.subr.mxu0 %v1710
      %1770 = vmatpush1.msra.mxu0 %v1709
      %1771 = vmatprep.subr.mxu0 %v1714
      %1772 = vmatpush1.msra.mxu0 %v1713
      %1773 = vmatprep.subr.mxu0 %v1718
      %1774 = vmatpush1.msra.mxu0 %v1717
      %1775 = vmatprep.subr.mxu0 %v1722
      %1776 = vmatpush1.msra.mxu0 %v1721
      %1777 = vmatprep.subr.mxu0 %v1726
      %1778 = vmatpush1.msra.mxu0 %v1725
      %1779 = vmatprep.subr.mxu0 %v1730
      %1780 = vmatpush1.msra.mxu0 %v1729
      %1781 = vmatprep.subr.mxu0 %v1734
      %1782 = vmatpush1.msra.mxu0 %v1733
      %1783 = vmatprep.subr.mxu0 %v1738
      %1784 = vmatpush1.msra.mxu0 %v1737
      %1785 = vmatprep.subr.mxu0 %v1742
      %1786 = vmatpush1.msra.mxu0 %v1741
      %1787 = vmatprep.subr.mxu0 %v1746
      %1788 = vmatpush1.msra.mxu0 %v1745
      %1789 = vmatprep.subr.mxu0 %v1750
      %1790 = vmatpush1.msra.mxu0 %v1749
      %1791 = vmatprep.subr.mxu0 %v1754
      %1792 = vmatpush1.msra.mxu0 %v1753
      %1793 = vmatprep.subr.mxu0 %v1758
      %1794 = vmatpush1.msra.mxu0 %v1757
      %1795 = vmatprep.subr.mxu0 %v1762
      %1796 = vmatpush1.msra.mxu0 %v1761
      %1797 = vmatprep.subr.mxu0 0.0
      %1798 = vmatpush1.msra.mxu0 0.0
      %1799 = vmatprep.subr.mxu0 0.0
      %1800 = vmatpush1.msra.mxu0 0.0
      %1801 = vmatprep.subr.mxu0 0.0
      %1802 = vmatpush1.msra.mxu0 0.0
      %1803 = vmatprep.subr.mxu0 0.0
      %1804 = vmatpush1.msra.mxu0 0.0
      %1805 = vmatprep.subr.mxu0 0.0
      %1806 = vmatpush1.msra.mxu0 0.0
      %1807 = vmatprep.subr.mxu0 0.0
      %1808 = vmatpush1.msra.mxu0 0.0
      %1809 = vmatprep.subr.mxu0 0.0
      %1810 = vmatpush1.msra.mxu0 0.0
      %1811 = vmatprep.subr.mxu0 0.0
      %1812 = vmatpush1.msra.mxu0 0.0
      %1813 = vmatprep.subr.mxu0 0.0
      %1814 = vmatpush1.msra.mxu0 0.0
      %1815 = vmatprep.subr.mxu0 0.0
      %1816 = vmatpush1.msra.mxu0 0.0
      %1817 = vmatprep.subr.mxu0 0.0
      %1818 = vmatpush1.msra.mxu0 0.0
      %1819 = vmatprep.subr.mxu0 0.0
      %1820 = vmatpush1.msra.mxu0 0.0
      %1821 = vmatprep.subr.mxu0 0.0
      %1822 = vmatpush1.msra.mxu0 0.0
      %1823 = vmatprep.subr.mxu0 0.0
      %1824 = vmatpush1.msra.mxu0 0.0
      %1825 = vmatprep.subr.mxu0 0.0
      %1826 = vmatpush1.msra.mxu0 0.0
      %1827 = vmatprep.subr.mxu0 0.0
      %1828 = vmatpush1.msra.mxu0 0.0
      %1829 = vmatprep.mubr.f32.mxu0 0.0
      %1830 = vmatmul.mubr.f32.gmra.mrb[0].mxu0 %v1231
      %v1831 = vpop.f32.mrb[0].mxu0
      %v1832 = vadd.f32 0.0, %v1831
      %v1833 = vpop.f32.mrb[0].mxu0
      %v1834 = vadd.f32 0.0, %v1833
      %1835 = vdwg.mxu0
      %1836 = vmatprep.subr.mxu0 %v1704
      %1837 = vmatpush1.msra.mxu0 %v1703
      %1838 = vmatprep.subr.mxu0 %v1708
      %1839 = vmatpush1.msra.mxu0 %v1707
      %1840 = vmatprep.subr.mxu0 %v1712
      %1841 = vmatpush1.msra.mxu0 %v1711
      %1842 = vmatprep.subr.mxu0 %v1716
      %1843 = vmatpush1.msra.mxu0 %v1715
      %1844 = vmatprep.subr.mxu0 %v1720
      %1845 = vmatpush1.msra.mxu0 %v1719
      %1846 = vmatprep.subr.mxu0 %v1724
      %1847 = vmatpush1.msra.mxu0 %v1723
      %1848 = vmatprep.subr.mxu0 %v1728
      %1849 = vmatpush1.msra.mxu0 %v1727
      %1850 = vmatprep.subr.mxu0 %v1732
      %1851 = vmatpush1.msra.mxu0 %v1731
      %1852 = vmatprep.subr.mxu0 %v1736
      %1853 = vmatpush1.msra.mxu0 %v1735
      %1854 = vmatprep.subr.mxu0 %v1740
      %1855 = vmatpush1.msra.mxu0 %v1739
      %1856 = vmatprep.subr.mxu0 %v1744
      %1857 = vmatpush1.msra.mxu0 %v1743
      %1858 = vmatprep.subr.mxu0 %v1748
      %1859 = vmatpush1.msra.mxu0 %v1747
      %1860 = vmatprep.subr.mxu0 %v1752
      %1861 = vmatpush1.msra.mxu0 %v1751
      %1862 = vmatprep.subr.mxu0 %v1756
      %1863 = vmatpush1.msra.mxu0 %v1755
      %1864 = vmatprep.subr.mxu0 %v1760
      %1865 = vmatpush1.msra.mxu0 %v1759
      %1866 = vmatprep.subr.mxu0 %v1764
      %1867 = vmatpush1.msra.mxu0 %v1763
      %1868 = vmatprep.subr.mxu0 0.0
      %1869 = vmatpush1.msra.mxu0 0.0
      %1870 = vmatprep.subr.mxu0 0.0
      %1871 = vmatpush1.msra.mxu0 0.0
      %1872 = vmatprep.subr.mxu0 0.0
      %1873 = vmatpush1.msra.mxu0 0.0
      %1874 = vmatprep.subr.mxu0 0.0
      %1875 = vmatpush1.msra.mxu0 0.0
      %1876 = vmatprep.subr.mxu0 0.0
      %1877 = vmatpush1.msra.mxu0 0.0
      %1878 = vmatprep.subr.mxu0 0.0
      %1879 = vmatpush1.msra.mxu0 0.0
      %1880 = vmatprep.subr.mxu0 0.0
      %1881 = vmatpush1.msra.mxu0 0.0
      %1882 = vmatprep.subr.mxu0 0.0
      %1883 = vmatpush1.msra.mxu0 0.0
      %1884 = vmatprep.subr.mxu0 0.0
      %1885 = vmatpush1.msra.mxu0 0.0
      %1886 = vmatprep.subr.mxu0 0.0
      %1887 = vmatpush1.msra.mxu0 0.0
      %1888 = vmatprep.subr.mxu0 0.0
      %1889 = vmatpush1.msra.mxu0 0.0
      %1890 = vmatprep.subr.mxu0 0.0
      %1891 = vmatpush1.msra.mxu0 0.0
      %1892 = vmatprep.subr.mxu0 0.0
      %1893 = vmatpush1.msra.mxu0 0.0
      %1894 = vmatprep.subr.mxu0 0.0
      %1895 = vmatpush1.msra.mxu0 0.0
      %1896 = vmatprep.subr.mxu0 0.0
      %1897 = vmatpush1.msra.mxu0 0.0
      %1898 = vmatprep.subr.mxu0 0.0
      %1899 = vmatpush1.msra.mxu0 0.0
      %1900 = vmatprep.mubr.f32.mxu0 0.0
      %1901 = vmatmul.mubr.f32.gmra.mrb[0].mxu0 %v1231
      %v1902 = vpop.f32.mrb[0].mxu0
      %v1903 = vadd.f32 0.0, %v1902
      %v1904 = vpop.f32.mrb[0].mxu0
      %v1905 = vadd.f32 0.0, %v1904
      %1906 = vdwg.mxu0
      %v1907 = vadd.f32 %v1697, %v1832
      %v1908 = vadd.f32 %v1698, %v1834
      %v1909 = vadd.f32 %v1699, %v1903
      %v1910 = vadd.f32 %v1700, %v1905
      %v1911 = vxor.u32 %v1907, 2147483648
      %v1912 = vmul.f32 %v1911, 1.442695
      %v1913 = vpow.pop %v1912
      %v1914 = vadd.f32 %v1913, 1.0
      %v1915 = vrcp.pop %v1914
      %v1916 = vmul.f32 1.0, %v1915
      %v1917 = vxor.u32 %v1908, 2147483648
      %v1918 = vmul.f32 %v1917, 1.442695
      %v1919 = vpow.pop %v1918
      %v1920 = vadd.f32 %v1919, 1.0
      %v1921 = vrcp.pop %v1920
      %v1922 = vmul.f32 1.0, %v1921
      %v1923 = vtanh.pop %v1909
      %v1924 = vxor.u32 %v1910, 2147483648
      %v1925 = vmul.f32 %v1924, 1.442695
      %v1926 = vpow.pop %v1925
      %v1927 = vadd.f32 %v1926, 1.0
      %v1928 = vrcp.pop %v1927
      %v1929 = vmul.f32 1.0, %v1928
      %v1930 = vmul.f32 %v1922, %v1229
      %v1931 = vmul.f32 %v1916, %v1923
      %v1932 = vadd.f32 %v1930, %v1931
      %v1933 = vtanh.pop %v1932
      %v1934 = vmul.f32 %v1929, %v1933
      %v1935 = vld [vmem:[%s2] sm:$0xff]
      %v1936 = vld [vmem:[%s2 + $0x8] sm:$0xff]
      %v1937 = vld [vmem:[%s2 + $0x10] sm:$0xff]
      %v1938 = vld [vmem:[%s2 + $0x18] sm:$0xff]
      %v1939 = vld [vmem:[%s2 + $0x20] sm:$0xff]
      %v1940 = vld [vmem:[%s2 + $0x28] sm:$0xff]
      %v1941 = vld [vmem:[%s2 + $0x30] sm:$0xff]
      %v1942 = vld [vmem:[%s2 + $0x38] sm:$0xff]
      %v1943 = vld [vmem:[%s2 + $0x40] sm:$0xff]
      %v1944 = vld [vmem:[%s2 + $0x48] sm:$0xff]
      %v1945 = vld [vmem:[%s2 + $0x50] sm:$0xff]
      %v1946 = vld [vmem:[%s2 + $0x58] sm:$0xff]
      %v1947 = vld [vmem:[%s2 + $0x60] sm:$0xff]
      %v1948 = vld [vmem:[%s2 + $0x68] sm:$0xff]
      %v1949 = vld [vmem:[%s2 + $0x70] sm:$0xff]
      %v1950 = vld [vmem:[%s2 + $0x78] sm:$0xff]
      %v1951 = vld [vmem:[%s2 + $0x80] sm:$0xff]
      %v1952 = vld [vmem:[%s2 + $0x88] sm:$0xff]
      %v1953 = vld [vmem:[%s2 + $0x90] sm:$0xff]
      %v1954 = vld [vmem:[%s2 + $0x98] sm:$0xff]
      %v1955 = vld [vmem:[%s2 + $0xa0] sm:$0xff]
      %v1956 = vld [vmem:[%s2 + $0xa8] sm:$0xff]
      %v1957 = vld [vmem:[%s2 + $0xb0] sm:$0xff]
      %v1958 = vld [vmem:[%s2 + $0xb8] sm:$0xff]
      %v1959 = vld [vmem:[%s2 + $0xc0] sm:$0xff]
      %v1960 = vld [vmem:[%s2 + $0xc8] sm:$0xff]
      %v1961 = vld [vmem:[%s2 + $0xd0] sm:$0xff]
      %v1962 = vld [vmem:[%s2 + $0xd8] sm:$0xff]
      %v1963 = vld [vmem:[%s2 + $0xe0] sm:$0xff]
      %v1964 = vld [vmem:[%s2 + $0xe8] sm:$0xff]
      %v1965 = vld [vmem:[%s2 + $0xf0] sm:$0xff]
      %v1966 = vld [vmem:[%s2 + $0xf8] sm:$0xff]
      %v1967 = vld [vmem:[%s2 + $0x100] sm:$0xff]
      %v1968 = vld [vmem:[%s2 + $0x108] sm:$0xff]
      %v1969 = vld [vmem:[%s2 + $0x110] sm:$0xff]
      %v1970 = vld [vmem:[%s2 + $0x118] sm:$0xff]
      %v1971 = vld [vmem:[%s2 + $0x120] sm:$0xff]
      %v1972 = vld [vmem:[%s2 + $0x128] sm:$0xff]
      %v1973 = vld [vmem:[%s2 + $0x130] sm:$0xff]
      %v1974 = vld [vmem:[%s2 + $0x138] sm:$0xff]
      %v1975 = vld [vmem:[%s2 + $0x140] sm:$0xff]
      %v1976 = vld [vmem:[%s2 + $0x148] sm:$0xff]
      %v1977 = vld [vmem:[%s2 + $0x150] sm:$0xff]
      %v1978 = vld [vmem:[%s2 + $0x158] sm:$0xff]
      %v1979 = vld [vmem:[%s2 + $0x160] sm:$0xff]
      %v1980 = vld [vmem:[%s2 + $0x168] sm:$0xff]
      %v1981 = vld [vmem:[%s2 + $0x170] sm:$0xff]
      %v1982 = vld [vmem:[%s2 + $0x178] sm:$0xff]
      %v1983 = vld [vmem:[%s2 + $0x180] sm:$0xff]
      %v1984 = vld [vmem:[%s2 + $0x188] sm:$0xff]
      %v1985 = vld [vmem:[%s2 + $0x190] sm:$0xff]
      %v1986 = vld [vmem:[%s2 + $0x198] sm:$0xff]
      %v1987 = vld [vmem:[%s2 + $0x1a0] sm:$0xff]
      %v1988 = vld [vmem:[%s2 + $0x1a8] sm:$0xff]
      %v1989 = vld [vmem:[%s2 + $0x1b0] sm:$0xff]
      %v1990 = vld [vmem:[%s2 + $0x1b8] sm:$0xff]
      %v1991 = vld [vmem:[%s2 + $0x1c0] sm:$0xff]
      %v1992 = vld [vmem:[%s2 + $0x1c8] sm:$0xff]
      %v1993 = vld [vmem:[%s2 + $0x1d0] sm:$0xff]
      %v1994 = vld [vmem:[%s2 + $0x1d8] sm:$0xff]
      %v1995 = vld [vmem:[%s2 + $0x1e0] sm:$0xff]
      %v1996 = vld [vmem:[%s2 + $0x1e8] sm:$0xff]
      %v1997 = vld [vmem:[%s2 + $0x1f0] sm:$0xff]
      %v1998 = vld [vmem:[%s2 + $0x1f8] sm:$0xff]
      %v1999 = vld [vmem:[%s3] sm:$0xff]
      %v2000 = vld [vmem:[%s3 + $0x8] sm:$0xff]
      %v2001 = vld [vmem:[%s3 + $0x10] sm:$0xff]
      %v2002 = vld [vmem:[%s3 + $0x18] sm:$0xff]
      %v2003 = vld [vmem:[%s3 + $0x20] sm:$0xff]
      %v2004 = vld [vmem:[%s3 + $0x28] sm:$0xff]
      %v2005 = vld [vmem:[%s3 + $0x30] sm:$0xff]
      %v2006 = vld [vmem:[%s3 + $0x38] sm:$0xff]
      %v2007 = vld [vmem:[%s3 + $0x40] sm:$0xff]
      %v2008 = vld [vmem:[%s3 + $0x48] sm:$0xff]
      %v2009 = vld [vmem:[%s3 + $0x50] sm:$0xff]
      %v2010 = vld [vmem:[%s3 + $0x58] sm:$0xff]
      %v2011 = vld [vmem:[%s3 + $0x60] sm:$0xff]
      %v2012 = vld [vmem:[%s3 + $0x68] sm:$0xff]
      %v2013 = vld [vmem:[%s3 + $0x70] sm:$0xff]
      %v2014 = vld [vmem:[%s3 + $0x78] sm:$0xff]
      %v2015 = vld [vmem:[%s3 + $0x80] sm:$0xff]
      %v2016 = vld [vmem:[%s3 + $0x88] sm:$0xff]
      %v2017 = vld [vmem:[%s3 + $0x90] sm:$0xff]
      %v2018 = vld [vmem:[%s3 + $0x98] sm:$0xff]
      %v2019 = vld [vmem:[%s3 + $0xa0] sm:$0xff]
      %v2020 = vld [vmem:[%s3 + $0xa8] sm:$0xff]
      %v2021 = vld [vmem:[%s3 + $0xb0] sm:$0xff]
      %v2022 = vld [vmem:[%s3 + $0xb8] sm:$0xff]
      %v2023 = vld [vmem:[%s3 + $0xc0] sm:$0xff]
      %v2024 = vld [vmem:[%s3 + $0xc8] sm:$0xff]
      %v2025 = vld [vmem:[%s3 + $0xd0] sm:$0xff]
      %v2026 = vld [vmem:[%s3 + $0xd8] sm:$0xff]
      %v2027 = vld [vmem:[%s3 + $0xe0] sm:$0xff]
      %v2028 = vld [vmem:[%s3 + $0xe8] sm:$0xff]
      %v2029 = vld [vmem:[%s3 + $0xf0] sm:$0xff]
      %v2030 = vld [vmem:[%s3 + $0xf8] sm:$0xff]
      %v2031 = vld [vmem:[%s3 + $0x100] sm:$0xff]
      %v2032 = vld [vmem:[%s3 + $0x108] sm:$0xff]
      %v2033 = vld [vmem:[%s3 + $0x110] sm:$0xff]
      %v2034 = vld [vmem:[%s3 + $0x118] sm:$0xff]
      %v2035 = vld [vmem:[%s3 + $0x120] sm:$0xff]
      %v2036 = vld [vmem:[%s3 + $0x128] sm:$0xff]
      %v2037 = vld [vmem:[%s3 + $0x130] sm:$0xff]
      %v2038 = vld [vmem:[%s3 + $0x138] sm:$0xff]
      %v2039 = vld [vmem:[%s3 + $0x140] sm:$0xff]
      %v2040 = vld [vmem:[%s3 + $0x148] sm:$0xff]
      %v2041 = vld [vmem:[%s3 + $0x150] sm:$0xff]
      %v2042 = vld [vmem:[%s3 + $0x158] sm:$0xff]
      %v2043 = vld [vmem:[%s3 + $0x160] sm:$0xff]
      %v2044 = vld [vmem:[%s3 + $0x168] sm:$0xff]
      %v2045 = vld [vmem:[%s3 + $0x170] sm:$0xff]
      %v2046 = vld [vmem:[%s3 + $0x178] sm:$0xff]
      %v2047 = vld [vmem:[%s3 + $0x180] sm:$0xff]
      %v2048 = vld [vmem:[%s3 + $0x188] sm:$0xff]
      %v2049 = vld [vmem:[%s3 + $0x190] sm:$0xff]
      %v2050 = vld [vmem:[%s3 + $0x198] sm:$0xff]
      %v2051 = vld [vmem:[%s3 + $0x1a0] sm:$0xff]
      %v2052 = vld [vmem:[%s3 + $0x1a8] sm:$0xff]
      %v2053 = vld [vmem:[%s3 + $0x1b0] sm:$0xff]
      %v2054 = vld [vmem:[%s3 + $0x1b8] sm:$0xff]
      %v2055 = vld [vmem:[%s3 + $0x1c0] sm:$0xff]
      %v2056 = vld [vmem:[%s3 + $0x1c8] sm:$0xff]
      %v2057 = vld [vmem:[%s3 + $0x1d0] sm:$0xff]
      %v2058 = vld [vmem:[%s3 + $0x1d8] sm:$0xff]
      %v2059 = vld [vmem:[%s3 + $0x1e0] sm:$0xff]
      %v2060 = vld [vmem:[%s3 + $0x1e8] sm:$0xff]
      %v2061 = vld [vmem:[%s3 + $0x1f0] sm:$0xff]
      %v2062 = vld [vmem:[%s3 + $0x1f8] sm:$0xff]
      %2063 = vmatprep.subr.mxu0 %v2000
      %2064 = vmatpush1.msra.mxu0 %v1999
      %2065 = vmatprep.subr.mxu0 %v2004
      %2066 = vmatpush1.msra.mxu0 %v2003
      %2067 = vmatprep.subr.mxu0 %v2008
      %2068 = vmatpush1.msra.mxu0 %v2007
      %2069 = vmatprep.subr.mxu0 %v2012
      %2070 = vmatpush1.msra.mxu0 %v2011
      %2071 = vmatprep.subr.mxu0 %v2016
      %2072 = vmatpush1.msra.mxu0 %v2015
      %2073 = vmatprep.subr.mxu0 %v2020
      %2074 = vmatpush1.msra.mxu0 %v2019
      %2075 = vmatprep.subr.mxu0 %v2024
      %2076 = vmatpush1.msra.mxu0 %v2023
      %2077 = vmatprep.subr.mxu0 %v2028
      %2078 = vmatpush1.msra.mxu0 %v2027
      %2079 = vmatprep.subr.mxu0 %v2032
      %2080 = vmatpush1.msra.mxu0 %v2031
      %2081 = vmatprep.subr.mxu0 %v2036
      %2082 = vmatpush1.msra.mxu0 %v2035
      %2083 = vmatprep.subr.mxu0 %v2040
      %2084 = vmatpush1.msra.mxu0 %v2039
      %2085 = vmatprep.subr.mxu0 %v2044
      %2086 = vmatpush1.msra.mxu0 %v2043
      %2087 = vmatprep.subr.mxu0 %v2048
      %2088 = vmatpush1.msra.mxu0 %v2047
      %2089 = vmatprep.subr.mxu0 %v2052
      %2090 = vmatpush1.msra.mxu0 %v2051
      %2091 = vmatprep.subr.mxu0 %v2056
      %2092 = vmatpush1.msra.mxu0 %v2055
      %2093 = vmatprep.subr.mxu0 %v2060
      %2094 = vmatpush1.msra.mxu0 %v2059
      %2095 = vmatprep.subr.mxu0 0.0
      %2096 = vmatpush1.msra.mxu0 0.0
      %2097 = vmatprep.subr.mxu0 0.0
      %2098 = vmatpush1.msra.mxu0 0.0
      %2099 = vmatprep.subr.mxu0 0.0
      %2100 = vmatpush1.msra.mxu0 0.0
      %2101 = vmatprep.subr.mxu0 0.0
      %2102 = vmatpush1.msra.mxu0 0.0
      %2103 = vmatprep.subr.mxu0 0.0
      %2104 = vmatpush1.msra.mxu0 0.0
      %2105 = vmatprep.subr.mxu0 0.0
      %2106 = vmatpush1.msra.mxu0 0.0
      %2107 = vmatprep.subr.mxu0 0.0
      %2108 = vmatpush1.msra.mxu0 0.0
      %2109 = vmatprep.subr.mxu0 0.0
      %2110 = vmatpush1.msra.mxu0 0.0
      %2111 = vmatprep.subr.mxu0 0.0
      %2112 = vmatpush1.msra.mxu0 0.0
      %2113 = vmatprep.subr.mxu0 0.0
      %2114 = vmatpush1.msra.mxu0 0.0
      %2115 = vmatprep.subr.mxu0 0.0
      %2116 = vmatpush1.msra.mxu0 0.0
      %2117 = vmatprep.subr.mxu0 0.0
      %2118 = vmatpush1.msra.mxu0 0.0
      %2119 = vmatprep.subr.mxu0 0.0
      %2120 = vmatpush1.msra.mxu0 0.0
      %2121 = vmatprep.subr.mxu0 0.0
      %2122 = vmatpush1.msra.mxu0 0.0
      %2123 = vmatprep.subr.mxu0 0.0
      %2124 = vmatpush1.msra.mxu0 0.0
      %2125 = vmatprep.subr.mxu0 0.0
      %2126 = vmatpush1.msra.mxu0 0.0
      %2127 = vmatprep.mubr.f32.mxu0 0.0
      %2128 = vmatmul.mubr.f32.gmra.mrb[0].mxu0 %v1693
      %v2129 = vpop.f32.mrb[0].mxu0
      %v2130 = vadd.f32 0.0, %v2129
      %v2131 = vpop.f32.mrb[0].mxu0
      %v2132 = vadd.f32 0.0, %v2131
      %2133 = vdwg.mxu0
      %2134 = vmatprep.subr.mxu0 %v2002
      %2135 = vmatpush1.msra.mxu0 %v2001
      %2136 = vmatprep.subr.mxu0 %v2006
      %2137 = vmatpush1.msra.mxu0 %v2005
      %2138 = vmatprep.subr.mxu0 %v2010
      %2139 = vmatpush1.msra.mxu0 %v2009
      %2140 = vmatprep.subr.mxu0 %v2014
      %2141 = vmatpush1.msra.mxu0 %v2013
      %2142 = vmatprep.subr.mxu0 %v2018
      %2143 = vmatpush1.msra.mxu0 %v2017
      %2144 = vmatprep.subr.mxu0 %v2022
      %2145 = vmatpush1.msra.mxu0 %v2021
      %2146 = vmatprep.subr.mxu0 %v2026
      %2147 = vmatpush1.msra.mxu0 %v2025
      %2148 = vmatprep.subr.mxu0 %v2030
      %2149 = vmatpush1.msra.mxu0 %v2029
      %2150 = vmatprep.subr.mxu0 %v2034
      %2151 = vmatpush1.msra.mxu0 %v2033
      %2152 = vmatprep.subr.mxu0 %v2038
      %2153 = vmatpush1.msra.mxu0 %v2037
      %2154 = vmatprep.subr.mxu0 %v2042
      %2155 = vmatpush1.msra.mxu0 %v2041
      %2156 = vmatprep.subr.mxu0 %v2046
      %2157 = vmatpush1.msra.mxu0 %v2045
      %2158 = vmatprep.subr.mxu0 %v2050
      %2159 = vmatpush1.msra.mxu0 %v2049
      %2160 = vmatprep.subr.mxu0 %v2054
      %2161 = vmatpush1.msra.mxu0 %v2053
      %2162 = vmatprep.subr.mxu0 %v2058
      %2163 = vmatpush1.msra.mxu0 %v2057
      %2164 = vmatprep.subr.mxu0 %v2062
      %2165 = vmatpush1.msra.mxu0 %v2061
      %2166 = vmatprep.subr.mxu0 0.0
      %2167 = vmatpush1.msra.mxu0 0.0
      %2168 = vmatprep.subr.mxu0 0.0
      %2169 = vmatpush1.msra.mxu0 0.0
      %2170 = vmatprep.subr.mxu0 0.0
      %2171 = vmatpush1.msra.mxu0 0.0
      %2172 = vmatprep.subr.mxu0 0.0
      %2173 = vmatpush1.msra.mxu0 0.0
      %2174 = vmatprep.subr.mxu0 0.0
      %2175 = vmatpush1.msra.mxu0 0.0
      %2176 = vmatprep.subr.mxu0 0.0
      %2177 = vmatpush1.msra.mxu0 0.0
      %2178 = vmatprep.subr.mxu0 0.0
      %2179 = vmatpush1.msra.mxu0 0.0
      %2180 = vmatprep.subr.mxu0 0.0
      %2181 = vmatpush1.msra.mxu0 0.0
      %2182 = vmatprep.subr.mxu0 0.0
      %2183 = vmatpush1.msra.mxu0 0.0
      %2184 = vmatprep.subr.mxu0 0.0
      %2185 = vmatpush1.msra.mxu0 0.0
      %2186 = vmatprep.subr.mxu0 0.0
      %2187 = vmatpush1.msra.mxu0 0.0
      %2188 = vmatprep.subr.mxu0 0.0
      %2189 = vmatpush1.msra.mxu0 0.0
      %2190 = vmatprep.subr.mxu0 0.0
      %2191 = vmatpush1.msra.mxu0 0.0
      %2192 = vmatprep.subr.mxu0 0.0
      %2193 = vmatpush1.msra.mxu0 0.0
      %2194 = vmatprep.subr.mxu0 0.0
      %2195 = vmatpush1.msra.mxu0 0.0
      %2196 = vmatprep.subr.mxu0 0.0
      %2197 = vmatpush1.msra.mxu0 0.0
      %2198 = vmatprep.mubr.f32.mxu0 0.0
      %2199 = vmatmul.mubr.f32.gmra.mrb[0].mxu0 %v1693
      %v2200 = vpop.f32.mrb[0].mxu0
      %v2201 = vadd.f32 0.0, %v2200
      %v2202 = vpop.f32.mrb[0].mxu0
      %v2203 = vadd.f32 0.0, %v2202
      %2204 = vdwg.mxu0
      %2205 = vmatprep.subr.mxu0 %v1936
      %2206 = vmatpush1.msra.mxu0 %v1935
      %2207 = vmatprep.subr.mxu0 %v1940
      %2208 = vmatpush1.msra.mxu0 %v1939
      %2209 = vmatprep.subr.mxu0 %v1944
      %2210 = vmatpush1.msra.mxu0 %v1943
      %2211 = vmatprep.subr.mxu0 %v1948
      %2212 = vmatpush1.msra.mxu0 %v1947
      %2213 = vmatprep.subr.mxu0 %v1952
      %2214 = vmatpush1.msra.mxu0 %v1951
      %2215 = vmatprep.subr.mxu0 %v1956
      %2216 = vmatpush1.msra.mxu0 %v1955
      %2217 = vmatprep.subr.mxu0 %v1960
      %2218 = vmatpush1.msra.mxu0 %v1959
      %2219 = vmatprep.subr.mxu0 %v1964
      %2220 = vmatpush1.msra.mxu0 %v1963
      %2221 = vmatprep.subr.mxu0 %v1968
      %2222 = vmatpush1.msra.mxu0 %v1967
      %2223 = vmatprep.subr.mxu0 %v1972
      %2224 = vmatpush1.msra.mxu0 %v1971
      %2225 = vmatprep.subr.mxu0 %v1976
      %2226 = vmatpush1.msra.mxu0 %v1975
      %2227 = vmatprep.subr.mxu0 %v1980
      %2228 = vmatpush1.msra.mxu0 %v1979
      %2229 = vmatprep.subr.mxu0 %v1984
      %2230 = vmatpush1.msra.mxu0 %v1983
      %2231 = vmatprep.subr.mxu0 %v1988
      %2232 = vmatpush1.msra.mxu0 %v1987
      %2233 = vmatprep.subr.mxu0 %v1992
      %2234 = vmatpush1.msra.mxu0 %v1991
      %2235 = vmatprep.subr.mxu0 %v1996
      %2236 = vmatpush1.msra.mxu0 %v1995
      %2237 = vmatprep.subr.mxu0 0.0
      %2238 = vmatpush1.msra.mxu0 0.0
      %2239 = vmatprep.subr.mxu0 0.0
      %2240 = vmatpush1.msra.mxu0 0.0
      %2241 = vmatprep.subr.mxu0 0.0
      %2242 = vmatpush1.msra.mxu0 0.0
      %2243 = vmatprep.subr.mxu0 0.0
      %2244 = vmatpush1.msra.mxu0 0.0
      %2245 = vmatprep.subr.mxu0 0.0
      %2246 = vmatpush1.msra.mxu0 0.0
      %2247 = vmatprep.subr.mxu0 0.0
      %2248 = vmatpush1.msra.mxu0 0.0
      %2249 = vmatprep.subr.mxu0 0.0
      %2250 = vmatpush1.msra.mxu0 0.0
      %2251 = vmatprep.subr.mxu0 0.0
      %2252 = vmatpush1.msra.mxu0 0.0
      %2253 = vmatprep.subr.mxu0 0.0
      %2254 = vmatpush1.msra.mxu0 0.0
      %2255 = vmatprep.subr.mxu0 0.0
      %2256 = vmatpush1.msra.mxu0 0.0
      %2257 = vmatprep.subr.mxu0 0.0
      %2258 = vmatpush1.msra.mxu0 0.0
      %2259 = vmatprep.subr.mxu0 0.0
      %2260 = vmatpush1.msra.mxu0 0.0
      %2261 = vmatprep.subr.mxu0 0.0
      %2262 = vmatpush1.msra.mxu0 0.0
      %2263 = vmatprep.subr.mxu0 0.0
      %2264 = vmatpush1.msra.mxu0 0.0
      %2265 = vmatprep.subr.mxu0 0.0
      %2266 = vmatpush1.msra.mxu0 0.0
      %2267 = vmatprep.subr.mxu0 0.0
      %2268 = vmatpush1.msra.mxu0 0.0
      %2269 = vmatprep.mubr.f32.mxu0 0.0
      %2270 = vmatmul.mubr.f32.gmra.mrb[0].mxu0 %v1934
      %v2271 = vpop.f32.mrb[0].mxu0
      %v2272 = vadd.f32 %v2130, %v2271
      %v2273 = vpop.f32.mrb[0].mxu0
      %v2274 = vadd.f32 %v2132, %v2273
      %2275 = vdwg.mxu0
      %2276 = vmatprep.subr.mxu0 %v1938
      %2277 = vmatpush1.msra.mxu0 %v1937
      %2278 = vmatprep.subr.mxu0 %v1942
      %2279 = vmatpush1.msra.mxu0 %v1941
      %2280 = vmatprep.subr.mxu0 %v1946
      %2281 = vmatpush1.msra.mxu0 %v1945
      %2282 = vmatprep.subr.mxu0 %v1950
      %2283 = vmatpush1.msra.mxu0 %v1949
      %2284 = vmatprep.subr.mxu0 %v1954
      %2285 = vmatpush1.msra.mxu0 %v1953
      %2286 = vmatprep.subr.mxu0 %v1958
      %2287 = vmatpush1.msra.mxu0 %v1957
      %2288 = vmatprep.subr.mxu0 %v1962
      %2289 = vmatpush1.msra.mxu0 %v1961
      %2290 = vmatprep.subr.mxu0 %v1966
      %2291 = vmatpush1.msra.mxu0 %v1965
      %2292 = vmatprep.subr.mxu0 %v1970
      %2293 = vmatpush1.msra.mxu0 %v1969
      %2294 = vmatprep.subr.mxu0 %v1974
      %2295 = vmatpush1.msra.mxu0 %v1973
      %2296 = vmatprep.subr.mxu0 %v1978
      %2297 = vmatpush1.msra.mxu0 %v1977
      %2298 = vmatprep.subr.mxu0 %v1982
      %2299 = vmatpush1.msra.mxu0 %v1981
      %2300 = vmatprep.subr.mxu0 %v1986
      %2301 = vmatpush1.msra.mxu0 %v1985
      %2302 = vmatprep.subr.mxu0 %v1990
      %2303 = vmatpush1.msra.mxu0 %v1989
      %2304 = vmatprep.subr.mxu0 %v1994
      %2305 = vmatpush1.msra.mxu0 %v1993
      %2306 = vmatprep.subr.mxu0 %v1998
      %2307 = vmatpush1.msra.mxu0 %v1997
      %2308 = vmatprep.subr.mxu0 0.0
      %2309 = vmatpush1.msra.mxu0 0.0
      %2310 = vmatprep.subr.mxu0 0.0
      %2311 = vmatpush1.msra.mxu0 0.0
      %2312 = vmatprep.subr.mxu0 0.0
      %2313 = vmatpush1.msra.mxu0 0.0
      %2314 = vmatprep.subr.mxu0 0.0
      %2315 = vmatpush1.msra.mxu0 0.0
      %2316 = vmatprep.subr.mxu0 0.0
      %2317 = vmatpush1.msra.mxu0 0.0
      %2318 = vmatprep.subr.mxu0 0.0
      %2319 = vmatpush1.msra.mxu0 0.0
      %2320 = vmatprep.subr.mxu0 0.0
      %2321 = vmatpush1.msra.mxu0 0.0
      %2322 = vmatprep.subr.mxu0 0.0
      %2323 = vmatpush1.msra.mxu0 0.0
      %2324 = vmatprep.subr.mxu0 0.0
      %2325 = vmatpush1.msra.mxu0 0.0
      %2326 = vmatprep.subr.mxu0 0.0
      %2327 = vmatpush1.msra.mxu0 0.0
      %2328 = vmatprep.subr.mxu0 0.0
      %2329 = vmatpush1.msra.mxu0 0.0
      %2330 = vmatprep.subr.mxu0 0.0
      %2331 = vmatpush1.msra.mxu0 0.0
      %2332 = vmatprep.subr.mxu0 0.0
      %2333 = vmatpush1.msra.mxu0 0.0
      %2334 = vmatprep.subr.mxu0 0.0
      %2335 = vmatpush1.msra.mxu0 0.0
      %2336 = vmatprep.subr.mxu0 0.0
      %2337 = vmatpush1.msra.mxu0 0.0
      %2338 = vmatprep.subr.mxu0 0.0
      %2339 = vmatpush1.msra.mxu0 0.0
      %2340 = vmatprep.mubr.f32.mxu0 0.0
      %2341 = vmatmul.mubr.f32.gmra.mrb[0].mxu0 %v1934
      %v2342 = vpop.f32.mrb[0].mxu0
      %v2343 = vadd.f32 %v2201, %v2342
      %v2344 = vpop.f32.mrb[0].mxu0
      %v2345 = vadd.f32 %v2203, %v2344
      %2346 = vdwg.mxu0
      %v2347 = vld [vmem:[%s4] sm:$0xf]
      %v2349 = vlaneseq
      %v2350 = vshrl.u32 %v2349, 7
      %v2351 = vsub.s32 0, %v2350
      %v2352 = vrot.slane %v2347, %v2351
      %v2353 = vlaneseq
      %v2354 = vshrl.u32 %v2353, 7
      %v2355 = vsub.s32 1, %v2354
      %v2356 = vrot.slane %v2347, %v2355
      %v2357 = vlaneseq
      %v2358 = vshrl.u32 %v2357, 7
      %v2359 = vsub.s32 2, %v2358
      %v2360 = vrot.slane %v2347, %v2359
      %v2361 = vlaneseq
      %v2362 = vshrl.u32 %v2361, 7
      %v2363 = vsub.s32 3, %v2362
      %v2364 = vrot.slane %v2347, %v2363
      %v2369 = vadd.f32 %v2272, %v2352
      %v2370 = vadd.f32 %v2274, %v2356
      %v2371 = vadd.f32 %v2343, %v2360
      %v2372 = vadd.f32 %v2345, %v2364
      %v2373 = vxor.u32 %v2369, 2147483648
      %v2374 = vmul.f32 %v2373, 1.442695
      %v2375 = vpow.pop %v2374
      %v2376 = vadd.f32 %v2375, 1.0
      %v2377 = vrcp.pop %v2376
      %v2378 = vmul.f32 1.0, %v2377
      %v2379 = vxor.u32 %v2370, 2147483648
      %v2380 = vmul.f32 %v2379, 1.442695
      %v2381 = vpow.pop %v2380
      %v2382 = vadd.f32 %v2381, 1.0
      %v2383 = vrcp.pop %v2382
      %v2384 = vmul.f32 1.0, %v2383
      %v2385 = vtanh.pop %v2371
      %v2386 = vxor.u32 %v2372, 2147483648
      %v2387 = vmul.f32 %v2386, 1.442695
      %v2388 = vpow.pop %v2387
      %v2389 = vadd.f32 %v2388, 1.0
      %v2390 = vrcp.pop %v2389
      %v2391 = vmul.f32 1.0, %v2390
      %v2392 = vmul.f32 %v2384, %v1691
      %v2393 = vmul.f32 %v2378, %v2385
      %v2394 = vadd.f32 %v2392, %v2393
      %v2395 = vtanh.pop %v2394
      %v2396 = vmul.f32 %v2391, %v2395
      %s2397 = scalar_lea.vmem %s278, 16
      %2398 = vst [vmem:[%s2397] sm:$0xff] %v2396
      %s2399 = scalar_lea.vmem %s272, 96
      %v2400 = vld [vmem:[%s2399] sm:$0xff]
      %v2401 = vld [vmem:[%s2399 + $0x8] sm:$0xff]
      %v2402 = vld [vmem:[%s2399 + $0x10] sm:$0xff]
      %v2403 = vld [vmem:[%s2399 + $0x18] sm:$0xff]
      %v2404 = vld [vmem:[%s1] sm:$0xff]
      %v2405 = vld [vmem:[%s1 + $0x8] sm:$0xff]
      %v2406 = vld [vmem:[%s1 + $0x10] sm:$0xff]
      %v2407 = vld [vmem:[%s1 + $0x18] sm:$0xff]
      %v2408 = vld [vmem:[%s1 + $0x20] sm:$0xff]
      %v2409 = vld [vmem:[%s1 + $0x28] sm:$0xff]
      %v2410 = vld [vmem:[%s1 + $0x30] sm:$0xff]
      %v2411 = vld [vmem:[%s1 + $0x38] sm:$0xff]
      %v2412 = vld [vmem:[%s1 + $0x40] sm:$0xff]
      %v2413 = vld [vmem:[%s1 + $0x48] sm:$0xff]
      %v2414 = vld [vmem:[%s1 + $0x50] sm:$0xff]
      %v2415 = vld [vmem:[%s1 + $0x58] sm:$0xff]
      %v2416 = vld [vmem:[%s1 + $0x60] sm:$0xff]
      %v2417 = vld [vmem:[%s1 + $0x68] sm:$0xff]
      %v2418 = vld [vmem:[%s1 + $0x70] sm:$0xff]
      %v2419 = vld [vmem:[%s1 + $0x78] sm:$0xff]
      %v2420 = vld [vmem:[%s1 + $0x80] sm:$0xff]
      %v2421 = vld [vmem:[%s1 + $0x88] sm:$0xff]
      %v2422 = vld [vmem:[%s1 + $0x90] sm:$0xff]
      %v2423 = vld [vmem:[%s1 + $0x98] sm:$0xff]
      %v2424 = vld [vmem:[%s1 + $0xa0] sm:$0xff]
      %v2425 = vld [vmem:[%s1 + $0xa8] sm:$0xff]
      %v2426 = vld [vmem:[%s1 + $0xb0] sm:$0xff]
      %v2427 = vld [vmem:[%s1 + $0xb8] sm:$0xff]
      %v2428 = vld [vmem:[%s1 + $0xc0] sm:$0xff]
      %v2429 = vld [vmem:[%s1 + $0xc8] sm:$0xff]
      %v2430 = vld [vmem:[%s1 + $0xd0] sm:$0xff]
      %v2431 = vld [vmem:[%s1 + $0xd8] sm:$0xff]
      %v2432 = vld [vmem:[%s1 + $0xe0] sm:$0xff]
      %v2433 = vld [vmem:[%s1 + $0xe8] sm:$0xff]
      %v2434 = vld [vmem:[%s1 + $0xf0] sm:$0xff]
      %v2435 = vld [vmem:[%s1 + $0xf8] sm:$0xff]
      %v2436 = vld [vmem:[%s1 + $0x100] sm:$0xff]
      %v2437 = vld [vmem:[%s1 + $0x108] sm:$0xff]
      %v2438 = vld [vmem:[%s1 + $0x110] sm:$0xff]
      %v2439 = vld [vmem:[%s1 + $0x118] sm:$0xff]
      %v2440 = vld [vmem:[%s1 + $0x120] sm:$0xff]
      %v2441 = vld [vmem:[%s1 + $0x128] sm:$0xff]
      %v2442 = vld [vmem:[%s1 + $0x130] sm:$0xff]
      %v2443 = vld [vmem:[%s1 + $0x138] sm:$0xff]
      %v2444 = vld [vmem:[%s1 + $0x140] sm:$0xff]
      %v2445 = vld [vmem:[%s1 + $0x148] sm:$0xff]
      %v2446 = vld [vmem:[%s1 + $0x150] sm:$0xff]
      %v2447 = vld [vmem:[%s1 + $0x158] sm:$0xff]
      %v2448 = vld [vmem:[%s1 + $0x160] sm:$0xff]
      %v2449 = vld [vmem:[%s1 + $0x168] sm:$0xff]
      %v2450 = vld [vmem:[%s1 + $0x170] sm:$0xff]
      %v2451 = vld [vmem:[%s1 + $0x178] sm:$0xff]
      %v2452 = vld [vmem:[%s1 + $0x180] sm:$0xff]
      %v2453 = vld [vmem:[%s1 + $0x188] sm:$0xff]
      %v2454 = vld [vmem:[%s1 + $0x190] sm:$0xff]
      %v2455 = vld [vmem:[%s1 + $0x198] sm:$0xff]
      %v2456 = vld [vmem:[%s1 + $0x1a0] sm:$0xff]
      %v2457 = vld [vmem:[%s1 + $0x1a8] sm:$0xff]
      %v2458 = vld [vmem:[%s1 + $0x1b0] sm:$0xff]
      %v2459 = vld [vmem:[%s1 + $0x1b8] sm:$0xff]
      %v2460 = vld [vmem:[%s1 + $0x1c0] sm:$0xff]
      %v2461 = vld [vmem:[%s1 + $0x1c8] sm:$0xff]
      %v2462 = vld [vmem:[%s1 + $0x1d0] sm:$0xff]
      %v2463 = vld [vmem:[%s1 + $0x1d8] sm:$0xff]
      %v2464 = vld [vmem:[%s1 + $0x1e0] sm:$0xff]
      %v2465 = vld [vmem:[%s1 + $0x1e8] sm:$0xff]
      %v2466 = vld [vmem:[%s1 + $0x1f0] sm:$0xff]
      %v2467 = vld [vmem:[%s1 + $0x1f8] sm:$0xff]
      %2468 = vmatprep.subr.mxu0 %v2405
      %2469 = vmatpush1.msra.mxu0 %v2404
      %2470 = vmatprep.subr.mxu0 %v2409
      %2471 = vmatpush1.msra.mxu0 %v2408
      %2472 = vmatprep.subr.mxu0 %v2413
      %2473 = vmatpush1.msra.mxu0 %v2412
      %2474 = vmatprep.subr.mxu0 %v2417
      %2475 = vmatpush1.msra.mxu0 %v2416
      %2476 = vmatprep.subr.mxu0 %v2421
      %2477 = vmatpush1.msra.mxu0 %v2420
      %2478 = vmatprep.subr.mxu0 %v2425
      %2479 = vmatpush1.msra.mxu0 %v2424
      %2480 = vmatprep.subr.mxu0 %v2429
      %2481 = vmatpush1.msra.mxu0 %v2428
      %2482 = vmatprep.subr.mxu0 %v2433
      %2483 = vmatpush1.msra.mxu0 %v2432
      %2484 = vmatprep.subr.mxu0 %v2437
      %2485 = vmatpush1.msra.mxu0 %v2436
      %2486 = vmatprep.subr.mxu0 %v2441
      %2487 = vmatpush1.msra.mxu0 %v2440
      %2488 = vmatprep.subr.mxu0 %v2445
      %2489 = vmatpush1.msra.mxu0 %v2444
      %2490 = vmatprep.subr.mxu0 %v2449
      %2491 = vmatpush1.msra.mxu0 %v2448
      %2492 = vmatprep.subr.mxu0 %v2453
      %2493 = vmatpush1.msra.mxu0 %v2452
      %2494 = vmatprep.subr.mxu0 %v2457
      %2495 = vmatpush1.msra.mxu0 %v2456
      %2496 = vmatprep.subr.mxu0 %v2461
      %2497 = vmatpush1.msra.mxu0 %v2460
      %2498 = vmatprep.subr.mxu0 %v2465
      %2499 = vmatpush1.msra.mxu0 %v2464
      %2500 = vmatprep.subr.mxu0 0.0
      %2501 = vmatpush1.msra.mxu0 0.0
      %2502 = vmatprep.subr.mxu0 0.0
      %2503 = vmatpush1.msra.mxu0 0.0
      %2504 = vmatprep.subr.mxu0 0.0
      %2505 = vmatpush1.msra.mxu0 0.0
      %2506 = vmatprep.subr.mxu0 0.0
      %2507 = vmatpush1.msra.mxu0 0.0
      %2508 = vmatprep.subr.mxu0 0.0
      %2509 = vmatpush1.msra.mxu0 0.0
      %2510 = vmatprep.subr.mxu0 0.0
      %2511 = vmatpush1.msra.mxu0 0.0
      %2512 = vmatprep.subr.mxu0 0.0
      %2513 = vmatpush1.msra.mxu0 0.0
      %2514 = vmatprep.subr.mxu0 0.0
      %2515 = vmatpush1.msra.mxu0 0.0
      %2516 = vmatprep.subr.mxu0 0.0
      %2517 = vmatpush1.msra.mxu0 0.0
      %2518 = vmatprep.subr.mxu0 0.0
      %2519 = vmatpush1.msra.mxu0 0.0
      %2520 = vmatprep.subr.mxu0 0.0
      %2521 = vmatpush1.msra.mxu0 0.0
      %2522 = vmatprep.subr.mxu0 0.0
      %2523 = vmatpush1.msra.mxu0 0.0
      %2524 = vmatprep.subr.mxu0 0.0
      %2525 = vmatpush1.msra.mxu0 0.0
      %2526 = vmatprep.subr.mxu0 0.0
      %2527 = vmatpush1.msra.mxu0 0.0
      %2528 = vmatprep.subr.mxu0 0.0
      %2529 = vmatpush1.msra.mxu0 0.0
      %2530 = vmatprep.subr.mxu0 0.0
      %2531 = vmatpush1.msra.mxu0 0.0
      %2532 = vmatprep.mubr.f32.mxu0 0.0
      %2533 = vmatmul.mubr.f32.gmra.mrb[0].mxu0 %v1934
      %v2534 = vpop.f32.mrb[0].mxu0
      %v2535 = vadd.f32 0.0, %v2534
      %v2536 = vpop.f32.mrb[0].mxu0
      %v2537 = vadd.f32 0.0, %v2536
      %2538 = vdwg.mxu0
      %2539 = vmatprep.subr.mxu0 %v2407
      %2540 = vmatpush1.msra.mxu0 %v2406
      %2541 = vmatprep.subr.mxu0 %v2411
      %2542 = vmatpush1.msra.mxu0 %v2410
      %2543 = vmatprep.subr.mxu0 %v2415
      %2544 = vmatpush1.msra.mxu0 %v2414
      %2545 = vmatprep.subr.mxu0 %v2419
      %2546 = vmatpush1.msra.mxu0 %v2418
      %2547 = vmatprep.subr.mxu0 %v2423
      %2548 = vmatpush1.msra.mxu0 %v2422
      %2549 = vmatprep.subr.mxu0 %v2427
      %2550 = vmatpush1.msra.mxu0 %v2426
      %2551 = vmatprep.subr.mxu0 %v2431
      %2552 = vmatpush1.msra.mxu0 %v2430
      %2553 = vmatprep.subr.mxu0 %v2435
      %2554 = vmatpush1.msra.mxu0 %v2434
      %2555 = vmatprep.subr.mxu0 %v2439
      %2556 = vmatpush1.msra.mxu0 %v2438
      %2557 = vmatprep.subr.mxu0 %v2443
      %2558 = vmatpush1.msra.mxu0 %v2442
      %2559 = vmatprep.subr.mxu0 %v2447
      %2560 = vmatpush1.msra.mxu0 %v2446
      %2561 = vmatprep.subr.mxu0 %v2451
      %2562 = vmatpush1.msra.mxu0 %v2450
      %2563 = vmatprep.subr.mxu0 %v2455
      %2564 = vmatpush1.msra.mxu0 %v2454
      %2565 = vmatprep.subr.mxu0 %v2459
      %2566 = vmatpush1.msra.mxu0 %v2458
      %2567 = vmatprep.subr.mxu0 %v2463
      %2568 = vmatpush1.msra.mxu0 %v2462
      %2569 = vmatprep.subr.mxu0 %v2467
      %2570 = vmatpush1.msra.mxu0 %v2466
      %2571 = vmatprep.subr.mxu0 0.0
      %2572 = vmatpush1.msra.mxu0 0.0
      %2573 = vmatprep.subr.mxu0 0.0
      %2574 = vmatpush1.msra.mxu0 0.0
      %2575 = vmatprep.subr.mxu0 0.0
      %2576 = vmatpush1.msra.mxu0 0.0
      %2577 = vmatprep.subr.mxu0 0.0
      %2578 = vmatpush1.msra.mxu0 0.0
      %2579 = vmatprep.subr.mxu0 0.0
      %2580 = vmatpush1.msra.mxu0 0.0
      %2581 = vmatprep.subr.mxu0 0.0
      %2582 = vmatpush1.msra.mxu0 0.0
      %2583 = vmatprep.subr.mxu0 0.0
      %2584 = vmatpush1.msra.mxu0 0.0
      %2585 = vmatprep.subr.mxu0 0.0
      %2586 = vmatpush1.msra.mxu0 0.0
      %2587 = vmatprep.subr.mxu0 0.0
      %2588 = vmatpush1.msra.mxu0 0.0
      %2589 = vmatprep.subr.mxu0 0.0
      %2590 = vmatpush1.msra.mxu0 0.0
      %2591 = vmatprep.subr.mxu0 0.0
      %2592 = vmatpush1.msra.mxu0 0.0
      %2593 = vmatprep.subr.mxu0 0.0
      %2594 = vmatpush1.msra.mxu0 0.0
      %2595 = vmatprep.subr.mxu0 0.0
      %2596 = vmatpush1.msra.mxu0 0.0
      %2597 = vmatprep.subr.mxu0 0.0
      %2598 = vmatpush1.msra.mxu0 0.0
      %2599 = vmatprep.subr.mxu0 0.0
      %2600 = vmatpush1.msra.mxu0 0.0
      %2601 = vmatprep.subr.mxu0 0.0
      %2602 = vmatpush1.msra.mxu0 0.0
      %2603 = vmatprep.mubr.f32.mxu0 0.0
      %2604 = vmatmul.mubr.f32.gmra.mrb[0].mxu0 %v1934
      %v2605 = vpop.f32.mrb[0].mxu0
      %v2606 = vadd.f32 0.0, %v2605
      %v2607 = vpop.f32.mrb[0].mxu0
      %v2608 = vadd.f32 0.0, %v2607
      %2609 = vdwg.mxu0
      %v2610 = vadd.f32 %v2400, %v2535
      %v2611 = vadd.f32 %v2401, %v2537
      %v2612 = vadd.f32 %v2402, %v2606
      %v2613 = vadd.f32 %v2403, %v2608
      %v2614 = vxor.u32 %v2610, 2147483648
      %v2615 = vmul.f32 %v2614, 1.442695
      %v2616 = vpow.pop %v2615
      %v2617 = vadd.f32 %v2616, 1.0
      %v2618 = vrcp.pop %v2617
      %v2619 = vmul.f32 1.0, %v2618
      %v2620 = vxor.u32 %v2611, 2147483648
      %v2621 = vmul.f32 %v2620, 1.442695
      %v2622 = vpow.pop %v2621
      %v2623 = vadd.f32 %v2622, 1.0
      %v2624 = vrcp.pop %v2623
      %v2625 = vmul.f32 1.0, %v2624
      %v2626 = vtanh.pop %v2612
      %v2627 = vxor.u32 %v2613, 2147483648
      %v2628 = vmul.f32 %v2627, 1.442695
      %v2629 = vpow.pop %v2628
      %v2630 = vadd.f32 %v2629, 1.0
      %v2631 = vrcp.pop %v2630
      %v2632 = vmul.f32 1.0, %v2631
      %v2633 = vmul.f32 %v2625, %v1932
      %v2634 = vmul.f32 %v2619, %v2626
      %v2635 = vadd.f32 %v2633, %v2634
      %v2636 = vtanh.pop %v2635
      %v2637 = vmul.f32 %v2632, %v2636
      %v2638 = vld [vmem:[%s2] sm:$0xff]
      %v2639 = vld [vmem:[%s2 + $0x8] sm:$0xff]
      %v2640 = vld [vmem:[%s2 + $0x10] sm:$0xff]
      %v2641 = vld [vmem:[%s2 + $0x18] sm:$0xff]
      %v2642 = vld [vmem:[%s2 + $0x20] sm:$0xff]
      %v2643 = vld [vmem:[%s2 + $0x28] sm:$0xff]
      %v2644 = vld [vmem:[%s2 + $0x30] sm:$0xff]
      %v2645 = vld [vmem:[%s2 + $0x38] sm:$0xff]
      %v2646 = vld [vmem:[%s2 + $0x40] sm:$0xff]
      %v2647 = vld [vmem:[%s2 + $0x48] sm:$0xff]
      %v2648 = vld [vmem:[%s2 + $0x50] sm:$0xff]
      %v2649 = vld [vmem:[%s2 + $0x58] sm:$0xff]
      %v2650 = vld [vmem:[%s2 + $0x60] sm:$0xff]
      %v2651 = vld [vmem:[%s2 + $0x68] sm:$0xff]
      %v2652 = vld [vmem:[%s2 + $0x70] sm:$0xff]
      %v2653 = vld [vmem:[%s2 + $0x78] sm:$0xff]
      %v2654 = vld [vmem:[%s2 + $0x80] sm:$0xff]
      %v2655 = vld [vmem:[%s2 + $0x88] sm:$0xff]
      %v2656 = vld [vmem:[%s2 + $0x90] sm:$0xff]
      %v2657 = vld [vmem:[%s2 + $0x98] sm:$0xff]
      %v2658 = vld [vmem:[%s2 + $0xa0] sm:$0xff]
      %v2659 = vld [vmem:[%s2 + $0xa8] sm:$0xff]
      %v2660 = vld [vmem:[%s2 + $0xb0] sm:$0xff]
      %v2661 = vld [vmem:[%s2 + $0xb8] sm:$0xff]
      %v2662 = vld [vmem:[%s2 + $0xc0] sm:$0xff]
      %v2663 = vld [vmem:[%s2 + $0xc8] sm:$0xff]
      %v2664 = vld [vmem:[%s2 + $0xd0] sm:$0xff]
      %v2665 = vld [vmem:[%s2 + $0xd8] sm:$0xff]
      %v2666 = vld [vmem:[%s2 + $0xe0] sm:$0xff]
      %v2667 = vld [vmem:[%s2 + $0xe8] sm:$0xff]
      %v2668 = vld [vmem:[%s2 + $0xf0] sm:$0xff]
      %v2669 = vld [vmem:[%s2 + $0xf8] sm:$0xff]
      %v2670 = vld [vmem:[%s2 + $0x100] sm:$0xff]
      %v2671 = vld [vmem:[%s2 + $0x108] sm:$0xff]
      %v2672 = vld [vmem:[%s2 + $0x110] sm:$0xff]
      %v2673 = vld [vmem:[%s2 + $0x118] sm:$0xff]
      %v2674 = vld [vmem:[%s2 + $0x120] sm:$0xff]
      %v2675 = vld [vmem:[%s2 + $0x128] sm:$0xff]
      %v2676 = vld [vmem:[%s2 + $0x130] sm:$0xff]
      %v2677 = vld [vmem:[%s2 + $0x138] sm:$0xff]
      %v2678 = vld [vmem:[%s2 + $0x140] sm:$0xff]
      %v2679 = vld [vmem:[%s2 + $0x148] sm:$0xff]
      %v2680 = vld [vmem:[%s2 + $0x150] sm:$0xff]
      %v2681 = vld [vmem:[%s2 + $0x158] sm:$0xff]
      %v2682 = vld [vmem:[%s2 + $0x160] sm:$0xff]
      %v2683 = vld [vmem:[%s2 + $0x168] sm:$0xff]
      %v2684 = vld [vmem:[%s2 + $0x170] sm:$0xff]
      %v2685 = vld [vmem:[%s2 + $0x178] sm:$0xff]
      %v2686 = vld [vmem:[%s2 + $0x180] sm:$0xff]
      %v2687 = vld [vmem:[%s2 + $0x188] sm:$0xff]
      %v2688 = vld [vmem:[%s2 + $0x190] sm:$0xff]
      %v2689 = vld [vmem:[%s2 + $0x198] sm:$0xff]
      %v2690 = vld [vmem:[%s2 + $0x1a0] sm:$0xff]
      %v2691 = vld [vmem:[%s2 + $0x1a8] sm:$0xff]
      %v2692 = vld [vmem:[%s2 + $0x1b0] sm:$0xff]
      %v2693 = vld [vmem:[%s2 + $0x1b8] sm:$0xff]
      %v2694 = vld [vmem:[%s2 + $0x1c0] sm:$0xff]
      %v2695 = vld [vmem:[%s2 + $0x1c8] sm:$0xff]
      %v2696 = vld [vmem:[%s2 + $0x1d0] sm:$0xff]
      %v2697 = vld [vmem:[%s2 + $0x1d8] sm:$0xff]
      %v2698 = vld [vmem:[%s2 + $0x1e0] sm:$0xff]
      %v2699 = vld [vmem:[%s2 + $0x1e8] sm:$0xff]
      %v2700 = vld [vmem:[%s2 + $0x1f0] sm:$0xff]
      %v2701 = vld [vmem:[%s2 + $0x1f8] sm:$0xff]
      %v2702 = vld [vmem:[%s3] sm:$0xff]
      %v2703 = vld [vmem:[%s3 + $0x8] sm:$0xff]
      %v2704 = vld [vmem:[%s3 + $0x10] sm:$0xff]
      %v2705 = vld [vmem:[%s3 + $0x18] sm:$0xff]
      %v2706 = vld [vmem:[%s3 + $0x20] sm:$0xff]
      %v2707 = vld [vmem:[%s3 + $0x28] sm:$0xff]
      %v2708 = vld [vmem:[%s3 + $0x30] sm:$0xff]
      %v2709 = vld [vmem:[%s3 + $0x38] sm:$0xff]
      %v2710 = vld [vmem:[%s3 + $0x40] sm:$0xff]
      %v2711 = vld [vmem:[%s3 + $0x48] sm:$0xff]
      %v2712 = vld [vmem:[%s3 + $0x50] sm:$0xff]
      %v2713 = vld [vmem:[%s3 + $0x58] sm:$0xff]
      %v2714 = vld [vmem:[%s3 + $0x60] sm:$0xff]
      %v2715 = vld [vmem:[%s3 + $0x68] sm:$0xff]
      %v2716 = vld [vmem:[%s3 + $0x70] sm:$0xff]
      %v2717 = vld [vmem:[%s3 + $0x78] sm:$0xff]
      %v2718 = vld [vmem:[%s3 + $0x80] sm:$0xff]
      %v2719 = vld [vmem:[%s3 + $0x88] sm:$0xff]
      %v2720 = vld [vmem:[%s3 + $0x90] sm:$0xff]
      %v2721 = vld [vmem:[%s3 + $0x98] sm:$0xff]
      %v2722 = vld [vmem:[%s3 + $0xa0] sm:$0xff]
      %v2723 = vld [vmem:[%s3 + $0xa8] sm:$0xff]
      %v2724 = vld [vmem:[%s3 + $0xb0] sm:$0xff]
      %v2725 = vld [vmem:[%s3 + $0xb8] sm:$0xff]
      %v2726 = vld [vmem:[%s3 + $0xc0] sm:$0xff]
      %v2727 = vld [vmem:[%s3 + $0xc8] sm:$0xff]
      %v2728 = vld [vmem:[%s3 + $0xd0] sm:$0xff]
      %v2729 = vld [vmem:[%s3 + $0xd8] sm:$0xff]
      %v2730 = vld [vmem:[%s3 + $0xe0] sm:$0xff]
      %v2731 = vld [vmem:[%s3 + $0xe8] sm:$0xff]
      %v2732 = vld [vmem:[%s3 + $0xf0] sm:$0xff]
      %v2733 = vld [vmem:[%s3 + $0xf8] sm:$0xff]
      %v2734 = vld [vmem:[%s3 + $0x100] sm:$0xff]
      %v2735 = vld [vmem:[%s3 + $0x108] sm:$0xff]
      %v2736 = vld [vmem:[%s3 + $0x110] sm:$0xff]
      %v2737 = vld [vmem:[%s3 + $0x118] sm:$0xff]
      %v2738 = vld [vmem:[%s3 + $0x120] sm:$0xff]
      %v2739 = vld [vmem:[%s3 + $0x128] sm:$0xff]
      %v2740 = vld [vmem:[%s3 + $0x130] sm:$0xff]
      %v2741 = vld [vmem:[%s3 + $0x138] sm:$0xff]
      %v2742 = vld [vmem:[%s3 + $0x140] sm:$0xff]
      %v2743 = vld [vmem:[%s3 + $0x148] sm:$0xff]
      %v2744 = vld [vmem:[%s3 + $0x150] sm:$0xff]
      %v2745 = vld [vmem:[%s3 + $0x158] sm:$0xff]
      %v2746 = vld [vmem:[%s3 + $0x160] sm:$0xff]
      %v2747 = vld [vmem:[%s3 + $0x168] sm:$0xff]
      %v2748 = vld [vmem:[%s3 + $0x170] sm:$0xff]
      %v2749 = vld [vmem:[%s3 + $0x178] sm:$0xff]
      %v2750 = vld [vmem:[%s3 + $0x180] sm:$0xff]
      %v2751 = vld [vmem:[%s3 + $0x188] sm:$0xff]
      %v2752 = vld [vmem:[%s3 + $0x190] sm:$0xff]
      %v2753 = vld [vmem:[%s3 + $0x198] sm:$0xff]
      %v2754 = vld [vmem:[%s3 + $0x1a0] sm:$0xff]
      %v2755 = vld [vmem:[%s3 + $0x1a8] sm:$0xff]
      %v2756 = vld [vmem:[%s3 + $0x1b0] sm:$0xff]
      %v2757 = vld [vmem:[%s3 + $0x1b8] sm:$0xff]
      %v2758 = vld [vmem:[%s3 + $0x1c0] sm:$0xff]
      %v2759 = vld [vmem:[%s3 + $0x1c8] sm:$0xff]
      %v2760 = vld [vmem:[%s3 + $0x1d0] sm:$0xff]
      %v2761 = vld [vmem:[%s3 + $0x1d8] sm:$0xff]
      %v2762 = vld [vmem:[%s3 + $0x1e0] sm:$0xff]
      %v2763 = vld [vmem:[%s3 + $0x1e8] sm:$0xff]
      %v2764 = vld [vmem:[%s3 + $0x1f0] sm:$0xff]
      %v2765 = vld [vmem:[%s3 + $0x1f8] sm:$0xff]
      %2766 = vmatprep.subr.mxu0 %v2703
      %2767 = vmatpush1.msra.mxu0 %v2702
      %2768 = vmatprep.subr.mxu0 %v2707
      %2769 = vmatpush1.msra.mxu0 %v2706
      %2770 = vmatprep.subr.mxu0 %v2711
      %2771 = vmatpush1.msra.mxu0 %v2710
      %2772 = vmatprep.subr.mxu0 %v2715
      %2773 = vmatpush1.msra.mxu0 %v2714
      %2774 = vmatprep.subr.mxu0 %v2719
      %2775 = vmatpush1.msra.mxu0 %v2718
      %2776 = vmatprep.subr.mxu0 %v2723
      %2777 = vmatpush1.msra.mxu0 %v2722
      %2778 = vmatprep.subr.mxu0 %v2727
      %2779 = vmatpush1.msra.mxu0 %v2726
      %2780 = vmatprep.subr.mxu0 %v2731
      %2781 = vmatpush1.msra.mxu0 %v2730
      %2782 = vmatprep.subr.mxu0 %v2735
      %2783 = vmatpush1.msra.mxu0 %v2734
      %2784 = vmatprep.subr.mxu0 %v2739
      %2785 = vmatpush1.msra.mxu0 %v2738
      %2786 = vmatprep.subr.mxu0 %v2743
      %2787 = vmatpush1.msra.mxu0 %v2742
      %2788 = vmatprep.subr.mxu0 %v2747
      %2789 = vmatpush1.msra.mxu0 %v2746
      %2790 = vmatprep.subr.mxu0 %v2751
      %2791 = vmatpush1.msra.mxu0 %v2750
      %2792 = vmatprep.subr.mxu0 %v2755
      %2793 = vmatpush1.msra.mxu0 %v2754
      %2794 = vmatprep.subr.mxu0 %v2759
      %2795 = vmatpush1.msra.mxu0 %v2758
      %2796 = vmatprep.subr.mxu0 %v2763
      %2797 = vmatpush1.msra.mxu0 %v2762
      %2798 = vmatprep.subr.mxu0 0.0
      %2799 = vmatpush1.msra.mxu0 0.0
      %2800 = vmatprep.subr.mxu0 0.0
      %2801 = vmatpush1.msra.mxu0 0.0
      %2802 = vmatprep.subr.mxu0 0.0
      %2803 = vmatpush1.msra.mxu0 0.0
      %2804 = vmatprep.subr.mxu0 0.0
      %2805 = vmatpush1.msra.mxu0 0.0
      %2806 = vmatprep.subr.mxu0 0.0
      %2807 = vmatpush1.msra.mxu0 0.0
      %2808 = vmatprep.subr.mxu0 0.0
      %2809 = vmatpush1.msra.mxu0 0.0
      %2810 = vmatprep.subr.mxu0 0.0
      %2811 = vmatpush1.msra.mxu0 0.0
      %2812 = vmatprep.subr.mxu0 0.0
      %2813 = vmatpush1.msra.mxu0 0.0
      %2814 = vmatprep.subr.mxu0 0.0
      %2815 = vmatpush1.msra.mxu0 0.0
      %2816 = vmatprep.subr.mxu0 0.0
      %2817 = vmatpush1.msra.mxu0 0.0
      %2818 = vmatprep.subr.mxu0 0.0
      %2819 = vmatpush1.msra.mxu0 0.0
      %2820 = vmatprep.subr.mxu0 0.0
      %2821 = vmatpush1.msra.mxu0 0.0
      %2822 = vmatprep.subr.mxu0 0.0
      %2823 = vmatpush1.msra.mxu0 0.0
      %2824 = vmatprep.subr.mxu0 0.0
      %2825 = vmatpush1.msra.mxu0 0.0
      %2826 = vmatprep.subr.mxu0 0.0
      %2827 = vmatpush1.msra.mxu0 0.0
      %2828 = vmatprep.subr.mxu0 0.0
      %2829 = vmatpush1.msra.mxu0 0.0
      %2830 = vmatprep.mubr.f32.mxu0 0.0
      %2831 = vmatmul.mubr.f32.gmra.mrb[0].mxu0 %v2396
      %v2832 = vpop.f32.mrb[0].mxu0
      %v2833 = vadd.f32 0.0, %v2832
      %v2834 = vpop.f32.mrb[0].mxu0
      %v2835 = vadd.f32 0.0, %v2834
      %2836 = vdwg.mxu0
      %2837 = vmatprep.subr.mxu0 %v2705
      %2838 = vmatpush1.msra.mxu0 %v2704
      %2839 = vmatprep.subr.mxu0 %v2709
      %2840 = vmatpush1.msra.mxu0 %v2708
      %2841 = vmatprep.subr.mxu0 %v2713
      %2842 = vmatpush1.msra.mxu0 %v2712
      %2843 = vmatprep.subr.mxu0 %v2717
      %2844 = vmatpush1.msra.mxu0 %v2716
      %2845 = vmatprep.subr.mxu0 %v2721
      %2846 = vmatpush1.msra.mxu0 %v2720
      %2847 = vmatprep.subr.mxu0 %v2725
      %2848 = vmatpush1.msra.mxu0 %v2724
      %2849 = vmatprep.subr.mxu0 %v2729
      %2850 = vmatpush1.msra.mxu0 %v2728
      %2851 = vmatprep.subr.mxu0 %v2733
      %2852 = vmatpush1.msra.mxu0 %v2732
      %2853 = vmatprep.subr.mxu0 %v2737
      %2854 = vmatpush1.msra.mxu0 %v2736
      %2855 = vmatprep.subr.mxu0 %v2741
      %2856 = vmatpush1.msra.mxu0 %v2740
      %2857 = vmatprep.subr.mxu0 %v2745
      %2858 = vmatpush1.msra.mxu0 %v2744
      %2859 = vmatprep.subr.mxu0 %v2749
      %2860 = vmatpush1.msra.mxu0 %v2748
      %2861 = vmatprep.subr.mxu0 %v2753
      %2862 = vmatpush1.msra.mxu0 %v2752
      %2863 = vmatprep.subr.mxu0 %v2757
      %2864 = vmatpush1.msra.mxu0 %v2756
      %2865 = vmatprep.subr.mxu0 %v2761
      %2866 = vmatpush1.msra.mxu0 %v2760
      %2867 = vmatprep.subr.mxu0 %v2765
      %2868 = vmatpush1.msra.mxu0 %v2764
      %2869 = vmatprep.subr.mxu0 0.0
      %2870 = vmatpush1.msra.mxu0 0.0
      %2871 = vmatprep.subr.mxu0 0.0
      %2872 = vmatpush1.msra.mxu0 0.0
      %2873 = vmatprep.subr.mxu0 0.0
      %2874 = vmatpush1.msra.mxu0 0.0
      %2875 = vmatprep.subr.mxu0 0.0
      %2876 = vmatpush1.msra.mxu0 0.0
      %2877 = vmatprep.subr.mxu0 0.0
      %2878 = vmatpush1.msra.mxu0 0.0
      %2879 = vmatprep.subr.mxu0 0.0
      %2880 = vmatpush1.msra.mxu0 0.0
      %2881 = vmatprep.subr.mxu0 0.0
      %2882 = vmatpush1.msra.mxu0 0.0
      %2883 = vmatprep.subr.mxu0 0.0
      %2884 = vmatpush1.msra.mxu0 0.0
      %2885 = vmatprep.subr.mxu0 0.0
      %2886 = vmatpush1.msra.mxu0 0.0
      %2887 = vmatprep.subr.mxu0 0.0
      %2888 = vmatpush1.msra.mxu0 0.0
      %2889 = vmatprep.subr.mxu0 0.0
      %2890 = vmatpush1.msra.mxu0 0.0
      %2891 = vmatprep.subr.mxu0 0.0
      %2892 = vmatpush1.msra.mxu0 0.0
      %2893 = vmatprep.subr.mxu0 0.0
      %2894 = vmatpush1.msra.mxu0 0.0
      %2895 = vmatprep.subr.mxu0 0.0
      %2896 = vmatpush1.msra.mxu0 0.0
      %2897 = vmatprep.subr.mxu0 0.0
      %2898 = vmatpush1.msra.mxu0 0.0
      %2899 = vmatprep.subr.mxu0 0.0
      %2900 = vmatpush1.msra.mxu0 0.0
      %2901 = vmatprep.mubr.f32.mxu0 0.0
      %2902 = vmatmul.mubr.f32.gmra.mrb[0].mxu0 %v2396
      %v2903 = vpop.f32.mrb[0].mxu0
      %v2904 = vadd.f32 0.0, %v2903
      %v2905 = vpop.f32.mrb[0].mxu0
      %v2906 = vadd.f32 0.0, %v2905
      %2907 = vdwg.mxu0
      %2908 = vmatprep.subr.mxu0 %v2639
      %2909 = vmatpush1.msra.mxu0 %v2638
      %2910 = vmatprep.subr.mxu0 %v2643
      %2911 = vmatpush1.msra.mxu0 %v2642
      %2912 = vmatprep.subr.mxu0 %v2647
      %2913 = vmatpush1.msra.mxu0 %v2646
      %2914 = vmatprep.subr.mxu0 %v2651
      %2915 = vmatpush1.msra.mxu0 %v2650
      %2916 = vmatprep.subr.mxu0 %v2655
      %2917 = vmatpush1.msra.mxu0 %v2654
      %2918 = vmatprep.subr.mxu0 %v2659
      %2919 = vmatpush1.msra.mxu0 %v2658
      %2920 = vmatprep.subr.mxu0 %v2663
      %2921 = vmatpush1.msra.mxu0 %v2662
      %2922 = vmatprep.subr.mxu0 %v2667
      %2923 = vmatpush1.msra.mxu0 %v2666
      %2924 = vmatprep.subr.mxu0 %v2671
      %2925 = vmatpush1.msra.mxu0 %v2670
      %2926 = vmatprep.subr.mxu0 %v2675
      %2927 = vmatpush1.msra.mxu0 %v2674
      %2928 = vmatprep.subr.mxu0 %v2679
      %2929 = vmatpush1.msra.mxu0 %v2678
      %2930 = vmatprep.subr.mxu0 %v2683
      %2931 = vmatpush1.msra.mxu0 %v2682
      %2932 = vmatprep.subr.mxu0 %v2687
      %2933 = vmatpush1.msra.mxu0 %v2686
      %2934 = vmatprep.subr.mxu0 %v2691
      %2935 = vmatpush1.msra.mxu0 %v2690
      %2936 = vmatprep.subr.mxu0 %v2695
      %2937 = vmatpush1.msra.mxu0 %v2694
      %2938 = vmatprep.subr.mxu0 %v2699
      %2939 = vmatpush1.msra.mxu0 %v2698
      %2940 = vmatprep.subr.mxu0 0.0
      %2941 = vmatpush1.msra.mxu0 0.0
      %2942 = vmatprep.subr.mxu0 0.0
      %2943 = vmatpush1.msra.mxu0 0.0
      %2944 = vmatprep.subr.mxu0 0.0
      %2945 = vmatpush1.msra.mxu0 0.0
      %2946 = vmatprep.subr.mxu0 0.0
      %2947 = vmatpush1.msra.mxu0 0.0
      %2948 = vmatprep.subr.mxu0 0.0
      %2949 = vmatpush1.msra.mxu0 0.0
      %2950 = vmatprep.subr.mxu0 0.0
      %2951 = vmatpush1.msra.mxu0 0.0
      %2952 = vmatprep.subr.mxu0 0.0
      %2953 = vmatpush1.msra.mxu0 0.0
      %2954 = vmatprep.subr.mxu0 0.0
      %2955 = vmatpush1.msra.mxu0 0.0
      %2956 = vmatprep.subr.mxu0 0.0
      %2957 = vmatpush1.msra.mxu0 0.0
      %2958 = vmatprep.subr.mxu0 0.0
      %2959 = vmatpush1.msra.mxu0 0.0
      %2960 = vmatprep.subr.mxu0 0.0
      %2961 = vmatpush1.msra.mxu0 0.0
      %2962 = vmatprep.subr.mxu0 0.0
      %2963 = vmatpush1.msra.mxu0 0.0
      %2964 = vmatprep.subr.mxu0 0.0
      %2965 = vmatpush1.msra.mxu0 0.0
      %2966 = vmatprep.subr.mxu0 0.0
      %2967 = vmatpush1.msra.mxu0 0.0
      %2968 = vmatprep.subr.mxu0 0.0
      %2969 = vmatpush1.msra.mxu0 0.0
      %2970 = vmatprep.subr.mxu0 0.0
      %2971 = vmatpush1.msra.mxu0 0.0
      %2972 = vmatprep.mubr.f32.mxu0 0.0
      %2973 = vmatmul.mubr.f32.gmra.mrb[0].mxu0 %v2637
      %v2974 = vpop.f32.mrb[0].mxu0
      %v2975 = vadd.f32 %v2833, %v2974
      %v2976 = vpop.f32.mrb[0].mxu0
      %v2977 = vadd.f32 %v2835, %v2976
      %2978 = vdwg.mxu0
      %2979 = vmatprep.subr.mxu0 %v2641
      %2980 = vmatpush1.msra.mxu0 %v2640
      %2981 = vmatprep.subr.mxu0 %v2645
      %2982 = vmatpush1.msra.mxu0 %v2644
      %2983 = vmatprep.subr.mxu0 %v2649
      %2984 = vmatpush1.msra.mxu0 %v2648
      %2985 = vmatprep.subr.mxu0 %v2653
      %2986 = vmatpush1.msra.mxu0 %v2652
      %2987 = vmatprep.subr.mxu0 %v2657
      %2988 = vmatpush1.msra.mxu0 %v2656
      %2989 = vmatprep.subr.mxu0 %v2661
      %2990 = vmatpush1.msra.mxu0 %v2660
      %2991 = vmatprep.subr.mxu0 %v2665
      %2992 = vmatpush1.msra.mxu0 %v2664
      %2993 = vmatprep.subr.mxu0 %v2669
      %2994 = vmatpush1.msra.mxu0 %v2668
      %2995 = vmatprep.subr.mxu0 %v2673
      %2996 = vmatpush1.msra.mxu0 %v2672
      %2997 = vmatprep.subr.mxu0 %v2677
      %2998 = vmatpush1.msra.mxu0 %v2676
      %2999 = vmatprep.subr.mxu0 %v2681
      %3000 = vmatpush1.msra.mxu0 %v2680
      %3001 = vmatprep.subr.mxu0 %v2685
      %3002 = vmatpush1.msra.mxu0 %v2684
      %3003 = vmatprep.subr.mxu0 %v2689
      %3004 = vmatpush1.msra.mxu0 %v2688
      %3005 = vmatprep.subr.mxu0 %v2693
      %3006 = vmatpush1.msra.mxu0 %v2692
      %3007 = vmatprep.subr.mxu0 %v2697
      %3008 = vmatpush1.msra.mxu0 %v2696
      %3009 = vmatprep.subr.mxu0 %v2701
      %3010 = vmatpush1.msra.mxu0 %v2700
      %3011 = vmatprep.subr.mxu0 0.0
      %3012 = vmatpush1.msra.mxu0 0.0
      %3013 = vmatprep.subr.mxu0 0.0
      %3014 = vmatpush1.msra.mxu0 0.0
      %3015 = vmatprep.subr.mxu0 0.0
      %3016 = vmatpush1.msra.mxu0 0.0
      %3017 = vmatprep.subr.mxu0 0.0
      %3018 = vmatpush1.msra.mxu0 0.0
      %3019 = vmatprep.subr.mxu0 0.0
      %3020 = vmatpush1.msra.mxu0 0.0
      %3021 = vmatprep.subr.mxu0 0.0
      %3022 = vmatpush1.msra.mxu0 0.0
      %3023 = vmatprep.subr.mxu0 0.0
      %3024 = vmatpush1.msra.mxu0 0.0
      %3025 = vmatprep.subr.mxu0 0.0
      %3026 = vmatpush1.msra.mxu0 0.0
      %3027 = vmatprep.subr.mxu0 0.0
      %3028 = vmatpush1.msra.mxu0 0.0
      %3029 = vmatprep.subr.mxu0 0.0
      %3030 = vmatpush1.msra.mxu0 0.0
      %3031 = vmatprep.subr.mxu0 0.0
      %3032 = vmatpush1.msra.mxu0 0.0
      %3033 = vmatprep.subr.mxu0 0.0
      %3034 = vmatpush1.msra.mxu0 0.0
      %3035 = vmatprep.subr.mxu0 0.0
      %3036 = vmatpush1.msra.mxu0 0.0
      %3037 = vmatprep.subr.mxu0 0.0
      %3038 = vmatpush1.msra.mxu0 0.0
      %3039 = vmatprep.subr.mxu0 0.0
      %3040 = vmatpush1.msra.mxu0 0.0
      %3041 = vmatprep.subr.mxu0 0.0
      %3042 = vmatpush1.msra.mxu0 0.0
      %3043 = vmatprep.mubr.f32.mxu0 0.0
      %3044 = vmatmul.mubr.f32.gmra.mrb[0].mxu0 %v2637
      %v3045 = vpop.f32.mrb[0].mxu0
      %v3046 = vadd.f32 %v2904, %v3045
      %v3047 = vpop.f32.mrb[0].mxu0
      %v3048 = vadd.f32 %v2906, %v3047
      %3049 = vdwg.mxu0
      %v3050 = vld [vmem:[%s4] sm:$0xf]
      %v3052 = vlaneseq
      %v3053 = vshrl.u32 %v3052, 7
      %v3054 = vsub.s32 0, %v3053
      %v3055 = vrot.slane %v3050, %v3054
      %v3056 = vlaneseq
      %v3057 = vshrl.u32 %v3056, 7
      %v3058 = vsub.s32 1, %v3057
      %v3059 = vrot.slane %v3050, %v3058
      %v3060 = vlaneseq
      %v3061 = vshrl.u32 %v3060, 7
      %v3062 = vsub.s32 2, %v3061
      %v3063 = vrot.slane %v3050, %v3062
      %v3064 = vlaneseq
      %v3065 = vshrl.u32 %v3064, 7
      %v3066 = vsub.s32 3, %v3065
      %v3067 = vrot.slane %v3050, %v3066
      %v3072 = vadd.f32 %v2975, %v3055
      %v3073 = vadd.f32 %v2977, %v3059
      %v3074 = vadd.f32 %v3046, %v3063
      %v3075 = vadd.f32 %v3048, %v3067
      %v3076 = vxor.u32 %v3072, 2147483648
      %v3077 = vmul.f32 %v3076, 1.442695
      %v3078 = vpow.pop %v3077
      %v3079 = vadd.f32 %v3078, 1.0
      %v3080 = vrcp.pop %v3079
      %v3081 = vmul.f32 1.0, %v3080
      %v3082 = vxor.u32 %v3073, 2147483648
      %v3083 = vmul.f32 %v3082, 1.442695
      %v3084 = vpow.pop %v3083
      %v3085 = vadd.f32 %v3084, 1.0
      %v3086 = vrcp.pop %v3085
      %v3087 = vmul.f32 1.0, %v3086
      %v3088 = vtanh.pop %v3074
      %v3089 = vxor.u32 %v3075, 2147483648
      %v3090 = vmul.f32 %v3089, 1.442695
      %v3091 = vpow.pop %v3090
      %v3092 = vadd.f32 %v3091, 1.0
      %v3093 = vrcp.pop %v3092
      %v3094 = vmul.f32 1.0, %v3093
      %v3095 = vmul.f32 %v3087, %v2394
      %v3096 = vmul.f32 %v3081, %v3088
      %v3097 = vadd.f32 %v3095, %v3096
      %v3098 = vtanh.pop %v3097
      %v3099 = vmul.f32 %v3094, %v3098
      %s3100 = scalar_lea.vmem %s278, 24
      %3101 = vst [vmem:[%s3100] sm:$0xff] %v3099
      %3102 = vst [vmem:[#allocation2] sm:$0xff] %v2637
      %3103 = vst [vmem:[#allocation3] sm:$0xff] %v2635
      %3104 = vst [vmem:[#allocation4] sm:$0xff] %v3099
      %3105 = vst [vmem:[#allocation5] sm:$0xff] %v3097
      %p3106 = scmp.eq.s32.totalorder %s19, 1
      // Predicated region
      $region45: #{encoder_forward.1} parent=39 // pred_check
        %p3107 = pneg %p3106
      $region46: #{encoder_forward.1} parent=39 // pred_check_branch
        %3109 = sbr.rel (%p3107) target = $region48
      $region47: #{encoder_forward.1} parent=39 // pred_region
        %3110 = vst [vmem:[%s6] sm:$0xff] %v2637
        %s3111 = scalar_lea.vmem %s6, 8
        %3112 = vst [vmem:[%s3111] sm:$0xff] %v3099
        %3113 = vst [vmem:[%s7] sm:$0xff] %v2635
        %s3114 = scalar_lea.vmem %s7, 8
        %3115 = vst [vmem:[%s3114] sm:$0xff] %v3097
      $region48: #{encoder_forward.1} parent=39 // pred_fallthru
        _
      %s3116 = smul.u32 4, %s19
      %p3117 = scmp.lt.s32.totalorder %s3116, 7
      %s3118 = scalar_select %p3117, %s3116, 7
      %s3119 = smul.addr %s3118, 8
      %s3120 = scalar_lea.vmem %s5, %s3119
      // Predicated region
      $region49: #{encoder_forward.1} parent=39 // pred_check
        %p3121 = pneg %p147
      $region50: #{encoder_forward.1} parent=39 // pred_check_branch
        %3123 = sbr.rel (%p3121) target = $region52
      $region51: #{encoder_forward.1} parent=39 // pred_region
        %s3124 = smul.u32 4, %s19
      $region52: #{encoder_forward.1} parent=39 // pred_fallthru
        _
      // Predicated region
      $region53: #{encoder_forward.1} parent=39 // pred_check
        %p3125 = pneg %p168
      $region54: #{encoder_forward.1} parent=39 // pred_check_branch
        %3127 = sbr.rel (%p3125) target = $region56
      $region55: #{encoder_forward.1} parent=39 // pred_region
        _
      $region56: #{encoder_forward.1} parent=39 // pred_fallthru
        _
      // Predicated region
      $region57: #{encoder_forward.1} parent=39 // pred_check
        %p3128 = pneg %p189
      $region58: #{encoder_forward.1} parent=39 // pred_check_branch
        %3130 = sbr.rel (%p3128) target = $region60
      $region59: #{encoder_forward.1} parent=39 // pred_region
        _
      $region60: #{encoder_forward.1} parent=39 // pred_fallthru
        _
      // Predicated region
      $region61: #{encoder_forward.1} parent=39 // pred_check
        %p3131 = pneg %p168
      $region62: #{encoder_forward.1} parent=39 // pred_check_branch
        %3133 = sbr.rel (%p3131) target = $region64
      $region63: #{encoder_forward.1} parent=39 // pred_region
        _
      $region64: #{encoder_forward.1} parent=39 // pred_fallthru
        _
      // Predicated region
      $region65: #{encoder_forward.1} parent=39 // pred_check
        %p3134 = pneg %p189
      $region66: #{encoder_forward.1} parent=39 // pred_check_branch
        %3136 = sbr.rel (%p3134) target = $region68
      $region67: #{encoder_forward.1} parent=39 // pred_region
        _
      $region68: #{encoder_forward.1} parent=39 // pred_fallthru
        _
    $region40: #{encoder_forward.1} parent=5 // pred_fallthru
      _
    %p3137 = scmp.le.s32.totalorder 2, %s14
    // Predicated region
    $region69: #{encoder_forward.1} parent=5 // pred_check
      %p3138 = pneg %p3137
    $region70: #{encoder_forward.1} parent=5 // pred_check_branch
      %3140 = sbr.rel (%p3138) target = $region72
    $region71: #{encoder_forward.1} parent=5 // pred_region
      %s3141 = ssub.s32 %s14, 2
      // Predicated region
      $region73: #{encoder_forward.1} parent=71 // pred_check
        %p3142 = pneg %p153
      $region74: #{encoder_forward.1} parent=71 // pred_check_branch
        %3144 = sbr.rel (%p3142) target = $region76
      $region75: #{encoder_forward.1} parent=71 // pred_region
        %s3145 = smul.u32 4, %s20
        %p3146 = scmp.lt.s32.totalorder %s3145, 7
        %s3147 = scalar_select %p3146, %s3145, 7
        %s3148 = smul.addr %s3147, 8
        %s3149 = scalar_lea.vmem %s5, %s3148
      $region76: #{encoder_forward.1} parent=71 // pred_fallthru
        _
    $region72: #{encoder_forward.1} parent=5 // pred_fallthru
      _
  $region6: #{encoder_forward.1} parent=0 // loop_footer
    %s18 = sadd.s32 1, %s14
  $region7: #{encoder_forward.1} parent=0 // loop_footer_branch
    %13 = sbr.rel target = $region3
  $region8: #{encoder_forward.1} parent=0 // loop_exit
    _

</llo_original>
